<compile_context>
chip_gen: v6e
topology: v6e:2x2x1
jax: 0.10.0
libtpu: 0.0.40
codegen_flags: <defaults>
</compile_context>

<pallas_src>
import numpy as np
import jax
import jax.numpy as jnp
from jax import lax
from jax.experimental import pallas as pl
from jax.experimental.pallas import tpu as pltpu


# ----------------------------------------------------------------------------
# Kernel 1: the serial recurrence.  One grid step == one chunk of Tc timesteps.
# ----------------------------------------------------------------------------
def rnnlm_chunk_kernel(x1_ref,                                   # (Tc, B, 4H) f32: E1[x_t], streamed
                       h1_0_ref, c1_0_ref, h2_0_ref, c2_0_ref,   # (B, H) f32 initial state, resident
                       w1h_ref,                                  # (H, 4H) bf16, resident
                       w2_ref, b2_ref,                           # (2H, 4H) bf16 / (1, 4H) f32, resident
                       h2_seq_ref,                               # (Tc, B, H) f32 output, streamed
                       h1_ref, c1_ref, h2_ref, c2_ref):          # (B, H) f32 state carry / final outputs
    H = h1_ref.shape[-1]
    tc = x1_ref.shape[0]
    chunk = pl.program_id(0)

    @pl.when(chunk == 0)
    def _init():
        h1_ref[...] = h1_0_ref[...]
        c1_ref[...] = c1_0_ref[...]
        h2_ref[...] = h2_0_ref[...]
        c2_ref[...] = c2_0_ref[...]

    def gates_to_hc(gates, c_prev):
        # gate layout (permuted at prep time): [i | f | o | g]
        sig = jax.nn.sigmoid(gates[:, :3 * H])     # one contiguous EUP slab
        g_g = jnp.tanh(gates[:, 3 * H:])
        i_g = sig[:, 0 * H:1 * H]
        f_g = sig[:, 1 * H:2 * H]
        o_g = sig[:, 2 * H:3 * H]
        c_new = f_g * c_prev + i_g * g_g
        h_new = o_g * jnp.tanh(c_new)
        return h_new, c_new

    def step(t, carry):
        h1, c1, h2, c2 = carry
        # layer 1: x-part (embed @ W1_ih + b1) is precomputed and streamed in.
        g1 = x1_ref[t] + jnp.dot(h1.astype(jnp.bfloat16), w1h_ref[...],
                                 preferred_element_type=jnp.float32)
        h1n, c1n = gates_to_hc(g1, c1)                      # d0/d1 = identity (eval)
        # layer 2: single fused K=2H matmul on [h1_t, h2_{t-1}].
        xh = jnp.concatenate([h1n, h2], axis=1).astype(jnp.bfloat16)
        g2 = jnp.dot(xh, w2_ref[...],
                     preferred_element_type=jnp.float32) + b2_ref[...]
        h2n, c2n = gates_to_hc(g2, c2)
        h2_seq_ref[t] = h2n                                 # lane-dense (B, H) store
        return (h1n, c1n, h2n, c2n)

    carry0 = (h1_ref[...], c1_ref[...], h2_ref[...], c2_ref[...])
    h1, c1, h2, c2 = lax.fori_loop(0, tc, step, carry0, unroll=(tc <= 8))

    # write the carry back once per chunk (resident outputs, HBM writeback at grid end)
    h1_ref[...] = h1; c1_ref[...] = c1
    h2_ref[...] = h2; c2_ref[...] = c2


# ----------------------------------------------------------------------------
# Kernel 2: hoisted vocab projection, fully parallel over vocab tiles.
# ----------------------------------------------------------------------------
def lm_head_kernel(h_ref, wo_ref, bo_ref, y_ref):
    y_ref[...] = (jnp.dot(h_ref[...].astype(jnp.bfloat16), wo_ref[...],
                          preferred_element_type=jnp.float32)
                  + bo_ref[...])


def lm_head(h2_seq, wo, bo, *, tn=128):
    T, B, H = h2_seq.shape
    V = wo.shape[1]
    TB = T * B
    if V % tn != 0:
        tn = V
    h_flat = h2_seq.reshape(TB, H)
    y = pl.pallas_call(
        lm_head_kernel,
        grid=(V // tn,),
        in_specs=[pl.BlockSpec((TB, H), lambda j: (0, 0)),
                  pl.BlockSpec((H, tn), lambda j: (0, j)),
                  pl.BlockSpec((1, tn), lambda j: (0, j))],
        out_specs=pl.BlockSpec((TB, tn), lambda j: (0, j)),
        out_shape=jax.ShapeDtypeStruct((TB, V), jnp.float32),
        compiler_params=pltpu.CompilerParams(dimension_semantics=("parallel",)),
    )(h_flat, wo, bo)
    return y.reshape(T, B, V)


# ----------------------------------------------------------------------------
# Parameters: torch-layout init (matches RNNLM.__init__), then prep to kernel layout.
# ----------------------------------------------------------------------------
def init_params_torch(key, n_vocab, input_units, n_units):
    """uniform(-0.1, 0.1) init in torch.nn layouts (LSTMCell gate order [i,f,g,o])."""
    ks = jax.random.split(key, 11)
    u = lambda k, shape: jax.random.uniform(k, shape, jnp.float32, -0.1, 0.1)
    H4 = 4 * n_units
    return {
        "embed":   u(ks[0], (n_vocab, input_units)),
        "l1_w_ih": u(ks[1], (H4, input_units)),
        "l1_w_hh": u(ks[2], (H4, n_units)),
        "l1_b_ih": u(ks[3], (H4,)),
        "l1_b_hh": u(ks[4], (H4,)),
        "l2_w_ih": u(ks[5], (H4, n_units)),
        "l2_w_hh": u(ks[6], (H4, n_units)),
        "l2_b_ih": u(ks[7], (H4,)),
        "l2_b_hh": u(ks[8], (H4,)),
        "lo_w":    u(ks[9], (n_vocab, n_units)),
        "lo_b":    u(ks[10], (n_vocab,)),
    }


def prep_params(tp, *, matmul_dtype=jnp.bfloat16):
    """torch layout -> kernel layout:
       * gate permutation [i,f,g,o] -> [i,f,o,g]
       * E1 = embed @ W1_ih.T + (b_ih + b_hh): embedding + layer-1 input proj folded
       * layer-2 weights stacked to one (2H, 4H) matrix (fused K=2H matmul)
       * matmul operands cast to bf16 (f32 accumulation in-kernel)"""
    H = tp["l1_w_hh"].shape[1]
    perm = jnp.concatenate([jnp.arange(0, H), jnp.arange(H, 2 * H),
                            jnp.arange(3 * H, 4 * H), jnp.arange(2 * H, 3 * H)])

    w1i = jnp.transpose(tp["l1_w_ih"][perm])                      # (D, 4H)
    b1 = (tp["l1_b_ih"] + tp["l1_b_hh"])[perm]                    # (4H,)
    e1 = tp["embed"] @ w1i + b1[None, :]                          # (V, 4H), f32

    w1h = jnp.transpose(tp["l1_w_hh"][perm]).astype(matmul_dtype)  # (H, 4H)
    w2 = jnp.concatenate([jnp.transpose(tp["l2_w_ih"][perm]),
                          jnp.transpose(tp["l2_w_hh"][perm])],
                         axis=0).astype(matmul_dtype)              # (2H, 4H)
    b2 = (tp["l2_b_ih"] + tp["l2_b_hh"])[perm][None, :]            # (1, 4H), f32

    return {
        "e1": e1,
        "w1_hh": w1h,
        "w2": w2, "b2": b2,
        "wo": jnp.transpose(tp["lo_w"]).astype(matmul_dtype),      # (H, V)
        "bo": tp["lo_b"][None, :],                                 # (1, V), f32
    }


# ----------------------------------------------------------------------------
# Wrappers.
# ----------------------------------------------------------------------------
def rnnlm_forward_seq(params, state, xs, *, chunk=8):
    """Run T timesteps.  xs: (T, B) int32 token ids.
    Returns (final_state, logits (T, B, V))."""
    T, B = xs.shape
    H, H4 = params["w1_hh"].shape
    V = params["wo"].shape[1]

    if state is None:
        z = jnp.zeros((B, H), jnp.float32)
        state = {"c1": z, "h1": z, "c2": z, "h2": z}

    # chunk length: largest divisor of T that is <= chunk
    tc = max(1, min(chunk, T))
    while T % tc:
        tc -= 1

    # One XLA gather of the folded embed+W1_ih(+b1) table for the whole sequence.
    x1_seq = jnp.take(params["e1"], xs.reshape(-1), axis=0).reshape(T, B, H4)

    res = lambda shape: pl.BlockSpec(shape, lambda c: (0,) * len(shape))  # resident across chunks

    in_specs = [
        pl.BlockSpec((tc, B, H4), lambda c: (c, 0, 0)),           # x1 chunks, streamed
        res((B, H)), res((B, H)), res((B, H)), res((B, H)),       # initial h1,c1,h2,c2
        res((H, H4)),                                             # W1_hh
        res((2 * H, H4)), res((1, H4)),                           # W2 (stacked), b2
    ]
    out_specs = (
        pl.BlockSpec((tc, B, H), lambda c: (c, 0, 0)),            # h2 per step, streamed
        res((B, H)), res((B, H)), res((B, H)), res((B, H)),       # final h1,c1,h2,c2 (carry)
    )
    out_shape = (
        jax.ShapeDtypeStruct((T, B, H), jnp.float32),
        jax.ShapeDtypeStruct((B, H), jnp.float32),
        jax.ShapeDtypeStruct((B, H), jnp.float32),
        jax.ShapeDtypeStruct((B, H), jnp.float32),
        jax.ShapeDtypeStruct((B, H), jnp.float32),
    )

    h2_seq, h1, c1, h2, c2 = pl.pallas_call(
        rnnlm_chunk_kernel,
        grid=(T // tc,),
        in_specs=in_specs,
        out_specs=out_specs,
        out_shape=out_shape,
        compiler_params=pltpu.CompilerParams(
            dimension_semantics=("arbitrary",)),                  # sequential recurrence
    )(x1_seq, state["h1"], state["c1"], state["h2"], state["c2"],
      params["w1_hh"], params["w2"], params["b2"])

    # Hoisted output projection: one big, fully parallel GEMM over all T*B rows.
    ys = lm_head(h2_seq, params["wo"], params["bo"])

    return {"c1": c1, "h1": h1, "c2": c2, "h2": h2}, ys


def rnnlm_forward(params, state, x):
    """Single-step API mirroring RNNLM.forward(state, x).  x: (B,) int32."""
    new_state, ys = rnnlm_forward_seq(params, state, x[None, :], chunk=1)
    return new_state, ys[0]


# ----------------------------------------------------------------------------
# Pure-JAX reference (torch layout / torch semantics) for correctness.
# ----------------------------------------------------------------------------
def rnnlm_forward_ref(tp, state, xs):
    T, B = xs.shape
    H = tp["l1_w_hh"].shape[1]
    if state is None:
        z = jnp.zeros((B, H), jnp.float32)
        state = {"c1": z, "h1": z, "c2": z, "h2": z}

    def cell(x, h, c, w_ih, w_hh, b_ih, b_hh):
        g = x @ w_ih.T + b_ih + h @ w_hh.T + b_hh
        i = jax.nn.sigmoid(g[:, 0 * H:1 * H]); f = jax.nn.sigmoid(g[:, 1 * H:2 * H])
        gg = jnp.tanh(g[:, 2 * H:3 * H]);      o = jax.nn.sigmoid(g[:, 3 * H:4 * H])
        c_new = f * c + i * gg
        return o * jnp.tanh(c_new), c_new

    h1, c1 = state["h1"], state["c1"]
    h2, c2 = state["h2"], state["c2"]
    ys = []
    for t in range(T):
        h0 = jnp.take(tp["embed"], xs[t], axis=0)
        h1, c1 = cell(h0, h1, c1, tp["l1_w_ih"], tp["l1_w_hh"], tp["l1_b_ih"], tp["l1_b_hh"])
        h2, c2 = cell(h1, h2, c2, tp["l2_w_ih"], tp["l2_w_hh"], tp["l2_b_ih"], tp["l2_b_hh"])
        ys.append(h2 @ tp["lo_w"].T + tp["lo_b"])
    return {"c1": c1, "h1": h1, "c2": c2, "h2": h2}, jnp.stack(ys)


if __name__ == "__main__":
    # Small but lane-aligned shapes: H/D multiples of 128, vocab multiple of 128,
    # batch multiple of 8 -> full-lane gate slices and lane-dense stores.
    n_vocab, input_units, n_units = 256, 128, 128
    batch, seq_len = 8, 12

    key = jax.random.PRNGKey(0)
    pkey, xkey = jax.random.split(key)
    torch_params = init_params_torch(pkey, n_vocab, input_units, n_units)
    params = prep_params(torch_params)
    xs = jax.random.randint(xkey, (seq_len, batch), 0, n_vocab, dtype=jnp.int32)

    # Fused whole-sequence forward (chunked recurrent kernel + parallel lm_head kernel).
    state, ys = rnnlm_forward_seq(params, None, xs, chunk=4)
    jax.block_until_ready(ys)

    # Check against the torch-semantics reference (bf16 matmuls -> loosened tolerance).
    state_ref, ys_ref = rnnlm_forward_ref(torch_params, None, xs)
    np.testing.assert_allclose(np.asarray(ys), np.asarray(ys_ref), atol=5e-3, rtol=5e-3)
    for k in ("h1", "c1", "h2", "c2"):
        np.testing.assert_allclose(np.asarray(state[k]), np.asarray(state_ref[k]),
                                   atol=5e-3, rtol=5e-3)

    # Single-step API (same signature as RNNLM.forward).
    st1, y1 = rnnlm_forward(params, None, xs[0])
    jax.block_until_ready(y1)
    np.testing.assert_allclose(np.asarray(y1), np.asarray(ys_ref[0]), atol=5e-3, rtol=5e-3)

    print("KERNEL_OK")
</pallas_src>

<mosaic_0001>
module attributes {stable_mosaic.version = 11 : i64} {
  func.func @rnnlm_chunk_kernel(%arg0: i32, %arg1: memref<4x8x512xf32, #tpu.memory_space<vmem>>, %arg2: memref<8x128xf32, #tpu.memory_space<vmem>>, %arg3: memref<8x128xf32, #tpu.memory_space<vmem>>, %arg4: memref<8x128xf32, #tpu.memory_space<vmem>>, %arg5: memref<8x128xf32, #tpu.memory_space<vmem>>, %arg6: memref<128x512xbf16, #tpu.memory_space<vmem>>, %arg7: memref<256x512xbf16, #tpu.memory_space<vmem>>, %arg8: memref<1x512xf32, #tpu.memory_space<vmem>>, %arg9: memref<4x8x128xf32, #tpu.memory_space<vmem>>, %arg10: memref<8x128xf32, #tpu.memory_space<vmem>>, %arg11: memref<8x128xf32, #tpu.memory_space<vmem>>, %arg12: memref<8x128xf32, #tpu.memory_space<vmem>>, %arg13: memref<8x128xf32, #tpu.memory_space<vmem>>) attributes {dimension_semantics = [#tpu.dimension_semantics<arbitrary>], iteration_bounds = array<i64: 3>, scalar_prefetch = 0 : i64, scratch_operands = 0 : i64, tpu.core_type = #tpu.core_type<tc>, window_params = [{transform_indices = @transform_0, window_bounds = array<i64: 4, 8, 512>}, {pipeline_mode = #tpu.pipeline_mode<synchronous>, transform_indices = @transform_1, window_bounds = array<i64: 8, 128>}, {pipeline_mode = #tpu.pipeline_mode<synchronous>, transform_indices = @transform_2, window_bounds = array<i64: 8, 128>}, {pipeline_mode = #tpu.pipeline_mode<synchronous>, transform_indices = @transform_3, window_bounds = array<i64: 8, 128>}, {pipeline_mode = #tpu.pipeline_mode<synchronous>, transform_indices = @transform_4, window_bounds = array<i64: 8, 128>}, {pipeline_mode = #tpu.pipeline_mode<synchronous>, transform_indices = @transform_5, window_bounds = array<i64: 128, 512>}, {pipeline_mode = #tpu.pipeline_mode<synchronous>, transform_indices = @transform_6, window_bounds = array<i64: 256, 512>}, {pipeline_mode = #tpu.pipeline_mode<synchronous>, transform_indices = @transform_7, window_bounds = array<i64: 1, 512>}, {transform_indices = @transform_8, window_bounds = array<i64: 4, 8, 128>}, {pipeline_mode = #tpu.pipeline_mode<synchronous>, transform_indices = @transform_9, window_bounds = array<i64: 8, 128>}, {pipeline_mode = #tpu.pipeline_mode<synchronous>, transform_indices = @transform_10, window_bounds = array<i64: 8, 128>}, {pipeline_mode = #tpu.pipeline_mode<synchronous>, transform_indices = @transform_11, window_bounds = array<i64: 8, 128>}, {pipeline_mode = #tpu.pipeline_mode<synchronous>, transform_indices = @transform_12, window_bounds = array<i64: 8, 128>}]} {
    %c0_i32 = arith.constant 0 : i32
    %0 = arith.cmpi eq, %arg0, %c0_i32 : i32
    %1 = arith.extui %0 : i1 to i32
    %c0_i32_0 = arith.constant 0 : i32
    %2 = arith.cmpi ne, %1, %c0_i32_0 : i32
    scf.if %2 {
      %c0_72 = arith.constant 0 : index
      %c0_73 = arith.constant 0 : index
      %211 = vector.load %arg2[%c0_72, %c0_73] : memref<8x128xf32, #tpu.memory_space<vmem>>, vector<8x128xf32>
      %c0_74 = arith.constant 0 : index
      %c0_75 = arith.constant 0 : index
      %212 = vector.load %arg10[%c0_74, %c0_75] : memref<8x128xf32, #tpu.memory_space<vmem>>, vector<8x128xf32>
      tpu.vector_store %arg10[%c0_74, %c0_75], %211 {strides = array<i32>} : memref<8x128xf32, #tpu.memory_space<vmem>>, vector<8x128xf32>,
      %c0_76 = arith.constant 0 : index
      %c0_77 = arith.constant 0 : index
      %213 = vector.load %arg3[%c0_76, %c0_77] : memref<8x128xf32, #tpu.memory_space<vmem>>, vector<8x128xf32>
      %c0_78 = arith.constant 0 : index
      %c0_79 = arith.constant 0 : index
      %214 = vector.load %arg11[%c0_78, %c0_79] : memref<8x128xf32, #tpu.memory_space<vmem>>, vector<8x128xf32>
      tpu.vector_store %arg11[%c0_78, %c0_79], %213 {strides = array<i32>} : memref<8x128xf32, #tpu.memory_space<vmem>>, vector<8x128xf32>,
      %c0_80 = arith.constant 0 : index
      %c0_81 = arith.constant 0 : index
      %215 = vector.load %arg4[%c0_80, %c0_81] : memref<8x128xf32, #tpu.memory_space<vmem>>, vector<8x128xf32>
      %c0_82 = arith.constant 0 : index
      %c0_83 = arith.constant 0 : index
      %216 = vector.load %arg12[%c0_82, %c0_83] : memref<8x128xf32, #tpu.memory_space<vmem>>, vector<8x128xf32>
      tpu.vector_store %arg12[%c0_82, %c0_83], %215 {strides = array<i32>} : memref<8x128xf32, #tpu.memory_space<vmem>>, vector<8x128xf32>,
      %c0_84 = arith.constant 0 : index
      %c0_85 = arith.constant 0 : index
      %217 = vector.load %arg5[%c0_84, %c0_85] : memref<8x128xf32, #tpu.memory_space<vmem>>, vector<8x128xf32>
      %c0_86 = arith.constant 0 : index
      %c0_87 = arith.constant 0 : index
      %218 = vector.load %arg13[%c0_86, %c0_87] : memref<8x128xf32, #tpu.memory_space<vmem>>, vector<8x128xf32>
      tpu.vector_store %arg13[%c0_86, %c0_87], %217 {strides = array<i32>} : memref<8x128xf32, #tpu.memory_space<vmem>>, vector<8x128xf32>,
    } else {
    }
    %c0 = arith.constant 0 : index
    %c0_1 = arith.constant 0 : index
    %3 = vector.load %arg10[%c0, %c0_1] : memref<8x128xf32, #tpu.memory_space<vmem>>, vector<8x128xf32>
    %c0_2 = arith.constant 0 : index
    %c0_3 = arith.constant 0 : index
    %4 = vector.load %arg11[%c0_2, %c0_3] : memref<8x128xf32, #tpu.memory_space<vmem>>, vector<8x128xf32>
    %c0_4 = arith.constant 0 : index
    %c0_5 = arith.constant 0 : index
    %5 = vector.load %arg12[%c0_4, %c0_5] : memref<8x128xf32, #tpu.memory_space<vmem>>, vector<8x128xf32>
    %c0_6 = arith.constant 0 : index
    %c0_7 = arith.constant 0 : index
    %6 = vector.load %arg13[%c0_6, %c0_7] : memref<8x128xf32, #tpu.memory_space<vmem>>, vector<8x128xf32>
    %c0_i32_8 = arith.constant 0 : i32
    %7 = arith.index_cast %c0_i32_8 : i32 to index
    %c0_9 = arith.constant 0 : index
    %c0_10 = arith.constant 0 : index
    %8 = vector.load %arg1[%7, %c0_9, %c0_10] : memref<4x8x512xf32, #tpu.memory_space<vmem>>, vector<1x8x512xf32>
    %9 = vector.shape_cast %8 : vector<1x8x512xf32> to vector<8x512xf32>
    %10 = arith.truncf %3 : vector<8x128xf32> to vector<8x128xbf16>
    %c0_11 = arith.constant 0 : index
    %c0_12 = arith.constant 0 : index
    %11 = vector.load %arg6[%c0_11, %c0_12] : memref<128x512xbf16, #tpu.memory_space<vmem>>, vector<128x512xbf16>
    %cst = arith.constant dense<0.000000e+00> : vector<8x512xf32>
    %12 = tpu.matmul %10, %11, %cst {dimension_numbers = #tpu.dot_dimension_numbers<[1], [0], [0], [1], [0, 0, 1, 1], [], []>} : vector<8x128xbf16>, vector<128x512xbf16>, vector<8x512xf32> -> vector<8x512xf32>
    %13 = arith.addf %9, %12 : vector<8x512xf32>
    %14 = vector.extract_strided_slice %13 {offsets = [0, 0], sizes = [8, 384], strides = [1, 1]} : vector<8x512xf32> to vector<8x384xf32>
    %15 = arith.negf %14 : vector<8x384xf32>
    %16 = math.exp %15 : vector<8x384xf32>
    %cst_13 = arith.constant 1.000000e+00 : f32
    %17 = vector.broadcast %cst_13 : f32 to vector<8x384xf32>
    %18 = arith.addf %17, %16 : vector<8x384xf32>
    %19 = arith.divf %17, %18 : vector<8x384xf32>
    %20 = vector.extract_strided_slice %13 {offsets = [0, 384], sizes = [8, 128], strides = [1, 1]} : vector<8x512xf32> to vector<8x128xf32>
    %21 = math.tanh %20 : vector<8x128xf32>
    %22 = vector.extract_strided_slice %19 {offsets = [0, 0], sizes = [8, 128], strides = [1, 1]} : vector<8x384xf32> to vector<8x128xf32>
    %23 = vector.extract_strided_slice %19 {offsets = [0, 128], sizes = [8, 128], strides = [1, 1]} : vector<8x384xf32> to vector<8x128xf32>
    %24 = vector.extract_strided_slice %19 {offsets = [0, 256], sizes = [8, 128], strides = [1, 1]} : vector<8x384xf32> to vector<8x128xf32>
    %25 = arith.mulf %23, %4 : vector<8x128xf32>
    %26 = arith.mulf %22, %21 : vector<8x128xf32>
    %27 = arith.addf %25, %26 : vector<8x128xf32>
    %28 = math.tanh %27 : vector<8x128xf32>
    %29 = arith.mulf %24, %28 : vector<8x128xf32>
    %30 = tpu.concatenate %29, %5 in 1 : vector<8x128xf32>, vector<8x128xf32> -> vector<8x256xf32>
    %31 = arith.truncf %30 : vector<8x256xf32> to vector<8x256xbf16>
    %c0_14 = arith.constant 0 : index
    %c0_15 = arith.constant 0 : index
    %32 = vector.load %arg7[%c0_14, %c0_15] : memref<256x512xbf16, #tpu.memory_space<vmem>>, vector<256x512xbf16>
    %cst_16 = arith.constant dense<0.000000e+00> : vector<8x512xf32>
    %33 = tpu.matmul %31, %32, %cst_16 {dimension_numbers = #tpu.dot_dimension_numbers<[1], [0], [0], [1], [0, 0, 1, 1], [], []>} : vector<8x256xbf16>, vector<256x512xbf16>, vector<8x512xf32> -> vector<8x512xf32>
    %c0_17 = arith.constant 0 : index
    %c0_18 = arith.constant 0 : index
    %34 = vector.load %arg8[%c0_17, %c0_18] : memref<1x512xf32, #tpu.memory_space<vmem>>, vector<1x512xf32>
    %35 = vector.broadcast %34 : vector<1x512xf32> to vector<8x512xf32>
    %36 = arith.addf %33, %35 : vector<8x512xf32>
    %37 = vector.extract_strided_slice %36 {offsets = [0, 0], sizes = [8, 384], strides = [1, 1]} : vector<8x512xf32> to vector<8x384xf32>
    %38 = arith.negf %37 : vector<8x384xf32>
    %39 = math.exp %38 : vector<8x384xf32>
    %cst_19 = arith.constant 1.000000e+00 : f32
    %40 = vector.broadcast %cst_19 : f32 to vector<8x384xf32>
    %41 = arith.addf %40, %39 : vector<8x384xf32>
    %42 = arith.divf %40, %41 : vector<8x384xf32>
    %43 = vector.extract_strided_slice %36 {offsets = [0, 384], sizes = [8, 128], strides = [1, 1]} : vector<8x512xf32> to vector<8x128xf32>
    %44 = math.tanh %43 : vector<8x128xf32>
    %45 = vector.extract_strided_slice %42 {offsets = [0, 0], sizes = [8, 128], strides = [1, 1]} : vector<8x384xf32> to vector<8x128xf32>
    %46 = vector.extract_strided_slice %42 {offsets = [0, 128], sizes = [8, 128], strides = [1, 1]} : vector<8x384xf32> to vector<8x128xf32>
    %47 = vector.extract_strided_slice %42 {offsets = [0, 256], sizes = [8, 128], strides = [1, 1]} : vector<8x384xf32> to vector<8x128xf32>
    %48 = arith.mulf %46, %6 : vector<8x128xf32>
    %49 = arith.mulf %45, %44 : vector<8x128xf32>
    %50 = arith.addf %48, %49 : vector<8x128xf32>
    %51 = math.tanh %50 : vector<8x128xf32>
    %52 = arith.mulf %47, %51 : vector<8x128xf32>
    %53 = arith.index_cast %c0_i32_8 : i32 to index
    %c0_20 = arith.constant 0 : index
    %c0_21 = arith.constant 0 : index
    %54 = vector.load %arg9[%53, %c0_20, %c0_21] : memref<4x8x128xf32, #tpu.memory_space<vmem>>, vector<1x8x128xf32>
    %55 = vector.shape_cast %54 : vector<1x8x128xf32> to vector<8x128xf32>
    %56 = vector.shape_cast %52 : vector<8x128xf32> to vector<1x8x128xf32>
    tpu.vector_store %arg9[%53, %c0_20, %c0_21], %56 {strides = array<i32>} : memref<4x8x128xf32, #tpu.memory_space<vmem>>, vector<1x8x128xf32>,
    %c1_i32 = arith.constant 1 : i32
    %57 = arith.index_cast %c1_i32 : i32 to index
    %c0_22 = arith.constant 0 : index
    %c0_23 = arith.constant 0 : index
    %58 = vector.load %arg1[%57, %c0_22, %c0_23] : memref<4x8x512xf32, #tpu.memory_space<vmem>>, vector<1x8x512xf32>
    %59 = vector.shape_cast %58 : vector<1x8x512xf32> to vector<8x512xf32>
    %60 = arith.truncf %29 : vector<8x128xf32> to vector<8x128xbf16>
    %c0_24 = arith.constant 0 : index
    %c0_25 = arith.constant 0 : index
    %61 = vector.load %arg6[%c0_24, %c0_25] : memref<128x512xbf16, #tpu.memory_space<vmem>>, vector<128x512xbf16>
    %cst_26 = arith.constant dense<0.000000e+00> : vector<8x512xf32>
    %62 = tpu.matmul %60, %61, %cst_26 {dimension_numbers = #tpu.dot_dimension_numbers<[1], [0], [0], [1], [0, 0, 1, 1], [], []>} : vector<8x128xbf16>, vector<128x512xbf16>, vector<8x512xf32> -> vector<8x512xf32>
    %63 = arith.addf %59, %62 : vector<8x512xf32>
    %64 = vector.extract_strided_slice %63 {offsets = [0, 0], sizes = [8, 384], strides = [1, 1]} : vector<8x512xf32> to vector<8x384xf32>
    %65 = arith.negf %64 : vector<8x384xf32>
    %66 = math.exp %65 : vector<8x384xf32>
    %cst_27 = arith.constant 1.000000e+00 : f32
    %67 = vector.broadcast %cst_27 : f32 to vector<8x384xf32>
    %68 = arith.addf %67, %66 : vector<8x384xf32>
    %69 = arith.divf %67, %68 : vector<8x384xf32>
    %70 = vector.extract_strided_slice %63 {offsets = [0, 384], sizes = [8, 128], strides = [1, 1]} : vector<8x512xf32> to vector<8x128xf32>
    %71 = math.tanh %70 : vector<8x128xf32>
    %72 = vector.extract_strided_slice %69 {offsets = [0, 0], sizes = [8, 128], strides = [1, 1]} : vector<8x384xf32> to vector<8x128xf32>
    %73 = vector.extract_strided_slice %69 {offsets = [0, 128], sizes = [8, 128], strides = [1, 1]} : vector<8x384xf32> to vector<8x128xf32>
    %74 = vector.extract_strided_slice %69 {offsets = [0, 256], sizes = [8, 128], strides = [1, 1]} : vector<8x384xf32> to vector<8x128xf32>
    %75 = arith.mulf %73, %27 : vector<8x128xf32>
    %76 = arith.mulf %72, %71 : vector<8x128xf32>
    %77 = arith.addf %75, %76 : vector<8x128xf32>
    %78 = math.tanh %77 : vector<8x128xf32>
    %79 = arith.mulf %74, %78 : vector<8x128xf32>
    %80 = tpu.concatenate %79, %52 in 1 : vector<8x128xf32>, vector<8x128xf32> -> vector<8x256xf32>
    %81 = arith.truncf %80 : vector<8x256xf32> to vector<8x256xbf16>
    %c0_28 = arith.constant 0 : index
    %c0_29 = arith.constant 0 : index
    %82 = vector.load %arg7[%c0_28, %c0_29] : memref<256x512xbf16, #tpu.memory_space<vmem>>, vector<256x512xbf16>
    %cst_30 = arith.constant dense<0.000000e+00> : vector<8x512xf32>
    %83 = tpu.matmul %81, %82, %cst_30 {dimension_numbers = #tpu.dot_dimension_numbers<[1], [0], [0], [1], [0, 0, 1, 1], [], []>} : vector<8x256xbf16>, vector<256x512xbf16>, vector<8x512xf32> -> vector<8x512xf32>
    %c0_31 = arith.constant 0 : index
    %c0_32 = arith.constant 0 : index
    %84 = vector.load %arg8[%c0_31, %c0_32] : memref<1x512xf32, #tpu.memory_space<vmem>>, vector<1x512xf32>
    %85 = vector.broadcast %84 : vector<1x512xf32> to vector<8x512xf32>
    %86 = arith.addf %83, %85 : vector<8x512xf32>
    %87 = vector.extract_strided_slice %86 {offsets = [0, 0], sizes = [8, 384], strides = [1, 1]} : vector<8x512xf32> to vector<8x384xf32>
    %88 = arith.negf %87 : vector<8x384xf32>
    %89 = math.exp %88 : vector<8x384xf32>
    %cst_33 = arith.constant 1.000000e+00 : f32
    %90 = vector.broadcast %cst_33 : f32 to vector<8x384xf32>
    %91 = arith.addf %90, %89 : vector<8x384xf32>
    %92 = arith.divf %90, %91 : vector<8x384xf32>
    %93 = vector.extract_strided_slice %86 {offsets = [0, 384], sizes = [8, 128], strides = [1, 1]} : vector<8x512xf32> to vector<8x128xf32>
    %94 = math.tanh %93 : vector<8x128xf32>
    %95 = vector.extract_strided_slice %92 {offsets = [0, 0], sizes = [8, 128], strides = [1, 1]} : vector<8x384xf32> to vector<8x128xf32>
    %96 = vector.extract_strided_slice %92 {offsets = [0, 128], sizes = [8, 128], strides = [1, 1]} : vector<8x384xf32> to vector<8x128xf32>
    %97 = vector.extract_strided_slice %92 {offsets = [0, 256], sizes = [8, 128], strides = [1, 1]} : vector<8x384xf32> to vector<8x128xf32>
    %98 = arith.mulf %96, %50 : vector<8x128xf32>
    %99 = arith.mulf %95, %94 : vector<8x128xf32>
    %100 = arith.addf %98, %99 : vector<8x128xf32>
    %101 = math.tanh %100 : vector<8x128xf32>
    %102 = arith.mulf %97, %101 : vector<8x128xf32>
    %103 = arith.index_cast %c1_i32 : i32 to index
    %c0_34 = arith.constant 0 : index
    %c0_35 = arith.constant 0 : index
    %104 = vector.load %arg9[%103, %c0_34, %c0_35] : memref<4x8x128xf32, #tpu.memory_space<vmem>>, vector<1x8x128xf32>
    %105 = vector.shape_cast %104 : vector<1x8x128xf32> to vector<8x128xf32>
    %106 = vector.shape_cast %102 : vector<8x128xf32> to vector<1x8x128xf32>
    tpu.vector_store %arg9[%103, %c0_34, %c0_35], %106 {strides = array<i32>} : memref<4x8x128xf32, #tpu.memory_space<vmem>>, vector<1x8x128xf32>,
    %c2_i32 = arith.constant 2 : i32
    %107 = arith.index_cast %c2_i32 : i32 to index
    %c0_36 = arith.constant 0 : index
    %c0_37 = arith.constant 0 : index
    %108 = vector.load %arg1[%107, %c0_36, %c0_37] : memref<4x8x512xf32, #tpu.memory_space<vmem>>, vector<1x8x512xf32>
    %109 = vector.shape_cast %108 : vector<1x8x512xf32> to vector<8x512xf32>
    %110 = arith.truncf %79 : vector<8x128xf32> to vector<8x128xbf16>
    %c0_38 = arith.constant 0 : index
    %c0_39 = arith.constant 0 : index
    %111 = vector.load %arg6[%c0_38, %c0_39] : memref<128x512xbf16, #tpu.memory_space<vmem>>, vector<128x512xbf16>
    %cst_40 = arith.constant dense<0.000000e+00> : vector<8x512xf32>
    %112 = tpu.matmul %110, %111, %cst_40 {dimension_numbers = #tpu.dot_dimension_numbers<[1], [0], [0], [1], [0, 0, 1, 1], [], []>} : vector<8x128xbf16>, vector<128x512xbf16>, vector<8x512xf32> -> vector<8x512xf32>
    %113 = arith.addf %109, %112 : vector<8x512xf32>
    %114 = vector.extract_strided_slice %113 {offsets = [0, 0], sizes = [8, 384], strides = [1, 1]} : vector<8x512xf32> to vector<8x384xf32>
    %115 = arith.negf %114 : vector<8x384xf32>
    %116 = math.exp %115 : vector<8x384xf32>
    %cst_41 = arith.constant 1.000000e+00 : f32
    %117 = vector.broadcast %cst_41 : f32 to vector<8x384xf32>
    %118 = arith.addf %117, %116 : vector<8x384xf32>
    %119 = arith.divf %117, %118 : vector<8x384xf32>
    %120 = vector.extract_strided_slice %113 {offsets = [0, 384], sizes = [8, 128], strides = [1, 1]} : vector<8x512xf32> to vector<8x128xf32>
    %121 = math.tanh %120 : vector<8x128xf32>
    %122 = vector.extract_strided_slice %119 {offsets = [0, 0], sizes = [8, 128], strides = [1, 1]} : vector<8x384xf32> to vector<8x128xf32>
    %123 = vector.extract_strided_slice %119 {offsets = [0, 128], sizes = [8, 128], strides = [1, 1]} : vector<8x384xf32> to vector<8x128xf32>
    %124 = vector.extract_strided_slice %119 {offsets = [0, 256], sizes = [8, 128], strides = [1, 1]} : vector<8x384xf32> to vector<8x128xf32>
    %125 = arith.mulf %123, %77 : vector<8x128xf32>
    %126 = arith.mulf %122, %121 : vector<8x128xf32>
    %127 = arith.addf %125, %126 : vector<8x128xf32>
    %128 = math.tanh %127 : vector<8x128xf32>
    %129 = arith.mulf %124, %128 : vector<8x128xf32>
    %130 = tpu.concatenate %129, %102 in 1 : vector<8x128xf32>, vector<8x128xf32> -> vector<8x256xf32>
    %131 = arith.truncf %130 : vector<8x256xf32> to vector<8x256xbf16>
    %c0_42 = arith.constant 0 : index
    %c0_43 = arith.constant 0 : index
    %132 = vector.load %arg7[%c0_42, %c0_43] : memref<256x512xbf16, #tpu.memory_space<vmem>>, vector<256x512xbf16>
    %cst_44 = arith.constant dense<0.000000e+00> : vector<8x512xf32>
    %133 = tpu.matmul %131, %132, %cst_44 {dimension_numbers = #tpu.dot_dimension_numbers<[1], [0], [0], [1], [0, 0, 1, 1], [], []>} : vector<8x256xbf16>, vector<256x512xbf16>, vector<8x512xf32> -> vector<8x512xf32>
    %c0_45 = arith.constant 0 : index
    %c0_46 = arith.constant 0 : index
    %134 = vector.load %arg8[%c0_45, %c0_46] : memref<1x512xf32, #tpu.memory_space<vmem>>, vector<1x512xf32>
    %135 = vector.broadcast %134 : vector<1x512xf32> to vector<8x512xf32>
    %136 = arith.addf %133, %135 : vector<8x512xf32>
    %137 = vector.extract_strided_slice %136 {offsets = [0, 0], sizes = [8, 384], strides = [1, 1]} : vector<8x512xf32> to vector<8x384xf32>
    %138 = arith.negf %137 : vector<8x384xf32>
    %139 = math.exp %138 : vector<8x384xf32>
    %cst_47 = arith.constant 1.000000e+00 : f32
    %140 = vector.broadcast %cst_47 : f32 to vector<8x384xf32>
    %141 = arith.addf %140, %139 : vector<8x384xf32>
    %142 = arith.divf %140, %141 : vector<8x384xf32>
    %143 = vector.extract_strided_slice %136 {offsets = [0, 384], sizes = [8, 128], strides = [1, 1]} : vector<8x512xf32> to vector<8x128xf32>
    %144 = math.tanh %143 : vector<8x128xf32>
    %145 = vector.extract_strided_slice %142 {offsets = [0, 0], sizes = [8, 128], strides = [1, 1]} : vector<8x384xf32> to vector<8x128xf32>
    %146 = vector.extract_strided_slice %142 {offsets = [0, 128], sizes = [8, 128], strides = [1, 1]} : vector<8x384xf32> to vector<8x128xf32>
    %147 = vector.extract_strided_slice %142 {offsets = [0, 256], sizes = [8, 128], strides = [1, 1]} : vector<8x384xf32> to vector<8x128xf32>
    %148 = arith.mulf %146, %100 : vector<8x128xf32>
    %149 = arith.mulf %145, %144 : vector<8x128xf32>
    %150 = arith.addf %148, %149 : vector<8x128xf32>
    %151 = math.tanh %150 : vector<8x128xf32>
    %152 = arith.mulf %147, %151 : vector<8x128xf32>
    %153 = arith.index_cast %c2_i32 : i32 to index
    %c0_48 = arith.constant 0 : index
    %c0_49 = arith.constant 0 : index
    %154 = vector.load %arg9[%153, %c0_48, %c0_49] : memref<4x8x128xf32, #tpu.memory_space<vmem>>, vector<1x8x128xf32>
    %155 = vector.shape_cast %154 : vector<1x8x128xf32> to vector<8x128xf32>
    %156 = vector.shape_cast %152 : vector<8x128xf32> to vector<1x8x128xf32>
    tpu.vector_store %arg9[%153, %c0_48, %c0_49], %156 {strides = array<i32>} : memref<4x8x128xf32, #tpu.memory_space<vmem>>, vector<1x8x128xf32>,
    %c3_i32 = arith.constant 3 : i32
    %157 = arith.index_cast %c3_i32 : i32 to index
    %c0_50 = arith.constant 0 : index
    %c0_51 = arith.constant 0 : index
    %158 = vector.load %arg1[%157, %c0_50, %c0_51] : memref<4x8x512xf32, #tpu.memory_space<vmem>>, vector<1x8x512xf32>
    %159 = vector.shape_cast %158 : vector<1x8x512xf32> to vector<8x512xf32>
    %160 = arith.truncf %129 : vector<8x128xf32> to vector<8x128xbf16>
    %c0_52 = arith.constant 0 : index
    %c0_53 = arith.constant 0 : index
    %161 = vector.load %arg6[%c0_52, %c0_53] : memref<128x512xbf16, #tpu.memory_space<vmem>>, vector<128x512xbf16>
    %cst_54 = arith.constant dense<0.000000e+00> : vector<8x512xf32>
    %162 = tpu.matmul %160, %161, %cst_54 {dimension_numbers = #tpu.dot_dimension_numbers<[1], [0], [0], [1], [0, 0, 1, 1], [], []>} : vector<8x128xbf16>, vector<128x512xbf16>, vector<8x512xf32> -> vector<8x512xf32>
    %163 = arith.addf %159, %162 : vector<8x512xf32>
    %164 = vector.extract_strided_slice %163 {offsets = [0, 0], sizes = [8, 384], strides = [1, 1]} : vector<8x512xf32> to vector<8x384xf32>
    %165 = arith.negf %164 : vector<8x384xf32>
    %166 = math.exp %165 : vector<8x384xf32>
    %cst_55 = arith.constant 1.000000e+00 : f32
    %167 = vector.broadcast %cst_55 : f32 to vector<8x384xf32>
    %168 = arith.addf %167, %166 : vector<8x384xf32>
    %169 = arith.divf %167, %168 : vector<8x384xf32>
    %170 = vector.extract_strided_slice %163 {offsets = [0, 384], sizes = [8, 128], strides = [1, 1]} : vector<8x512xf32> to vector<8x128xf32>
    %171 = math.tanh %170 : vector<8x128xf32>
    %172 = vector.extract_strided_slice %169 {offsets = [0, 0], sizes = [8, 128], strides = [1, 1]} : vector<8x384xf32> to vector<8x128xf32>
    %173 = vector.extract_strided_slice %169 {offsets = [0, 128], sizes = [8, 128], strides = [1, 1]} : vector<8x384xf32> to vector<8x128xf32>
    %174 = vector.extract_strided_slice %169 {offsets = [0, 256], sizes = [8, 128], strides = [1, 1]} : vector<8x384xf32> to vector<8x128xf32>
    %175 = arith.mulf %173, %127 : vector<8x128xf32>
    %176 = arith.mulf %172, %171 : vector<8x128xf32>
    %177 = arith.addf %175, %176 : vector<8x128xf32>
    %178 = math.tanh %177 : vector<8x128xf32>
    %179 = arith.mulf %174, %178 : vector<8x128xf32>
    %180 = tpu.concatenate %179, %152 in 1 : vector<8x128xf32>, vector<8x128xf32> -> vector<8x256xf32>
    %181 = arith.truncf %180 : vector<8x256xf32> to vector<8x256xbf16>
    %c0_56 = arith.constant 0 : index
    %c0_57 = arith.constant 0 : index
    %182 = vector.load %arg7[%c0_56, %c0_57] : memref<256x512xbf16, #tpu.memory_space<vmem>>, vector<256x512xbf16>
    %cst_58 = arith.constant dense<0.000000e+00> : vector<8x512xf32>
    %183 = tpu.matmul %181, %182, %cst_58 {dimension_numbers = #tpu.dot_dimension_numbers<[1], [0], [0], [1], [0, 0, 1, 1], [], []>} : vector<8x256xbf16>, vector<256x512xbf16>, vector<8x512xf32> -> vector<8x512xf32>
    %c0_59 = arith.constant 0 : index
    %c0_60 = arith.constant 0 : index
    %184 = vector.load %arg8[%c0_59, %c0_60] : memref<1x512xf32, #tpu.memory_space<vmem>>, vector<1x512xf32>
    %185 = vector.broadcast %184 : vector<1x512xf32> to vector<8x512xf32>
    %186 = arith.addf %183, %185 : vector<8x512xf32>
    %187 = vector.extract_strided_slice %186 {offsets = [0, 0], sizes = [8, 384], strides = [1, 1]} : vector<8x512xf32> to vector<8x384xf32>
    %188 = arith.negf %187 : vector<8x384xf32>
    %189 = math.exp %188 : vector<8x384xf32>
    %cst_61 = arith.constant 1.000000e+00 : f32
    %190 = vector.broadcast %cst_61 : f32 to vector<8x384xf32>
    %191 = arith.addf %190, %189 : vector<8x384xf32>
    %192 = arith.divf %190, %191 : vector<8x384xf32>
    %193 = vector.extract_strided_slice %186 {offsets = [0, 384], sizes = [8, 128], strides = [1, 1]} : vector<8x512xf32> to vector<8x128xf32>
    %194 = math.tanh %193 : vector<8x128xf32>
    %195 = vector.extract_strided_slice %192 {offsets = [0, 0], sizes = [8, 128], strides = [1, 1]} : vector<8x384xf32> to vector<8x128xf32>
    %196 = vector.extract_strided_slice %192 {offsets = [0, 128], sizes = [8, 128], strides = [1, 1]} : vector<8x384xf32> to vector<8x128xf32>
    %197 = vector.extract_strided_slice %192 {offsets = [0, 256], sizes = [8, 128], strides = [1, 1]} : vector<8x384xf32> to vector<8x128xf32>
    %198 = arith.mulf %196, %150 : vector<8x128xf32>
    %199 = arith.mulf %195, %194 : vector<8x128xf32>
    %200 = arith.addf %198, %199 : vector<8x128xf32>
    %201 = math.tanh %200 : vector<8x128xf32>
    %202 = arith.mulf %197, %201 : vector<8x128xf32>
    %203 = arith.index_cast %c3_i32 : i32 to index
    %c0_62 = arith.constant 0 : index
    %c0_63 = arith.constant 0 : index
    %204 = vector.load %arg9[%203, %c0_62, %c0_63] : memref<4x8x128xf32, #tpu.memory_space<vmem>>, vector<1x8x128xf32>
    %205 = vector.shape_cast %204 : vector<1x8x128xf32> to vector<8x128xf32>
    %206 = vector.shape_cast %202 : vector<8x128xf32> to vector<1x8x128xf32>
    tpu.vector_store %arg9[%203, %c0_62, %c0_63], %206 {strides = array<i32>} : memref<4x8x128xf32, #tpu.memory_space<vmem>>, vector<1x8x128xf32>,
    %c4_i32 = arith.constant 4 : i32
    %c0_64 = arith.constant 0 : index
    %c0_65 = arith.constant 0 : index
    %207 = vector.load %arg10[%c0_64, %c0_65] : memref<8x128xf32, #tpu.memory_space<vmem>>, vector<8x128xf32>
    tpu.vector_store %arg10[%c0_64, %c0_65], %179 {strides = array<i32>} : memref<8x128xf32, #tpu.memory_space<vmem>>, vector<8x128xf32>,
    %c0_66 = arith.constant 0 : index
    %c0_67 = arith.constant 0 : index
    %208 = vector.load %arg11[%c0_66, %c0_67] : memref<8x128xf32, #tpu.memory_space<vmem>>, vector<8x128xf32>
    tpu.vector_store %arg11[%c0_66, %c0_67], %177 {strides = array<i32>} : memref<8x128xf32, #tpu.memory_space<vmem>>, vector<8x128xf32>,
    %c0_68 = arith.constant 0 : index
    %c0_69 = arith.constant 0 : index
    %209 = vector.load %arg12[%c0_68, %c0_69] : memref<8x128xf32, #tpu.memory_space<vmem>>, vector<8x128xf32>
    tpu.vector_store %arg12[%c0_68, %c0_69], %202 {strides = array<i32>} : memref<8x128xf32, #tpu.memory_space<vmem>>, vector<8x128xf32>,
    %c0_70 = arith.constant 0 : index
    %c0_71 = arith.constant 0 : index
    %210 = vector.load %arg13[%c0_70, %c0_71] : memref<8x128xf32, #tpu.memory_space<vmem>>, vector<8x128xf32>
    tpu.vector_store %arg13[%c0_70, %c0_71], %200 {strides = array<i32>} : memref<8x128xf32, #tpu.memory_space<vmem>>, vector<8x128xf32>,
    return
  }
  func.func @transform_0(%arg0: i32) -> (i32, i32, i32) {
    %c0_i32 = arith.constant 0 : i32
    %c0_i32_0 = arith.constant 0 : i32
    %c0_i32_1 = arith.constant 0 : i32
    return %arg0, %c0_i32, %c0_i32_0 : i32, i32, i32
  }
  func.func @transform_1(%arg0: i32) -> (i32, i32) {
    %c0_i32 = arith.constant 0 : i32
    %c0_i32_0 = arith.constant 0 : i32
    %c0_i32_1 = arith.constant 0 : i32
    return %c0_i32, %c0_i32_0 : i32, i32
  }
  func.func @transform_2(%arg0: i32) -> (i32, i32) {
    %c0_i32 = arith.constant 0 : i32
    %c0_i32_0 = arith.constant 0 : i32
    %c0_i32_1 = arith.constant 0 : i32
    return %c0_i32, %c0_i32_0 : i32, i32
  }
  func.func @transform_3(%arg0: i32) -> (i32, i32) {
    %c0_i32 = arith.constant 0 : i32
    %c0_i32_0 = arith.constant 0 : i32
    %c0_i32_1 = arith.constant 0 : i32
    return %c0_i32, %c0_i32_0 : i32, i32
  }
  func.func @transform_4(%arg0: i32) -> (i32, i32) {
    %c0_i32 = arith.constant 0 : i32
    %c0_i32_0 = arith.constant 0 : i32
    %c0_i32_1 = arith.constant 0 : i32
    return %c0_i32, %c0_i32_0 : i32, i32
  }
  func.func @transform_5(%arg0: i32) -> (i32, i32) {
    %c0_i32 = arith.constant 0 : i32
    %c0_i32_0 = arith.constant 0 : i32
    %c0_i32_1 = arith.constant 0 : i32
    return %c0_i32, %c0_i32_0 : i32, i32
  }
  func.func @transform_6(%arg0: i32) -> (i32, i32) {
    %c0_i32 = arith.constant 0 : i32
    %c0_i32_0 = arith.constant 0 : i32
    %c0_i32_1 = arith.constant 0 : i32
    return %c0_i32, %c0_i32_0 : i32, i32
  }
  func.func @transform_7(%arg0: i32) -> (i32, i32) {
    %c0_i32 = arith.constant 0 : i32
    %c0_i32_0 = arith.constant 0 : i32
    %c0_i32_1 = arith.constant 0 : i32
    return %c0_i32, %c0_i32_0 : i32, i32
  }
  func.func @transform_8(%arg0: i32) -> (i32, i32, i32) {
    %c0_i32 = arith.constant 0 : i32
    %c0_i32_0 = arith.constant 0 : i32
    %c0_i32_1 = arith.constant 0 : i32
    return %arg0, %c0_i32, %c0_i32_0 : i32, i32, i32
  }
  func.func @transform_9(%arg0: i32) -> (i32, i32) {
    %c0_i32 = arith.constant 0 : i32
    %c0_i32_0 = arith.constant 0 : i32
    %c0_i32_1 = arith.constant 0 : i32
    return %c0_i32, %c0_i32_0 : i32, i32
  }
  func.func @transform_10(%arg0: i32) -> (i32, i32) {
    %c0_i32 = arith.constant 0 : i32
    %c0_i32_0 = arith.constant 0 : i32
    %c0_i32_1 = arith.constant 0 : i32
    return %c0_i32, %c0_i32_0 : i32, i32
  }
  func.func @transform_11(%arg0: i32) -> (i32, i32) {
    %c0_i32 = arith.constant 0 : i32
    %c0_i32_0 = arith.constant 0 : i32
    %c0_i32_1 = arith.constant 0 : i32
    return %c0_i32, %c0_i32_0 : i32, i32
  }
  func.func @transform_12(%arg0: i32) -> (i32, i32) {
    %c0_i32 = arith.constant 0 : i32
    %c0_i32_0 = arith.constant 0 : i32
    %c0_i32_1 = arith.constant 0 : i32
    return %c0_i32, %c0_i32_0 : i32, i32
  }
}

</mosaic_0001>

<llo_original>
// kernel: tpu_custom_call.1
$region0: #{tpu_custom_call.1}
  #allocation0 [shape = 'u32[]', space=smem, size = 0x4, offset = 0x4, fixed_abs, tag = 'smem constant byte address 0x4 - core index']
  #allocation1 [shape = 'u32[144,128]{1,0:T(1,128)}', space=vmem, size = 0x12000, scoped, tag = 'internal scratch']
  %s0 = inlined_call_operand.hbm [shape: f32[12,8,512], index: 0, kind: input, shape index: {}]
  %s1 = inlined_call_operand.hbm [shape: f32[8,128], index: 1, kind: input, shape index: {}]
  %s2 = inlined_call_operand.hbm [shape: f32[8,128], index: 2, kind: input, shape index: {}]
  %s3 = inlined_call_operand.hbm [shape: f32[8,128], index: 3, kind: input, shape index: {}]
  %s4 = inlined_call_operand.hbm [shape: f32[8,128], index: 4, kind: input, shape index: {}]
  %s5 = inlined_call_operand.hbm [shape: bf16[128,512], index: 5, kind: input, shape index: {}]
  %s6 = inlined_call_operand.hbm [shape: bf16[256,512], index: 6, kind: input, shape index: {}]
  %s7 = inlined_call_operand.vmem [shape: f32[1,512], index: 7, kind: input, shape index: {}]
  %s8 = inlined_call_operand.hbm [shape: f32[12,8,128], index: 8, kind: output, shape index: {0}]
  %s9 = inlined_call_operand.hbm [shape: f32[8,128], index: 9, kind: output, shape index: {1}]
  %s10 = inlined_call_operand.hbm [shape: f32[8,128], index: 10, kind: output, shape index: {2}]
  %s11 = inlined_call_operand.hbm [shape: f32[8,128], index: 11, kind: output, shape index: {3}]
  %s12 = inlined_call_operand.hbm [shape: f32[8,128], index: 12, kind: output, shape index: {4}]
  %13 = xla_tuple %s8, %s9, %s10, %s11, %s12
  %s14 = sld [smem:[#allocation0]]
  $region129: #{tpu_custom_call.1} parent=0
    _
  %s16 = ssub.s32 1, %s14
  %s17 = scalar_select 0, %s16, %s14
  $region1: #{tpu_custom_call.1} parent=0
    #allocation2 [shape = 'u8[131072]{0}', space=vmem, size = 0x20000, scoped, tag = 'input window, operand 0']
    #allocation3 [shape = 's32[2]{0}', space=sflag, size = 0x8, scoped, tag = 'scoped memory for tpu_custom_call.1']
    #allocation4 [shape = 's32[2]{0}', space=sflag, size = 0x8, scoped, tag = 'scoped memory for tpu_custom_call.1']
    #allocation5 [shape = 'u8[4096]{0}', space=vmem, size = 0x1000, scoped, tag = 'input window, operand 1, single buffered']
    #allocation6 [shape = 's32[1]{0}', space=sflag, size = 0x4, scoped, tag = 'scoped memory for tpu_custom_call.1']
    #allocation7 [shape = 'u8[4096]{0}', space=vmem, size = 0x1000, scoped, tag = 'input window, operand 2, single buffered']
    #allocation8 [shape = 'u8[4096]{0}', space=vmem, size = 0x1000, scoped, tag = 'input window, operand 3, single buffered']
    #allocation9 [shape = 's32[1]{0}', space=sflag, size = 0x4, scoped, tag = 'scoped memory for tpu_custom_call.1']
    #allocation10 [shape = 'u8[4096]{0}', space=vmem, size = 0x1000, scoped, tag = 'input window, operand 4, single buffered']
    #allocation11 [shape = 'u8[131072]{0}', space=vmem, size = 0x20000, scoped, tag = 'input window, operand 5, single buffered']
    #allocation12 [shape = 's32[1]{0}', space=sflag, size = 0x4, scoped, tag = 'scoped memory for tpu_custom_call.1']
    #allocation13 [shape = 'u8[262144]{0}', space=vmem, size = 0x40000, scoped, tag = 'input window, operand 6, single buffered']
    #allocation14 [shape = 'u8[32768]{0}', space=vmem, size = 0x8000, scoped, tag = 'output window, operand 0']
    #allocation15 [shape = 'u8[4096]{0}', space=vmem, size = 0x1000, scoped, tag = 'output window, operand 1, single buffered']
    #allocation16 [shape = 's32[1]{0}', space=sflag, size = 0x4, scoped, tag = 'scoped memory for tpu_custom_call.1']
    #allocation17 [shape = 'u8[4096]{0}', space=vmem, size = 0x1000, scoped, tag = 'output window, operand 2, single buffered']
    #allocation18 [shape = 'u8[4096]{0}', space=vmem, size = 0x1000, scoped, tag = 'output window, operand 3, single buffered']
    #allocation19 [shape = 's32[1]{0}', space=sflag, size = 0x4, scoped, tag = 'scoped memory for tpu_custom_call.1']
    #allocation20 [shape = 'u8[4096]{0}', space=vmem, size = 0x1000, scoped, tag = 'output window, operand 4, single buffered']
    %18 = vsyncpa [#allocation3], 0
    %s19 = scalar_lea.sflag [#allocation3], 1
    %20 = vsyncpa %s19, 0
    %21 = vsyncpa [#allocation6], 0
    %22 = vsyncpa [#allocation9], 0
    %23 = vsyncpa [#allocation12], 0
    %24 = vsyncpa [#allocation4], 0
    %s25 = scalar_lea.sflag [#allocation4], 1
    %26 = vsyncpa %s25, 0
    %27 = vsyncpa [#allocation16], 0
    %28 = vsyncpa [#allocation19], 0
    loop: start=0, step=1, limit=5
    $region2: #{tpu_custom_call.1} parent=1 // loop_pre_header
      _
    $region3: #{tpu_custom_call.1} parent=1 // loop_header
      %s30 = sphi 0, %s34
      %p31 = scmp.ge.s32.totalorder %s30, 5
      %s40 = sphi 0, %s42
      %s43 = sphi 0, %s40
      %s44 = sphi 0, %s43
      %s60 = sphi 0, %s44
      %s64 = sphi 0, %s64
      %s66 = sphi 0, %s64
      %s67 = sphi 0, %s66
      %s81 = sphi 0, %s67
      %s85 = sphi 0, %s85
      %s87 = sphi 0, %s85
      %s88 = sphi 0, %s87
      %s102 = sphi 0, %s88
      %s106 = sphi 0, %s106
      %s108 = sphi 0, %s106
      %s109 = sphi 0, %s108
      %s123 = sphi 0, %s109
      %s127 = sphi 0, %s127
      %s129 = sphi 0, %s127
      %s130 = sphi 0, %s129
      %s144 = sphi 0, %s130
      %s148 = sphi 0, %s148
      %s150 = sphi 0, %s148
      %s151 = sphi 0, %s150
      %s165 = sphi 0, %s151
      %s169 = sphi 0, %s169
      %s171 = sphi 0, %s169
      %s172 = sphi 0, %s171
      %s186 = sphi 0, %s172
      %s190 = sphi 0, %s190
      %s192 = sphi 0, %s190
      %s193 = sphi 0, %s192
      %s207 = sphi 0, %s193
      %s213 = sphi 0, %s215
      %s216 = sphi 0, %s213
      %s217 = sphi 0, %s216
      %s233 = sphi 0, %s217
      %s237 = sphi 0, %s237
      %s239 = sphi 0, %s237
      %s240 = sphi 0, %s239
      %s254 = sphi 0, %s240
      %s258 = sphi 0, %s258
      %s260 = sphi 0, %s258
      %s261 = sphi 0, %s260
      %s275 = sphi 0, %s261
      %s279 = sphi 0, %s279
      %s281 = sphi 0, %s279
      %s282 = sphi 0, %s281
      %s296 = sphi 0, %s282
      %s300 = sphi 0, %s300
      %s302 = sphi 0, %s300
      %s303 = sphi 0, %s302
      %s317 = sphi 0, %s303
    $region4: #{tpu_custom_call.1} parent=1 // loop_header_branch
      %33 = sbr.rel (%p31) target = $region8
    $region5: #{tpu_custom_call.1} parent=1 // loop_body
      %s35 = ssub.s32 %s30, 1
      %s36 = ssub.s32 %s30, 2
      %s37 = sadd.s32 %s30, 1
      %s38 = ssub.s32 %s30, %s37
      %p39 = scmp.eq.s32.totalorder %s38, 0
      %s41 = sadd.s32 %s40, 1
      %s42 = scalar_select %p39, %s40, %s41
      %p45 = pneg %p39
      %p46 = scmp.eq.s32.totalorder %s30, 2
      %p47 = por %p45, %p46
      %p48 = scmp.ne.s32.totalorder %s40, %s43
      %p49 = scmp.eq.s32.totalorder %s30, 0
      %p50 = por %p48, %p49
      %p51 = scmp.ne.s32.totalorder %s40, %s43
      %p52 = scmp.eq.s32.totalorder %s35, 2
      %p53 = por %p51, %p52
      %p54 = scmp.ne.s32.totalorder %s43, %s44
      %p55 = scmp.eq.s32.totalorder %s35, 0
      %p56 = por %p54, %p55
      %p57 = scmp.ne.s32.totalorder %s43, %s44
      %p58 = scmp.eq.s32.totalorder %s36, 2
      %p59 = por %p57, %p58
      %p61 = scmp.ne.s32.totalorder %s44, %s60
      %p62 = scmp.eq.s32.totalorder %s36, 0
      %p63 = por %p61, %p62
      %s65 = sadd.s32 %s64, 1
      %p68 = scmp.eq.s32.totalorder %s30, 2
      %p69 = scmp.ne.s32.totalorder %s64, %s66
      %p70 = scmp.eq.s32.totalorder %s30, 0
      %p71 = por %p69, %p70
      %p72 = scmp.ne.s32.totalorder %s64, %s66
      %p73 = scmp.eq.s32.totalorder %s35, 2
      %p74 = por %p72, %p73
      %p75 = scmp.ne.s32.totalorder %s66, %s67
      %p76 = scmp.eq.s32.totalorder %s35, 0
      %p77 = por %p75, %p76
      %p78 = scmp.ne.s32.totalorder %s66, %s67
      %p79 = scmp.eq.s32.totalorder %s36, 2
      %p80 = por %p78, %p79
      %p82 = scmp.ne.s32.totalorder %s67, %s81
      %p83 = scmp.eq.s32.totalorder %s36, 0
      %p84 = por %p82, %p83
      %s86 = sadd.s32 %s85, 1
      %p89 = scmp.eq.s32.totalorder %s30, 2
      %p90 = scmp.ne.s32.totalorder %s85, %s87
      %p91 = scmp.eq.s32.totalorder %s30, 0
      %p92 = por %p90, %p91
      %p93 = scmp.ne.s32.totalorder %s85, %s87
      %p94 = scmp.eq.s32.totalorder %s35, 2
      %p95 = por %p93, %p94
      %p96 = scmp.ne.s32.totalorder %s87, %s88
      %p97 = scmp.eq.s32.totalorder %s35, 0
      %p98 = por %p96, %p97
      %p99 = scmp.ne.s32.totalorder %s87, %s88
      %p100 = scmp.eq.s32.totalorder %s36, 2
      %p101 = por %p99, %p100
      %p103 = scmp.ne.s32.totalorder %s88, %s102
      %p104 = scmp.eq.s32.totalorder %s36, 0
      %p105 = por %p103, %p104
      %s107 = sadd.s32 %s106, 1
      %p110 = scmp.eq.s32.totalorder %s30, 2
      %p111 = scmp.ne.s32.totalorder %s106, %s108
      %p112 = scmp.eq.s32.totalorder %s30, 0
      %p113 = por %p111, %p112
      %p114 = scmp.ne.s32.totalorder %s106, %s108
      %p115 = scmp.eq.s32.totalorder %s35, 2
      %p116 = por %p114, %p115
      %p117 = scmp.ne.s32.totalorder %s108, %s109
      %p118 = scmp.eq.s32.totalorder %s35, 0
      %p119 = por %p117, %p118
      %p120 = scmp.ne.s32.totalorder %s108, %s109
      %p121 = scmp.eq.s32.totalorder %s36, 2
      %p122 = por %p120, %p121
      %p124 = scmp.ne.s32.totalorder %s109, %s123
      %p125 = scmp.eq.s32.totalorder %s36, 0
      %p126 = por %p124, %p125
      %s128 = sadd.s32 %s127, 1
      %p131 = scmp.eq.s32.totalorder %s30, 2
      %p132 = scmp.ne.s32.totalorder %s127, %s129
      %p133 = scmp.eq.s32.totalorder %s30, 0
      %p134 = por %p132, %p133
      %p135 = scmp.ne.s32.totalorder %s127, %s129
      %p136 = scmp.eq.s32.totalorder %s35, 2
      %p137 = por %p135, %p136
      %p138 = scmp.ne.s32.totalorder %s129, %s130
      %p139 = scmp.eq.s32.totalorder %s35, 0
      %p140 = por %p138, %p139
      %p141 = scmp.ne.s32.totalorder %s129, %s130
      %p142 = scmp.eq.s32.totalorder %s36, 2
      %p143 = por %p141, %p142
      %p145 = scmp.ne.s32.totalorder %s130, %s144
      %p146 = scmp.eq.s32.totalorder %s36, 0
      %p147 = por %p145, %p146
      %s149 = sadd.s32 %s148, 1
      %p152 = scmp.eq.s32.totalorder %s30, 2
      %p153 = scmp.ne.s32.totalorder %s148, %s150
      %p154 = scmp.eq.s32.totalorder %s30, 0
      %p155 = por %p153, %p154
      %p156 = scmp.ne.s32.totalorder %s148, %s150
      %p157 = scmp.eq.s32.totalorder %s35, 2
      %p158 = por %p156, %p157
      %p159 = scmp.ne.s32.totalorder %s150, %s151
      %p160 = scmp.eq.s32.totalorder %s35, 0
      %p161 = por %p159, %p160
      %p162 = scmp.ne.s32.totalorder %s150, %s151
      %p163 = scmp.eq.s32.totalorder %s36, 2
      %p164 = por %p162, %p163
      %p166 = scmp.ne.s32.totalorder %s151, %s165
      %p167 = scmp.eq.s32.totalorder %s36, 0
      %p168 = por %p166, %p167
      %s170 = sadd.s32 %s169, 1
      %p173 = scmp.eq.s32.totalorder %s30, 2
      %p174 = scmp.ne.s32.totalorder %s169, %s171
      %p175 = scmp.eq.s32.totalorder %s30, 0
      %p176 = por %p174, %p175
      %p177 = scmp.ne.s32.totalorder %s169, %s171
      %p178 = scmp.eq.s32.totalorder %s35, 2
      %p179 = por %p177, %p178
      %p180 = scmp.ne.s32.totalorder %s171, %s172
      %p181 = scmp.eq.s32.totalorder %s35, 0
      %p182 = por %p180, %p181
      %p183 = scmp.ne.s32.totalorder %s171, %s172
      %p184 = scmp.eq.s32.totalorder %s36, 2
      %p185 = por %p183, %p184
      %p187 = scmp.ne.s32.totalorder %s172, %s186
      %p188 = scmp.eq.s32.totalorder %s36, 0
      %p189 = por %p187, %p188
      %s191 = sadd.s32 %s190, 1
      %p194 = scmp.eq.s32.totalorder %s30, 2
      %p195 = scmp.ne.s32.totalorder %s190, %s192
      %p196 = scmp.eq.s32.totalorder %s30, 0
      %p197 = por %p195, %p196
      %p198 = scmp.ne.s32.totalorder %s190, %s192
      %p199 = scmp.eq.s32.totalorder %s35, 2
      %p200 = por %p198, %p199
      %p201 = scmp.ne.s32.totalorder %s192, %s193
      %p202 = scmp.eq.s32.totalorder %s35, 0
      %p203 = por %p201, %p202
      %p204 = scmp.ne.s32.totalorder %s192, %s193
      %p205 = scmp.eq.s32.totalorder %s36, 2
      %p206 = por %p204, %p205
      %p208 = scmp.ne.s32.totalorder %s193, %s207
      %p209 = scmp.eq.s32.totalorder %s36, 0
      %p210 = por %p208, %p209
      %s211 = ssub.s32 %s30, %s37
      %p212 = scmp.eq.s32.totalorder %s211, 0
      %s214 = sadd.s32 %s213, 1
      %s215 = scalar_select %p212, %s213, %s214
      %p218 = pneg %p212
      %p219 = scmp.eq.s32.totalorder %s30, 2
      %p220 = por %p218, %p219
      %p221 = scmp.ne.s32.totalorder %s213, %s216
      %p222 = scmp.eq.s32.totalorder %s30, 0
      %p223 = por %p221, %p222
      %p224 = scmp.ne.s32.totalorder %s213, %s216
      %p225 = scmp.eq.s32.totalorder %s35, 2
      %p226 = por %p224, %p225
      %p227 = scmp.ne.s32.totalorder %s216, %s217
      %p228 = scmp.eq.s32.totalorder %s35, 0
      %p229 = por %p227, %p228
      %p230 = scmp.ne.s32.totalorder %s216, %s217
      %p231 = scmp.eq.s32.totalorder %s36, 2
      %p232 = por %p230, %p231
      %p234 = scmp.ne.s32.totalorder %s217, %s233
      %p235 = scmp.eq.s32.totalorder %s36, 0
      %p236 = por %p234, %p235
      %s238 = sadd.s32 %s237, 1
      %p241 = scmp.eq.s32.totalorder %s30, 2
      %p242 = scmp.ne.s32.totalorder %s237, %s239
      %p243 = scmp.eq.s32.totalorder %s30, 0
      %p244 = por %p242, %p243
      %p245 = scmp.ne.s32.totalorder %s237, %s239
      %p246 = scmp.eq.s32.totalorder %s35, 2
      %p247 = por %p245, %p246
      %p248 = scmp.ne.s32.totalorder %s239, %s240
      %p249 = scmp.eq.s32.totalorder %s35, 0
      %p250 = por %p248, %p249
      %p251 = scmp.ne.s32.totalorder %s239, %s240
      %p252 = scmp.eq.s32.totalorder %s36, 2
      %p253 = por %p251, %p252
      %p255 = scmp.ne.s32.totalorder %s240, %s254
      %p256 = scmp.eq.s32.totalorder %s36, 0
      %p257 = por %p255, %p256
      %s259 = sadd.s32 %s258, 1
      %p262 = scmp.eq.s32.totalorder %s30, 2
      %p263 = scmp.ne.s32.totalorder %s258, %s260
      %p264 = scmp.eq.s32.totalorder %s30, 0
      %p265 = por %p263, %p264
      %p266 = scmp.ne.s32.totalorder %s258, %s260
      %p267 = scmp.eq.s32.totalorder %s35, 2
      %p268 = por %p266, %p267
      %p269 = scmp.ne.s32.totalorder %s260, %s261
      %p270 = scmp.eq.s32.totalorder %s35, 0
      %p271 = por %p269, %p270
      %p272 = scmp.ne.s32.totalorder %s260, %s261
      %p273 = scmp.eq.s32.totalorder %s36, 2
      %p274 = por %p272, %p273
      %p276 = scmp.ne.s32.totalorder %s261, %s275
      %p277 = scmp.eq.s32.totalorder %s36, 0
      %p278 = por %p276, %p277
      %s280 = sadd.s32 %s279, 1
      %p283 = scmp.eq.s32.totalorder %s30, 2
      %p284 = scmp.ne.s32.totalorder %s279, %s281
      %p285 = scmp.eq.s32.totalorder %s30, 0
      %p286 = por %p284, %p285
      %p287 = scmp.ne.s32.totalorder %s279, %s281
      %p288 = scmp.eq.s32.totalorder %s35, 2
      %p289 = por %p287, %p288
      %p290 = scmp.ne.s32.totalorder %s281, %s282
      %p291 = scmp.eq.s32.totalorder %s35, 0
      %p292 = por %p290, %p291
      %p293 = scmp.ne.s32.totalorder %s281, %s282
      %p294 = scmp.eq.s32.totalorder %s36, 2
      %p295 = por %p293, %p294
      %p297 = scmp.ne.s32.totalorder %s282, %s296
      %p298 = scmp.eq.s32.totalorder %s36, 0
      %p299 = por %p297, %p298
      %s301 = sadd.s32 %s300, 1
      %p304 = scmp.eq.s32.totalorder %s30, 2
      %p305 = scmp.ne.s32.totalorder %s300, %s302
      %p306 = scmp.eq.s32.totalorder %s30, 0
      %p307 = por %p305, %p306
      %p308 = scmp.ne.s32.totalorder %s300, %s302
      %p309 = scmp.eq.s32.totalorder %s35, 2
      %p310 = por %p308, %p309
      %p311 = scmp.ne.s32.totalorder %s302, %s303
      %p312 = scmp.eq.s32.totalorder %s35, 0
      %p313 = por %p311, %p312
      %p314 = scmp.ne.s32.totalorder %s302, %s303
      %p315 = scmp.eq.s32.totalorder %s36, 2
      %p316 = por %p314, %p315
      %p318 = scmp.ne.s32.totalorder %s303, %s317
      %p319 = scmp.eq.s32.totalorder %s36, 0
      %p320 = por %p318, %p319
      %p321 = scmp.le.s32.totalorder 1, %s30
      %p322 = scmp.lt.s32.totalorder %s30, 4
      %p323 = pnand %p321, %p322
      %p324 = pneg %p323
      // Predicated region
      $region9: #{tpu_custom_call.1} parent=5 // pred_check
        _
      $region10: #{tpu_custom_call.1} parent=5 // pred_check_branch
        %326 = sbr.rel (%p323) target = $region12
      $region11: #{tpu_custom_call.1} parent=5 // pred_region
        %s327 = ssub.s32 %s30, 1
        // Predicated region
        $region13: #{tpu_custom_call.1} parent=11 // pred_check
          %p328 = pneg %p77
        $region14: #{tpu_custom_call.1} parent=11 // pred_check_branch
          %330 = sbr.rel (%p328) target = $region16
        $region15: #{tpu_custom_call.1} parent=11 // pred_region
          %s332 = ssub.s32 128, 128
          %333 = vsyncadd [#allocation6], %s332
          %s335 = sshll.u32 [#allocation5], 4
          %s336 = int_to_ptr.vmem [resolvable:$true] %s335
          %338 = dma.hbm_to_vmem [thread:$0]  %s1, 128, %s336, [#allocation6]
        $region16: #{tpu_custom_call.1} parent=11 // pred_fallthru
          _
        // Predicated region
        $region17: #{tpu_custom_call.1} parent=11 // pred_check
          %p339 = pneg %p98
        $region18: #{tpu_custom_call.1} parent=11 // pred_check_branch
          %341 = sbr.rel (%p339) target = $region20
        $region19: #{tpu_custom_call.1} parent=11 // pred_region
          %s343 = ssub.s32 128, 128
          %344 = vsyncadd [#allocation6], %s343
          %s346 = sshll.u32 [#allocation7], 4
          %s347 = int_to_ptr.vmem [resolvable:$true] %s346
          %349 = dma.hbm_to_vmem [thread:$0]  %s2, 128, %s347, [#allocation6]
        $region20: #{tpu_custom_call.1} parent=11 // pred_fallthru
          _
        // Predicated region
        $region21: #{tpu_custom_call.1} parent=11 // pred_check
          %p350 = pneg %p119
        $region22: #{tpu_custom_call.1} parent=11 // pred_check_branch
          %352 = sbr.rel (%p350) target = $region24
        $region23: #{tpu_custom_call.1} parent=11 // pred_region
          %s354 = ssub.s32 128, 128
          %355 = vsyncadd [#allocation9], %s354
          %s357 = sshll.u32 [#allocation8], 4
          %s358 = int_to_ptr.vmem [resolvable:$true] %s357
          %360 = dma.hbm_to_vmem [thread:$0]  %s3, 128, %s358, [#allocation9]
        $region24: #{tpu_custom_call.1} parent=11 // pred_fallthru
          _
        // Predicated region
        $region25: #{tpu_custom_call.1} parent=11 // pred_check
          %p361 = pneg %p140
        $region26: #{tpu_custom_call.1} parent=11 // pred_check_branch
          %363 = sbr.rel (%p361) target = $region28
        $region27: #{tpu_custom_call.1} parent=11 // pred_region
          %s365 = ssub.s32 128, 128
          %366 = vsyncadd [#allocation9], %s365
          %s368 = sshll.u32 [#allocation10], 4
          %s369 = int_to_ptr.vmem [resolvable:$true] %s368
          %371 = dma.hbm_to_vmem [thread:$0]  %s4, 128, %s369, [#allocation9]
        $region28: #{tpu_custom_call.1} parent=11 // pred_fallthru
          _
        // Predicated region
        $region29: #{tpu_custom_call.1} parent=11 // pred_check
          %p372 = pneg %p161
        $region30: #{tpu_custom_call.1} parent=11 // pred_check_branch
          %374 = sbr.rel (%p372) target = $region32
        $region31: #{tpu_custom_call.1} parent=11 // pred_region
          %s376 = ssub.s32 4096, 4096
          %377 = vsyncadd [#allocation12], %s376
          %s378 = sshll.u32 [#allocation11], 4
          %s379 = int_to_ptr.vmem [resolvable:$true] %s378
          %384 = dma.hbm_to_vmem [thread:$0]  %s5, 4096, %s379, [#allocation12], 256, 256, 16
        $region32: #{tpu_custom_call.1} parent=11 // pred_fallthru
          _
        // Predicated region
        $region33: #{tpu_custom_call.1} parent=11 // pred_check
          %p385 = pneg %p182
        $region34: #{tpu_custom_call.1} parent=11 // pred_check_branch
          %387 = sbr.rel (%p385) target = $region36
        $region35: #{tpu_custom_call.1} parent=11 // pred_region
          %s389 = ssub.s32 8192, 8192
          %390 = vsyncadd [#allocation12], %s389
          %s391 = sshll.u32 [#allocation13], 4
          %s392 = int_to_ptr.vmem [resolvable:$true] %s391
          %397 = dma.hbm_to_vmem [thread:$0]  %s6, 8192, %s392, [#allocation12], 256, 256, 16
        $region36: #{tpu_custom_call.1} parent=11 // pred_fallthru
          _
        // Predicated region
        $region37: #{tpu_custom_call.1} parent=11 // pred_check
          %p398 = pneg %p203
        $region38: #{tpu_custom_call.1} parent=11 // pred_check_branch
          %400 = sbr.rel (%p398) target = $region40
        $region39: #{tpu_custom_call.1} parent=11 // pred_region
          _
        $region40: #{tpu_custom_call.1} parent=11 // pred_fallthru
          _
      $region12: #{tpu_custom_call.1} parent=5 // pred_fallthru
        _
      %p401 = scmp.lt.s32.totalorder %s30, 3
      // Predicated region
      $region41: #{tpu_custom_call.1} parent=5 // pred_check
        %p402 = pneg %p401
      $region42: #{tpu_custom_call.1} parent=5 // pred_check_branch
        %404 = sbr.rel (%p402) target = $region44
      $region43: #{tpu_custom_call.1} parent=5 // pred_region
        // Predicated region
        $region45: #{tpu_custom_call.1} parent=43 // pred_check
          %p405 = pneg %p50
        $region46: #{tpu_custom_call.1} parent=43 // pred_check_branch
          %407 = sbr.rel (%p405) target = $region48
        $region47: #{tpu_custom_call.1} parent=43 // pred_region
          %s408 = sand.u32 %s40, 1
          %s409 = scalar_lea.sflag [#allocation3], %s408
          %s410 = sand.u32 %s40, 1
          %s411 = smul.addr %s410, 128
          %s412 = scalar_lea.vmem [#allocation2], %s411
          %s413 = smul.u32 4, %s30
          %s415 = ssub.s32 2048, 2048
          %416 = vsyncadd %s409, %s415
          %s417 = smul.addr %s413, 4
          %s418 = smul.addr %s417, 128
          %s419 = scalar_lea.hbm %s0, %s418
          %s420 = sshll.u32 %s412, 4
          %s421 = int_to_ptr.vmem [resolvable:$true] %s420
          %426 = dma.hbm_to_vmem [thread:$0]  %s419, 2048, %s421, %s409, 512, 512, 32
        $region48: #{tpu_custom_call.1} parent=43 // pred_fallthru
          _
      $region44: #{tpu_custom_call.1} parent=5 // pred_fallthru
        _
      %p427 = scmp.le.s32.totalorder 1, %s30
      %p428 = scmp.lt.s32.totalorder %s30, 4
      %p429 = pnand %p427, %p428
      %p430 = pneg %p429
      // Predicated region
      $region49: #{tpu_custom_call.1} parent=5 // pred_check
        _
      $region50: #{tpu_custom_call.1} parent=5 // pred_check_branch
        %432 = sbr.rel (%p429) target = $region52
      $region51: #{tpu_custom_call.1} parent=5 // pred_region
        %s433 = ssub.s32 %s30, 1
        %s434 = sand.u32 %s43, 1
        %s435 = scalar_lea.sflag [#allocation3], %s434
        %s436 = sand.u32 %s43, 1
        %s437 = smul.addr %s436, 128
        %s438 = scalar_lea.vmem [#allocation2], %s437
        // Predicated region
        $region53: #{tpu_custom_call.1} parent=51 // pred_check
          %p439 = pneg %p56
        $region54: #{tpu_custom_call.1} parent=51 // pred_check_branch
          %441 = sbr.rel (%p439) target = $region56
        $region55: #{tpu_custom_call.1} parent=51 // pred_region
          %442 = dma.done %s435, 2048
        $region56: #{tpu_custom_call.1} parent=51 // pred_fallthru
          _
        // Predicated region
        $region57: #{tpu_custom_call.1} parent=51 // pred_check
          %p443 = pneg %p77
        $region58: #{tpu_custom_call.1} parent=51 // pred_check_branch
          %445 = sbr.rel (%p443) target = $region60
        $region59: #{tpu_custom_call.1} parent=51 // pred_region
          %446 = dma.done [#allocation6], 128
        $region60: #{tpu_custom_call.1} parent=51 // pred_fallthru
          _
        // Predicated region
        $region61: #{tpu_custom_call.1} parent=51 // pred_check
          %p447 = pneg %p98
        $region62: #{tpu_custom_call.1} parent=51 // pred_check_branch
          %449 = sbr.rel (%p447) target = $region64
        $region63: #{tpu_custom_call.1} parent=51 // pred_region
          %450 = dma.done [#allocation6], 128
        $region64: #{tpu_custom_call.1} parent=51 // pred_fallthru
          _
        // Predicated region
        $region65: #{tpu_custom_call.1} parent=51 // pred_check
          %p451 = pneg %p119
        $region66: #{tpu_custom_call.1} parent=51 // pred_check_branch
          %453 = sbr.rel (%p451) target = $region68
        $region67: #{tpu_custom_call.1} parent=51 // pred_region
          %454 = dma.done [#allocation9], 128
        $region68: #{tpu_custom_call.1} parent=51 // pred_fallthru
          _
        // Predicated region
        $region69: #{tpu_custom_call.1} parent=51 // pred_check
          %p455 = pneg %p140
        $region70: #{tpu_custom_call.1} parent=51 // pred_check_branch
          %457 = sbr.rel (%p455) target = $region72
        $region71: #{tpu_custom_call.1} parent=51 // pred_region
          %458 = dma.done [#allocation9], 128
        $region72: #{tpu_custom_call.1} parent=51 // pred_fallthru
          _
        // Predicated region
        $region73: #{tpu_custom_call.1} parent=51 // pred_check
          %p459 = pneg %p161
        $region74: #{tpu_custom_call.1} parent=51 // pred_check_branch
          %461 = sbr.rel (%p459) target = $region76
        $region75: #{tpu_custom_call.1} parent=51 // pred_region
          %462 = dma.done [#allocation12], 4096
        $region76: #{tpu_custom_call.1} parent=51 // pred_fallthru
          _
        // Predicated region
        $region77: #{tpu_custom_call.1} parent=51 // pred_check
          %p463 = pneg %p182
        $region78: #{tpu_custom_call.1} parent=51 // pred_check_branch
          %465 = sbr.rel (%p463) target = $region80
        $region79: #{tpu_custom_call.1} parent=51 // pred_region
          %466 = dma.done [#allocation12], 8192
        $region80: #{tpu_custom_call.1} parent=51 // pred_fallthru
          _
        %s467 = sand.u32 %s43, 1
        %s468 = scalar_lea.sflag [#allocation3], %s467
        %s469 = sand.u32 %s43, 1
        %s470 = smul.addr %s469, 128
        %s471 = scalar_lea.vmem [#allocation2], %s470
        %p472 = pneg %p56
        %p473 = pneg %p53
        %p474 = pneg %p77
        %p475 = pneg %p74
        %p476 = pneg %p98
        %p477 = pneg %p95
        %p478 = pneg %p119
        %p479 = pneg %p116
        %p480 = pneg %p140
        %p481 = pneg %p137
        %p482 = pneg %p161
        %p483 = pneg %p158
        %p484 = pneg %p182
        %p485 = pneg %p179
        %p486 = pneg %p203
        %p487 = pneg %p200
        %p488 = pneg %p229
        %p489 = pneg %p226
        %s490 = sand.u32 %s216, 1
        %s491 = scalar_lea.sflag [#allocation4], %s490
        %s492 = sand.u32 %s216, 1
        %s493 = smul.addr %s492, 32
        %s494 = scalar_lea.vmem [#allocation14], %s493
        %p495 = pneg %p250
        %p496 = pneg %p247
        %p497 = pneg %p271
        %p498 = pneg %p268
        %p499 = pneg %p292
        %p500 = pneg %p289
        %p501 = pneg %p313
        %p502 = pneg %p310
        %s503 = smul.u32 4, %s35
        %s504 = smul.u32 4, %s35
        %p506 = scmp.eq.s32.totalorder %s35, 0
        // Predicated region
        $region81: #{tpu_custom_call.1} parent=51 // pred_check
          %p507 = pneg %p506
        $region82: #{tpu_custom_call.1} parent=51 // pred_check_branch
          %509 = sbr.rel (%p507) target = $region84
        $region83: #{tpu_custom_call.1} parent=51 // pred_region
          %v510 = vld [vmem:[#allocation5] sm:$0xff]
          %511 = vst [vmem:[#allocation15] sm:$0xff] %v510
          %v512 = vld [vmem:[#allocation7] sm:$0xff]
          %513 = vst [vmem:[#allocation17] sm:$0xff] %v512
          %v514 = vld [vmem:[#allocation8] sm:$0xff]
          %515 = vst [vmem:[#allocation18] sm:$0xff] %v514
          %v516 = vld [vmem:[#allocation10] sm:$0xff]
          %517 = vst [vmem:[#allocation20] sm:$0xff] %v516
        $region84: #{tpu_custom_call.1} parent=51 // pred_fallthru
          _
        %v518 = vld [vmem:[#allocation15] sm:$0xff]
        %v519 = vld [vmem:[#allocation17] sm:$0xff]
        %v520 = vld [vmem:[#allocation18] sm:$0xff]
        %v521 = vld [vmem:[#allocation20] sm:$0xff]
        %v522 = vld [vmem:[%s438] sm:$0xff]
        %v523 = vld [vmem:[%s438 + $0x8] sm:$0xff]
        %v524 = vld [vmem:[%s438 + $0x10] sm:$0xff]
        %v525 = vld [vmem:[%s438 + $0x18] sm:$0xff]
        %v526 = vpack.c.bf16 %v518, %v518
        %v527 = vld [vmem:[#allocation11] sm:$0xff]
        %v528 = vld [vmem:[#allocation11 + $0x8] sm:$0xff]
        %v529 = vld [vmem:[#allocation11 + $0x10] sm:$0xff]
        %v530 = vld [vmem:[#allocation11 + $0x18] sm:$0xff]
        %v531 = vld [vmem:[#allocation11 + $0x20] sm:$0xff]
        %v532 = vld [vmem:[#allocation11 + $0x28] sm:$0xff]
        %v533 = vld [vmem:[#allocation11 + $0x30] sm:$0xff]
        %v534 = vld [vmem:[#allocation11 + $0x38] sm:$0xff]
        %v535 = vld [vmem:[#allocation11 + $0x40] sm:$0xff]
        %v536 = vld [vmem:[#allocation11 + $0x48] sm:$0xff]
        %v537 = vld [vmem:[#allocation11 + $0x50] sm:$0xff]
        %v538 = vld [vmem:[#allocation11 + $0x58] sm:$0xff]
        %v539 = vld [vmem:[#allocation11 + $0x60] sm:$0xff]
        %v540 = vld [vmem:[#allocation11 + $0x68] sm:$0xff]
        %v541 = vld [vmem:[#allocation11 + $0x70] sm:$0xff]
        %v542 = vld [vmem:[#allocation11 + $0x78] sm:$0xff]
        %v543 = vld [vmem:[#allocation11 + $0x80] sm:$0xff]
        %v544 = vld [vmem:[#allocation11 + $0x88] sm:$0xff]
        %v545 = vld [vmem:[#allocation11 + $0x90] sm:$0xff]
        %v546 = vld [vmem:[#allocation11 + $0x98] sm:$0xff]
        %v547 = vld [vmem:[#allocation11 + $0xa0] sm:$0xff]
        %v548 = vld [vmem:[#allocation11 + $0xa8] sm:$0xff]
        %v549 = vld [vmem:[#allocation11 + $0xb0] sm:$0xff]
        %v550 = vld [vmem:[#allocation11 + $0xb8] sm:$0xff]
        %v551 = vld [vmem:[#allocation11 + $0xc0] sm:$0xff]
        %v552 = vld [vmem:[#allocation11 + $0xc8] sm:$0xff]
        %v553 = vld [vmem:[#allocation11 + $0xd0] sm:$0xff]
        %v554 = vld [vmem:[#allocation11 + $0xd8] sm:$0xff]
        %v555 = vld [vmem:[#allocation11 + $0xe0] sm:$0xff]
        %v556 = vld [vmem:[#allocation11 + $0xe8] sm:$0xff]
        %v557 = vld [vmem:[#allocation11 + $0xf0] sm:$0xff]
        %v558 = vld [vmem:[#allocation11 + $0xf8] sm:$0xff]
        %v591 = vunpack.c.l.b16 %v527
        %v592 = vunpack.c.h.b16 %v527
        %v593 = vunpack.c.l.b16 %v528
        %v594 = vunpack.c.h.b16 %v528
        %v595 = vunpack.c.l.b16 %v529
        %v596 = vunpack.c.h.b16 %v529
        %v597 = vunpack.c.l.b16 %v530
        %v598 = vunpack.c.h.b16 %v530
        %v599 = vunpack.c.l.b16 %v531
        %v600 = vunpack.c.h.b16 %v531
        %v601 = vunpack.c.l.b16 %v532
        %v602 = vunpack.c.h.b16 %v532
        %v603 = vunpack.c.l.b16 %v533
        %v604 = vunpack.c.h.b16 %v533
        %v605 = vunpack.c.l.b16 %v534
        %v606 = vunpack.c.h.b16 %v534
        %v607 = vunpack.c.l.b16 %v535
        %v608 = vunpack.c.h.b16 %v535
        %v609 = vunpack.c.l.b16 %v536
        %v610 = vunpack.c.h.b16 %v536
        %v611 = vunpack.c.l.b16 %v537
        %v612 = vunpack.c.h.b16 %v537
        %v613 = vunpack.c.l.b16 %v538
        %v614 = vunpack.c.h.b16 %v538
        %v615 = vunpack.c.l.b16 %v539
        %v616 = vunpack.c.h.b16 %v539
        %v617 = vunpack.c.l.b16 %v540
        %v618 = vunpack.c.h.b16 %v540
        %v619 = vunpack.c.l.b16 %v541
        %v620 = vunpack.c.h.b16 %v541
        %v621 = vunpack.c.l.b16 %v542
        %v622 = vunpack.c.h.b16 %v542
        %v623 = vunpack.c.l.b16 %v543
        %v624 = vunpack.c.h.b16 %v543
        %v625 = vunpack.c.l.b16 %v544
        %v626 = vunpack.c.h.b16 %v544
        %v627 = vunpack.c.l.b16 %v545
        %v628 = vunpack.c.h.b16 %v545
        %v629 = vunpack.c.l.b16 %v546
        %v630 = vunpack.c.h.b16 %v546
        %v631 = vunpack.c.l.b16 %v547
        %v632 = vunpack.c.h.b16 %v547
        %v633 = vunpack.c.l.b16 %v548
        %v634 = vunpack.c.h.b16 %v548
        %v635 = vunpack.c.l.b16 %v549
        %v636 = vunpack.c.h.b16 %v549
        %v637 = vunpack.c.l.b16 %v550
        %v638 = vunpack.c.h.b16 %v550
        %v639 = vunpack.c.l.b16 %v551
        %v640 = vunpack.c.h.b16 %v551
        %v641 = vunpack.c.l.b16 %v552
        %v642 = vunpack.c.h.b16 %v552
        %v643 = vunpack.c.l.b16 %v553
        %v644 = vunpack.c.h.b16 %v553
        %v645 = vunpack.c.l.b16 %v554
        %v646 = vunpack.c.h.b16 %v554
        %v647 = vunpack.c.l.b16 %v555
        %v648 = vunpack.c.h.b16 %v555
        %v649 = vunpack.c.l.b16 %v556
        %v650 = vunpack.c.h.b16 %v556
        %v651 = vunpack.c.l.b16 %v557
        %v652 = vunpack.c.h.b16 %v557
        %v653 = vunpack.c.l.b16 %v558
        %v654 = vunpack.c.h.b16 %v558
        %v655 = vpack.c.b16 %v595, %v591
        %v656 = vpack.c.b16 %v596, %v592
        %v657 = vpack.c.b16 %v597, %v593
        %v658 = vpack.c.b16 %v598, %v594
        %v659 = vpack.c.b16 %v603, %v599
        %v660 = vpack.c.b16 %v604, %v600
        %v661 = vpack.c.b16 %v605, %v601
        %v662 = vpack.c.b16 %v606, %v602
        %v663 = vpack.c.b16 %v611, %v607
        %v664 = vpack.c.b16 %v612, %v608
        %v665 = vpack.c.b16 %v613, %v609
        %v666 = vpack.c.b16 %v614, %v610
        %v667 = vpack.c.b16 %v619, %v615
        %v668 = vpack.c.b16 %v620, %v616
        %v669 = vpack.c.b16 %v621, %v617
        %v670 = vpack.c.b16 %v622, %v618
        %v671 = vpack.c.b16 %v627, %v623
        %v672 = vpack.c.b16 %v628, %v624
        %v673 = vpack.c.b16 %v629, %v625
        %v674 = vpack.c.b16 %v630, %v626
        %v675 = vpack.c.b16 %v635, %v631
        %v676 = vpack.c.b16 %v636, %v632
        %v677 = vpack.c.b16 %v637, %v633
        %v678 = vpack.c.b16 %v638, %v634
        %v679 = vpack.c.b16 %v643, %v639
        %v680 = vpack.c.b16 %v644, %v640
        %v681 = vpack.c.b16 %v645, %v641
        %v682 = vpack.c.b16 %v646, %v642
        %v683 = vpack.c.b16 %v651, %v647
        %v684 = vpack.c.b16 %v652, %v648
        %v685 = vpack.c.b16 %v653, %v649
        %v686 = vpack.c.b16 %v654, %v650
        %719 = vmatprep.subr.bf16.mxu0 %v684
        %720 = vmatpush1.bf16.msra.mxu0 %v683
        %721 = vmatprep.subr.bf16.mxu0 %v680
        %722 = vmatpush1.bf16.msra.mxu0 %v679
        %723 = vmatprep.subr.bf16.mxu0 %v676
        %724 = vmatpush1.bf16.msra.mxu0 %v675
        %725 = vmatprep.subr.bf16.mxu0 %v672
        %726 = vmatpush1.bf16.msra.mxu0 %v671
        %727 = vmatprep.subr.bf16.mxu0 %v668
        %728 = vmatpush1.bf16.msra.mxu0 %v667
        %729 = vmatprep.subr.bf16.mxu0 %v664
        %730 = vmatpush1.bf16.msra.mxu0 %v663
        %731 = vmatprep.subr.bf16.mxu0 %v660
        %732 = vmatpush1.bf16.msra.mxu0 %v659
        %733 = vmatprep.subr.bf16.mxu0 %v656
        %734 = vmatpush1.bf16.msra.mxu0 %v655
        %735 = vmatprep.subr.bf16.mxu0 0
        %736 = vmatpush2.bf16.msra.mxu0 0
        %737 = vmatprep.subr.bf16.mxu0 0
        %738 = vmatpush2.bf16.msra.mxu0 0
        %739 = vmatprep.subr.bf16.mxu0 0
        %740 = vmatpush2.bf16.msra.mxu0 0
        %741 = vmatprep.subr.bf16.mxu0 0
        %742 = vmatpush2.bf16.msra.mxu0 0
        %743 = vmatprep.subr.bf16.mxu0 0
        %744 = vmatpush2.bf16.msra.mxu0 0
        %745 = vmatprep.subr.bf16.mxu0 0
        %746 = vmatpush2.bf16.msra.mxu0 0
        %747 = vmatprep.subr.bf16.mxu0 0
        %748 = vmatpush2.bf16.msra.mxu0 0
        %749 = vmatprep.subr.bf16.mxu0 0
        %750 = vmatpush2.bf16.msra.mxu0 0
        %751 = vmatprep.mubr.bf16.mxu0 0
        %752 = vmatmul.mubr.bf16.gmra.mxu0 %v526
        %v753 = vpop.f32.mrf.mxu0
        %v754 = vadd.f32 0.0, %v753
        %v755 = vpop.f32.mrf.mxu0
        %v756 = vadd.f32 0.0, %v755
        %v757 = vpop.f32.mrf.mxu0
        %v758 = vpop.f32.mrf.mxu0
        %759 = vdwg.mxu0
        %760 = vmatprep.subr.bf16.mxu0 %v686
        %761 = vmatpush1.bf16.msra.mxu0 %v685
        %762 = vmatprep.subr.bf16.mxu0 %v682
        %763 = vmatpush1.bf16.msra.mxu0 %v681
        %764 = vmatprep.subr.bf16.mxu0 %v678
        %765 = vmatpush1.bf16.msra.mxu0 %v677
        %766 = vmatprep.subr.bf16.mxu0 %v674
        %767 = vmatpush1.bf16.msra.mxu0 %v673
        %768 = vmatprep.subr.bf16.mxu0 %v670
        %769 = vmatpush1.bf16.msra.mxu0 %v669
        %770 = vmatprep.subr.bf16.mxu0 %v666
        %771 = vmatpush1.bf16.msra.mxu0 %v665
        %772 = vmatprep.subr.bf16.mxu0 %v662
        %773 = vmatpush1.bf16.msra.mxu0 %v661
        %774 = vmatprep.subr.bf16.mxu0 %v658
        %775 = vmatpush1.bf16.msra.mxu0 %v657
        %776 = vmatprep.subr.bf16.mxu0 0
        %777 = vmatpush2.bf16.msra.mxu0 0
        %778 = vmatprep.subr.bf16.mxu0 0
        %779 = vmatpush2.bf16.msra.mxu0 0
        %780 = vmatprep.subr.bf16.mxu0 0
        %781 = vmatpush2.bf16.msra.mxu0 0
        %782 = vmatprep.subr.bf16.mxu0 0
        %783 = vmatpush2.bf16.msra.mxu0 0
        %784 = vmatprep.subr.bf16.mxu0 0
        %785 = vmatpush2.bf16.msra.mxu0 0
        %786 = vmatprep.subr.bf16.mxu0 0
        %787 = vmatpush2.bf16.msra.mxu0 0
        %788 = vmatprep.subr.bf16.mxu0 0
        %789 = vmatpush2.bf16.msra.mxu0 0
        %790 = vmatprep.subr.bf16.mxu0 0
        %791 = vmatpush2.bf16.msra.mxu0 0
        %792 = vmatprep.mubr.bf16.mxu0 0
        %793 = vmatmul.mubr.bf16.gmra.mxu0 %v526
        %v794 = vpop.f32.mrf.mxu0
        %v795 = vadd.f32 0.0, %v794
        %v796 = vpop.f32.mrf.mxu0
        %v797 = vadd.f32 0.0, %v796
        %v798 = vpop.f32.mrf.mxu0
        %v799 = vpop.f32.mrf.mxu0
        %800 = vdwg.mxu0
        %v801 = vadd.f32 %v522, %v754
        %v802 = vadd.f32 %v523, %v756
        %v803 = vadd.f32 %v524, %v795
        %v804 = vadd.f32 %v525, %v797
        %v805 = vxor.u32 %v801, 2147483648
        %v806 = vxor.u32 %v802, 2147483648
        %v807 = vxor.u32 %v803, 2147483648
        %v808 = vmul.f32 %v805, 1.442695
        %v809 = vpow.pop %v808
        %v810 = vmul.f32 %v806, 1.442695
        %v811 = vpow.pop %v810
        %v812 = vmul.f32 %v807, 1.442695
        %v813 = vpow.pop %v812
        %v814 = vadd.f32 %v809, 1.0
        %v815 = vadd.f32 %v811, 1.0
        %v816 = vadd.f32 %v813, 1.0
        %v817 = vrcp.pop %v814
        %v818 = vmul.f32 1.0, %v817
        %v819 = vrcp.pop %v815
        %v820 = vmul.f32 1.0, %v819
        %v821 = vrcp.pop %v816
        %v822 = vmul.f32 1.0, %v821
        %v823 = vtanh.pop %v804
        %v824 = vmul.f32 %v820, %v519
        %v825 = vmul.f32 %v818, %v823
        %v826 = vadd.f32 %v824, %v825
        %v827 = vtanh.pop %v826
        %v828 = vmul.f32 %v822, %v827
        %v829 = vpack.c.bf16 %v828, %v828
        %v830 = vpack.c.bf16 %v520, %v520
        %v831 = vld [vmem:[#allocation13] sm:$0xff]
        %v832 = vld [vmem:[#allocation13 + $0x8] sm:$0xff]
        %v833 = vld [vmem:[#allocation13 + $0x10] sm:$0xff]
        %v834 = vld [vmem:[#allocation13 + $0x18] sm:$0xff]
        %v835 = vld [vmem:[#allocation13 + $0x20] sm:$0xff]
        %v836 = vld [vmem:[#allocation13 + $0x28] sm:$0xff]
        %v837 = vld [vmem:[#allocation13 + $0x30] sm:$0xff]
        %v838 = vld [vmem:[#allocation13 + $0x38] sm:$0xff]
        %v839 = vld [vmem:[#allocation13 + $0x40] sm:$0xff]
        %v840 = vld [vmem:[#allocation13 + $0x48] sm:$0xff]
        %v841 = vld [vmem:[#allocation13 + $0x50] sm:$0xff]
        %v842 = vld [vmem:[#allocation13 + $0x58] sm:$0xff]
        %v843 = vld [vmem:[#allocation13 + $0x60] sm:$0xff]
        %v844 = vld [vmem:[#allocation13 + $0x68] sm:$0xff]
        %v845 = vld [vmem:[#allocation13 + $0x70] sm:$0xff]
        %v846 = vld [vmem:[#allocation13 + $0x78] sm:$0xff]
        %v847 = vld [vmem:[#allocation13 + $0x80] sm:$0xff]
        %v848 = vld [vmem:[#allocation13 + $0x88] sm:$0xff]
        %v849 = vld [vmem:[#allocation13 + $0x90] sm:$0xff]
        %v850 = vld [vmem:[#allocation13 + $0x98] sm:$0xff]
        %v851 = vld [vmem:[#allocation13 + $0xa0] sm:$0xff]
        %v852 = vld [vmem:[#allocation13 + $0xa8] sm:$0xff]
        %v853 = vld [vmem:[#allocation13 + $0xb0] sm:$0xff]
        %v854 = vld [vmem:[#allocation13 + $0xb8] sm:$0xff]
        %v855 = vld [vmem:[#allocation13 + $0xc0] sm:$0xff]
        %v856 = vld [vmem:[#allocation13 + $0xc8] sm:$0xff]
        %v857 = vld [vmem:[#allocation13 + $0xd0] sm:$0xff]
        %v858 = vld [vmem:[#allocation13 + $0xd8] sm:$0xff]
        %v859 = vld [vmem:[#allocation13 + $0xe0] sm:$0xff]
        %v860 = vld [vmem:[#allocation13 + $0xe8] sm:$0xff]
        %v861 = vld [vmem:[#allocation13 + $0xf0] sm:$0xff]
        %v862 = vld [vmem:[#allocation13 + $0xf8] sm:$0xff]
        %v863 = vld [vmem:[#allocation13 + $0x100] sm:$0xff]
        %v864 = vld [vmem:[#allocation13 + $0x108] sm:$0xff]
        %v865 = vld [vmem:[#allocation13 + $0x110] sm:$0xff]
        %v866 = vld [vmem:[#allocation13 + $0x118] sm:$0xff]
        %v867 = vld [vmem:[#allocation13 + $0x120] sm:$0xff]
        %v868 = vld [vmem:[#allocation13 + $0x128] sm:$0xff]
        %v869 = vld [vmem:[#allocation13 + $0x130] sm:$0xff]
        %v870 = vld [vmem:[#allocation13 + $0x138] sm:$0xff]
        %v871 = vld [vmem:[#allocation13 + $0x140] sm:$0xff]
        %v872 = vld [vmem:[#allocation13 + $0x148] sm:$0xff]
        %v873 = vld [vmem:[#allocation13 + $0x150] sm:$0xff]
        %v874 = vld [vmem:[#allocation13 + $0x158] sm:$0xff]
        %v875 = vld [vmem:[#allocation13 + $0x160] sm:$0xff]
        %v876 = vld [vmem:[#allocation13 + $0x168] sm:$0xff]
        %v877 = vld [vmem:[#allocation13 + $0x170] sm:$0xff]
        %v878 = vld [vmem:[#allocation13 + $0x178] sm:$0xff]
        %v879 = vld [vmem:[#allocation13 + $0x180] sm:$0xff]
        %v880 = vld [vmem:[#allocation13 + $0x188] sm:$0xff]
        %v881 = vld [vmem:[#allocation13 + $0x190] sm:$0xff]
        %v882 = vld [vmem:[#allocation13 + $0x198] sm:$0xff]
        %v883 = vld [vmem:[#allocation13 + $0x1a0] sm:$0xff]
        %v884 = vld [vmem:[#allocation13 + $0x1a8] sm:$0xff]
        %v885 = vld [vmem:[#allocation13 + $0x1b0] sm:$0xff]
        %v886 = vld [vmem:[#allocation13 + $0x1b8] sm:$0xff]
        %v887 = vld [vmem:[#allocation13 + $0x1c0] sm:$0xff]
        %v888 = vld [vmem:[#allocation13 + $0x1c8] sm:$0xff]
        %v889 = vld [vmem:[#allocation13 + $0x1d0] sm:$0xff]
        %v890 = vld [vmem:[#allocation13 + $0x1d8] sm:$0xff]
        %v891 = vld [vmem:[#allocation13 + $0x1e0] sm:$0xff]
        %v892 = vld [vmem:[#allocation13 + $0x1e8] sm:$0xff]
        %v893 = vld [vmem:[#allocation13 + $0x1f0] sm:$0xff]
        %v894 = vld [vmem:[#allocation13 + $0x1f8] sm:$0xff]
        %v895 = vld [vmem:[%s7] sm:$0xf]
        %v897 = vlaneseq
        %v898 = vshrl.u32 %v897, 7
        %v899 = vsub.s32 0, %v898
        %v900 = vrot.slane %v895, %v899
        %v901 = vlaneseq
        %v902 = vshrl.u32 %v901, 7
        %v903 = vsub.s32 1, %v902
        %v904 = vrot.slane %v895, %v903
        %v905 = vlaneseq
        %v906 = vshrl.u32 %v905, 7
        %v907 = vsub.s32 2, %v906
        %v908 = vrot.slane %v895, %v907
        %v909 = vlaneseq
        %v910 = vshrl.u32 %v909, 7
        %v911 = vsub.s32 3, %v910
        %v912 = vrot.slane %v895, %v911
        %v981 = vunpack.c.l.b16 %v831
        %v982 = vunpack.c.h.b16 %v831
        %v983 = vunpack.c.l.b16 %v832
        %v984 = vunpack.c.h.b16 %v832
        %v985 = vunpack.c.l.b16 %v833
        %v986 = vunpack.c.h.b16 %v833
        %v987 = vunpack.c.l.b16 %v834
        %v988 = vunpack.c.h.b16 %v834
        %v989 = vunpack.c.l.b16 %v835
        %v990 = vunpack.c.h.b16 %v835
        %v991 = vunpack.c.l.b16 %v836
        %v992 = vunpack.c.h.b16 %v836
        %v993 = vunpack.c.l.b16 %v837
        %v994 = vunpack.c.h.b16 %v837
        %v995 = vunpack.c.l.b16 %v838
        %v996 = vunpack.c.h.b16 %v838
        %v997 = vunpack.c.l.b16 %v839
        %v998 = vunpack.c.h.b16 %v839
        %v999 = vunpack.c.l.b16 %v840
        %v1000 = vunpack.c.h.b16 %v840
        %v1001 = vunpack.c.l.b16 %v841
        %v1002 = vunpack.c.h.b16 %v841
        %v1003 = vunpack.c.l.b16 %v842
        %v1004 = vunpack.c.h.b16 %v842
        %v1005 = vunpack.c.l.b16 %v843
        %v1006 = vunpack.c.h.b16 %v843
        %v1007 = vunpack.c.l.b16 %v844
        %v1008 = vunpack.c.h.b16 %v844
        %v1009 = vunpack.c.l.b16 %v845
        %v1010 = vunpack.c.h.b16 %v845
        %v1011 = vunpack.c.l.b16 %v846
        %v1012 = vunpack.c.h.b16 %v846
        %v1013 = vunpack.c.l.b16 %v847
        %v1014 = vunpack.c.h.b16 %v847
        %v1015 = vunpack.c.l.b16 %v848
        %v1016 = vunpack.c.h.b16 %v848
        %v1017 = vunpack.c.l.b16 %v849
        %v1018 = vunpack.c.h.b16 %v849
        %v1019 = vunpack.c.l.b16 %v850
        %v1020 = vunpack.c.h.b16 %v850
        %v1021 = vunpack.c.l.b16 %v851
        %v1022 = vunpack.c.h.b16 %v851
        %v1023 = vunpack.c.l.b16 %v852
        %v1024 = vunpack.c.h.b16 %v852
        %v1025 = vunpack.c.l.b16 %v853
        %v1026 = vunpack.c.h.b16 %v853
        %v1027 = vunpack.c.l.b16 %v854
        %v1028 = vunpack.c.h.b16 %v854
        %v1029 = vunpack.c.l.b16 %v855
        %v1030 = vunpack.c.h.b16 %v855
        %v1031 = vunpack.c.l.b16 %v856
        %v1032 = vunpack.c.h.b16 %v856
        %v1033 = vunpack.c.l.b16 %v857
        %v1034 = vunpack.c.h.b16 %v857
        %v1035 = vunpack.c.l.b16 %v858
        %v1036 = vunpack.c.h.b16 %v858
        %v1037 = vunpack.c.l.b16 %v859
        %v1038 = vunpack.c.h.b16 %v859
        %v1039 = vunpack.c.l.b16 %v860
        %v1040 = vunpack.c.h.b16 %v860
        %v1041 = vunpack.c.l.b16 %v861
        %v1042 = vunpack.c.h.b16 %v861
        %v1043 = vunpack.c.l.b16 %v862
        %v1044 = vunpack.c.h.b16 %v862
        %v1045 = vunpack.c.l.b16 %v863
        %v1046 = vunpack.c.h.b16 %v863
        %v1047 = vunpack.c.l.b16 %v864
        %v1048 = vunpack.c.h.b16 %v864
        %v1049 = vunpack.c.l.b16 %v865
        %v1050 = vunpack.c.h.b16 %v865
        %v1051 = vunpack.c.l.b16 %v866
        %v1052 = vunpack.c.h.b16 %v866
        %v1053 = vunpack.c.l.b16 %v867
        %v1054 = vunpack.c.h.b16 %v867
        %v1055 = vunpack.c.l.b16 %v868
        %v1056 = vunpack.c.h.b16 %v868
        %v1057 = vunpack.c.l.b16 %v869
        %v1058 = vunpack.c.h.b16 %v869
        %v1059 = vunpack.c.l.b16 %v870
        %v1060 = vunpack.c.h.b16 %v870
        %v1061 = vunpack.c.l.b16 %v871
        %v1062 = vunpack.c.h.b16 %v871
        %v1063 = vunpack.c.l.b16 %v872
        %v1064 = vunpack.c.h.b16 %v872
        %v1065 = vunpack.c.l.b16 %v873
        %v1066 = vunpack.c.h.b16 %v873
        %v1067 = vunpack.c.l.b16 %v874
        %v1068 = vunpack.c.h.b16 %v874
        %v1069 = vunpack.c.l.b16 %v875
        %v1070 = vunpack.c.h.b16 %v875
        %v1071 = vunpack.c.l.b16 %v876
        %v1072 = vunpack.c.h.b16 %v876
        %v1073 = vunpack.c.l.b16 %v877
        %v1074 = vunpack.c.h.b16 %v877
        %v1075 = vunpack.c.l.b16 %v878
        %v1076 = vunpack.c.h.b16 %v878
        %v1077 = vunpack.c.l.b16 %v879
        %v1078 = vunpack.c.h.b16 %v879
        %v1079 = vunpack.c.l.b16 %v880
        %v1080 = vunpack.c.h.b16 %v880
        %v1081 = vunpack.c.l.b16 %v881
        %v1082 = vunpack.c.h.b16 %v881
        %v1083 = vunpack.c.l.b16 %v882
        %v1084 = vunpack.c.h.b16 %v882
        %v1085 = vunpack.c.l.b16 %v883
        %v1086 = vunpack.c.h.b16 %v883
        %v1087 = vunpack.c.l.b16 %v884
        %v1088 = vunpack.c.h.b16 %v884
        %v1089 = vunpack.c.l.b16 %v885
        %v1090 = vunpack.c.h.b16 %v885
        %v1091 = vunpack.c.l.b16 %v886
        %v1092 = vunpack.c.h.b16 %v886
        %v1093 = vunpack.c.l.b16 %v887
        %v1094 = vunpack.c.h.b16 %v887
        %v1095 = vunpack.c.l.b16 %v888
        %v1096 = vunpack.c.h.b16 %v888
        %v1097 = vunpack.c.l.b16 %v889
        %v1098 = vunpack.c.h.b16 %v889
        %v1099 = vunpack.c.l.b16 %v890
        %v1100 = vunpack.c.h.b16 %v890
        %v1101 = vunpack.c.l.b16 %v891
        %v1102 = vunpack.c.h.b16 %v891
        %v1103 = vunpack.c.l.b16 %v892
        %v1104 = vunpack.c.h.b16 %v892
        %v1105 = vunpack.c.l.b16 %v893
        %v1106 = vunpack.c.h.b16 %v893
        %v1107 = vunpack.c.l.b16 %v894
        %v1108 = vunpack.c.h.b16 %v894
        %v1109 = vpack.c.b16 %v985, %v981
        %v1110 = vpack.c.b16 %v986, %v982
        %v1111 = vpack.c.b16 %v987, %v983
        %v1112 = vpack.c.b16 %v988, %v984
        %v1113 = vpack.c.b16 %v993, %v989
        %v1114 = vpack.c.b16 %v994, %v990
        %v1115 = vpack.c.b16 %v995, %v991
        %v1116 = vpack.c.b16 %v996, %v992
        %v1117 = vpack.c.b16 %v1001, %v997
        %v1118 = vpack.c.b16 %v1002, %v998
        %v1119 = vpack.c.b16 %v1003, %v999
        %v1120 = vpack.c.b16 %v1004, %v1000
        %v1121 = vpack.c.b16 %v1009, %v1005
        %v1122 = vpack.c.b16 %v1010, %v1006
        %v1123 = vpack.c.b16 %v1011, %v1007
        %v1124 = vpack.c.b16 %v1012, %v1008
        %v1125 = vpack.c.b16 %v1017, %v1013
        %v1126 = vpack.c.b16 %v1018, %v1014
        %v1127 = vpack.c.b16 %v1019, %v1015
        %v1128 = vpack.c.b16 %v1020, %v1016
        %v1129 = vpack.c.b16 %v1025, %v1021
        %v1130 = vpack.c.b16 %v1026, %v1022
        %v1131 = vpack.c.b16 %v1027, %v1023
        %v1132 = vpack.c.b16 %v1028, %v1024
        %v1133 = vpack.c.b16 %v1033, %v1029
        %v1134 = vpack.c.b16 %v1034, %v1030
        %v1135 = vpack.c.b16 %v1035, %v1031
        %v1136 = vpack.c.b16 %v1036, %v1032
        %v1137 = vpack.c.b16 %v1041, %v1037
        %v1138 = vpack.c.b16 %v1042, %v1038
        %v1139 = vpack.c.b16 %v1043, %v1039
        %v1140 = vpack.c.b16 %v1044, %v1040
        %v1141 = vpack.c.b16 %v1049, %v1045
        %v1142 = vpack.c.b16 %v1050, %v1046
        %v1143 = vpack.c.b16 %v1051, %v1047
        %v1144 = vpack.c.b16 %v1052, %v1048
        %v1145 = vpack.c.b16 %v1057, %v1053
        %v1146 = vpack.c.b16 %v1058, %v1054
        %v1147 = vpack.c.b16 %v1059, %v1055
        %v1148 = vpack.c.b16 %v1060, %v1056
        %v1149 = vpack.c.b16 %v1065, %v1061
        %v1150 = vpack.c.b16 %v1066, %v1062
        %v1151 = vpack.c.b16 %v1067, %v1063
        %v1152 = vpack.c.b16 %v1068, %v1064
        %v1153 = vpack.c.b16 %v1073, %v1069
        %v1154 = vpack.c.b16 %v1074, %v1070
        %v1155 = vpack.c.b16 %v1075, %v1071
        %v1156 = vpack.c.b16 %v1076, %v1072
        %v1157 = vpack.c.b16 %v1081, %v1077
        %v1158 = vpack.c.b16 %v1082, %v1078
        %v1159 = vpack.c.b16 %v1083, %v1079
        %v1160 = vpack.c.b16 %v1084, %v1080
        %v1161 = vpack.c.b16 %v1089, %v1085
        %v1162 = vpack.c.b16 %v1090, %v1086
        %v1163 = vpack.c.b16 %v1091, %v1087
        %v1164 = vpack.c.b16 %v1092, %v1088
        %v1165 = vpack.c.b16 %v1097, %v1093
        %v1166 = vpack.c.b16 %v1098, %v1094
        %v1167 = vpack.c.b16 %v1099, %v1095
        %v1168 = vpack.c.b16 %v1100, %v1096
        %v1169 = vpack.c.b16 %v1105, %v1101
        %v1170 = vpack.c.b16 %v1106, %v1102
        %v1171 = vpack.c.b16 %v1107, %v1103
        %v1172 = vpack.c.b16 %v1108, %v1104
        %1237 = vmatprep.subr.bf16.mxu0 %v1138
        %1238 = vmatpush1.bf16.msra.mxu0 %v1137
        %1239 = vmatprep.subr.bf16.mxu0 %v1134
        %1240 = vmatpush1.bf16.msra.mxu0 %v1133
        %1241 = vmatprep.subr.bf16.mxu0 %v1130
        %1242 = vmatpush1.bf16.msra.mxu0 %v1129
        %1243 = vmatprep.subr.bf16.mxu0 %v1126
        %1244 = vmatpush1.bf16.msra.mxu0 %v1125
        %1245 = vmatprep.subr.bf16.mxu0 %v1122
        %1246 = vmatpush1.bf16.msra.mxu0 %v1121
        %1247 = vmatprep.subr.bf16.mxu0 %v1118
        %1248 = vmatpush1.bf16.msra.mxu0 %v1117
        %1249 = vmatprep.subr.bf16.mxu0 %v1114
        %1250 = vmatpush1.bf16.msra.mxu0 %v1113
        %1251 = vmatprep.subr.bf16.mxu0 %v1110
        %1252 = vmatpush1.bf16.msra.mxu0 %v1109
        %1253 = vmatprep.subr.bf16.mxu0 %v1170
        %1254 = vmatpush2.bf16.msra.mxu0 %v1169
        %1255 = vmatprep.subr.bf16.mxu0 %v1166
        %1256 = vmatpush2.bf16.msra.mxu0 %v1165
        %1257 = vmatprep.subr.bf16.mxu0 %v1162
        %1258 = vmatpush2.bf16.msra.mxu0 %v1161
        %1259 = vmatprep.subr.bf16.mxu0 %v1158
        %1260 = vmatpush2.bf16.msra.mxu0 %v1157
        %1261 = vmatprep.subr.bf16.mxu0 %v1154
        %1262 = vmatpush2.bf16.msra.mxu0 %v1153
        %1263 = vmatprep.subr.bf16.mxu0 %v1150
        %1264 = vmatpush2.bf16.msra.mxu0 %v1149
        %1265 = vmatprep.subr.bf16.mxu0 %v1146
        %1266 = vmatpush2.bf16.msra.mxu0 %v1145
        %1267 = vmatprep.subr.bf16.mxu0 %v1142
        %1268 = vmatpush2.bf16.msra.mxu0 %v1141
        %1269 = vmatprep.mubr.bf16.mxu0 %v830
        %1270 = vmatmul.mubr.bf16.gmra.mxu0 %v829
        %v1271 = vpop.f32.mrf.mxu0
        %v1272 = vadd.f32 %v900, %v1271
        %v1273 = vpop.f32.mrf.mxu0
        %v1274 = vadd.f32 %v904, %v1273
        %v1275 = vpop.f32.mrf.mxu0
        %v1276 = vpop.f32.mrf.mxu0
        %1277 = vdwg.mxu0
        %1278 = vmatprep.subr.bf16.mxu0 %v1140
        %1279 = vmatpush1.bf16.msra.mxu0 %v1139
        %1280 = vmatprep.subr.bf16.mxu0 %v1136
        %1281 = vmatpush1.bf16.msra.mxu0 %v1135
        %1282 = vmatprep.subr.bf16.mxu0 %v1132
        %1283 = vmatpush1.bf16.msra.mxu0 %v1131
        %1284 = vmatprep.subr.bf16.mxu0 %v1128
        %1285 = vmatpush1.bf16.msra.mxu0 %v1127
        %1286 = vmatprep.subr.bf16.mxu0 %v1124
        %1287 = vmatpush1.bf16.msra.mxu0 %v1123
        %1288 = vmatprep.subr.bf16.mxu0 %v1120
        %1289 = vmatpush1.bf16.msra.mxu0 %v1119
        %1290 = vmatprep.subr.bf16.mxu0 %v1116
        %1291 = vmatpush1.bf16.msra.mxu0 %v1115
        %1292 = vmatprep.subr.bf16.mxu0 %v1112
        %1293 = vmatpush1.bf16.msra.mxu0 %v1111
        %1294 = vmatprep.subr.bf16.mxu0 %v1172
        %1295 = vmatpush2.bf16.msra.mxu0 %v1171
        %1296 = vmatprep.subr.bf16.mxu0 %v1168
        %1297 = vmatpush2.bf16.msra.mxu0 %v1167
        %1298 = vmatprep.subr.bf16.mxu0 %v1164
        %1299 = vmatpush2.bf16.msra.mxu0 %v1163
        %1300 = vmatprep.subr.bf16.mxu0 %v1160
        %1301 = vmatpush2.bf16.msra.mxu0 %v1159
        %1302 = vmatprep.subr.bf16.mxu0 %v1156
        %1303 = vmatpush2.bf16.msra.mxu0 %v1155
        %1304 = vmatprep.subr.bf16.mxu0 %v1152
        %1305 = vmatpush2.bf16.msra.mxu0 %v1151
        %1306 = vmatprep.subr.bf16.mxu0 %v1148
        %1307 = vmatpush2.bf16.msra.mxu0 %v1147
        %1308 = vmatprep.subr.bf16.mxu0 %v1144
        %1309 = vmatpush2.bf16.msra.mxu0 %v1143
        %1310 = vmatprep.mubr.bf16.mxu0 %v830
        %1311 = vmatmul.mubr.bf16.gmra.mxu0 %v829
        %v1312 = vpop.f32.mrf.mxu0
        %v1313 = vadd.f32 %v908, %v1312
        %v1314 = vpop.f32.mrf.mxu0
        %v1315 = vadd.f32 %v912, %v1314
        %v1316 = vpop.f32.mrf.mxu0
        %v1317 = vpop.f32.mrf.mxu0
        %1318 = vdwg.mxu0
        %v1319 = vxor.u32 %v1272, 2147483648
        %v1320 = vxor.u32 %v1274, 2147483648
        %v1321 = vxor.u32 %v1313, 2147483648
        %v1322 = vmul.f32 %v1319, 1.442695
        %v1323 = vpow.pop %v1322
        %v1324 = vmul.f32 %v1320, 1.442695
        %v1325 = vpow.pop %v1324
        %v1326 = vmul.f32 %v1321, 1.442695
        %v1327 = vpow.pop %v1326
        %v1328 = vadd.f32 %v1323, 1.0
        %v1329 = vadd.f32 %v1325, 1.0
        %v1330 = vadd.f32 %v1327, 1.0
        %v1331 = vrcp.pop %v1328
        %v1332 = vmul.f32 1.0, %v1331
        %v1333 = vrcp.pop %v1329
        %v1334 = vmul.f32 1.0, %v1333
        %v1335 = vrcp.pop %v1330
        %v1336 = vmul.f32 1.0, %v1335
        %v1337 = vtanh.pop %v1315
        %v1338 = vmul.f32 %v1334, %v521
        %v1339 = vmul.f32 %v1332, %v1337
        %v1340 = vadd.f32 %v1338, %v1339
        %v1341 = vtanh.pop %v1340
        %v1342 = vmul.f32 %v1336, %v1341
        %1343 = vst [vmem:[%s494] sm:$0xff] %v1342
        %s1344 = scalar_lea.vmem %s438, 32 [#allocation2]
        %v1345 = vld [vmem:[%s1344] sm:$0xff]
        %v1346 = vld [vmem:[%s1344 + $0x8] sm:$0xff]
        %v1347 = vld [vmem:[%s1344 + $0x10] sm:$0xff]
        %v1348 = vld [vmem:[%s1344 + $0x18] sm:$0xff]
        %v1349 = vld [vmem:[#allocation11] sm:$0xff]
        %v1350 = vld [vmem:[#allocation11 + $0x8] sm:$0xff]
        %v1351 = vld [vmem:[#allocation11 + $0x10] sm:$0xff]
        %v1352 = vld [vmem:[#allocation11 + $0x18] sm:$0xff]
        %v1353 = vld [vmem:[#allocation11 + $0x20] sm:$0xff]
        %v1354 = vld [vmem:[#allocation11 + $0x28] sm:$0xff]
        %v1355 = vld [vmem:[#allocation11 + $0x30] sm:$0xff]
        %v1356 = vld [vmem:[#allocation11 + $0x38] sm:$0xff]
        %v1357 = vld [vmem:[#allocation11 + $0x40] sm:$0xff]
        %v1358 = vld [vmem:[#allocation11 + $0x48] sm:$0xff]
        %v1359 = vld [vmem:[#allocation11 + $0x50] sm:$0xff]
        %v1360 = vld [vmem:[#allocation11 + $0x58] sm:$0xff]
        %v1361 = vld [vmem:[#allocation11 + $0x60] sm:$0xff]
        %v1362 = vld [vmem:[#allocation11 + $0x68] sm:$0xff]
        %v1363 = vld [vmem:[#allocation11 + $0x70] sm:$0xff]
        %v1364 = vld [vmem:[#allocation11 + $0x78] sm:$0xff]
        %v1365 = vld [vmem:[#allocation11 + $0x80] sm:$0xff]
        %v1366 = vld [vmem:[#allocation11 + $0x88] sm:$0xff]
        %v1367 = vld [vmem:[#allocation11 + $0x90] sm:$0xff]
        %v1368 = vld [vmem:[#allocation11 + $0x98] sm:$0xff]
        %v1369 = vld [vmem:[#allocation11 + $0xa0] sm:$0xff]
        %v1370 = vld [vmem:[#allocation11 + $0xa8] sm:$0xff]
        %v1371 = vld [vmem:[#allocation11 + $0xb0] sm:$0xff]
        %v1372 = vld [vmem:[#allocation11 + $0xb8] sm:$0xff]
        %v1373 = vld [vmem:[#allocation11 + $0xc0] sm:$0xff]
        %v1374 = vld [vmem:[#allocation11 + $0xc8] sm:$0xff]
        %v1375 = vld [vmem:[#allocation11 + $0xd0] sm:$0xff]
        %v1376 = vld [vmem:[#allocation11 + $0xd8] sm:$0xff]
        %v1377 = vld [vmem:[#allocation11 + $0xe0] sm:$0xff]
        %v1378 = vld [vmem:[#allocation11 + $0xe8] sm:$0xff]
        %v1379 = vld [vmem:[#allocation11 + $0xf0] sm:$0xff]
        %v1380 = vld [vmem:[#allocation11 + $0xf8] sm:$0xff]
        %v1413 = vunpack.c.l.b16 %v1349
        %v1414 = vunpack.c.h.b16 %v1349
        %v1415 = vunpack.c.l.b16 %v1350
        %v1416 = vunpack.c.h.b16 %v1350
        %v1417 = vunpack.c.l.b16 %v1351
        %v1418 = vunpack.c.h.b16 %v1351
        %v1419 = vunpack.c.l.b16 %v1352
        %v1420 = vunpack.c.h.b16 %v1352
        %v1421 = vunpack.c.l.b16 %v1353
        %v1422 = vunpack.c.h.b16 %v1353
        %v1423 = vunpack.c.l.b16 %v1354
        %v1424 = vunpack.c.h.b16 %v1354
        %v1425 = vunpack.c.l.b16 %v1355
        %v1426 = vunpack.c.h.b16 %v1355
        %v1427 = vunpack.c.l.b16 %v1356
        %v1428 = vunpack.c.h.b16 %v1356
        %v1429 = vunpack.c.l.b16 %v1357
        %v1430 = vunpack.c.h.b16 %v1357
        %v1431 = vunpack.c.l.b16 %v1358
        %v1432 = vunpack.c.h.b16 %v1358
        %v1433 = vunpack.c.l.b16 %v1359
        %v1434 = vunpack.c.h.b16 %v1359
        %v1435 = vunpack.c.l.b16 %v1360
        %v1436 = vunpack.c.h.b16 %v1360
        %v1437 = vunpack.c.l.b16 %v1361
        %v1438 = vunpack.c.h.b16 %v1361
        %v1439 = vunpack.c.l.b16 %v1362
        %v1440 = vunpack.c.h.b16 %v1362
        %v1441 = vunpack.c.l.b16 %v1363
        %v1442 = vunpack.c.h.b16 %v1363
        %v1443 = vunpack.c.l.b16 %v1364
        %v1444 = vunpack.c.h.b16 %v1364
        %v1445 = vunpack.c.l.b16 %v1365
        %v1446 = vunpack.c.h.b16 %v1365
        %v1447 = vunpack.c.l.b16 %v1366
        %v1448 = vunpack.c.h.b16 %v1366
        %v1449 = vunpack.c.l.b16 %v1367
        %v1450 = vunpack.c.h.b16 %v1367
        %v1451 = vunpack.c.l.b16 %v1368
        %v1452 = vunpack.c.h.b16 %v1368
        %v1453 = vunpack.c.l.b16 %v1369
        %v1454 = vunpack.c.h.b16 %v1369
        %v1455 = vunpack.c.l.b16 %v1370
        %v1456 = vunpack.c.h.b16 %v1370
        %v1457 = vunpack.c.l.b16 %v1371
        %v1458 = vunpack.c.h.b16 %v1371
        %v1459 = vunpack.c.l.b16 %v1372
        %v1460 = vunpack.c.h.b16 %v1372
        %v1461 = vunpack.c.l.b16 %v1373
        %v1462 = vunpack.c.h.b16 %v1373
        %v1463 = vunpack.c.l.b16 %v1374
        %v1464 = vunpack.c.h.b16 %v1374
        %v1465 = vunpack.c.l.b16 %v1375
        %v1466 = vunpack.c.h.b16 %v1375
        %v1467 = vunpack.c.l.b16 %v1376
        %v1468 = vunpack.c.h.b16 %v1376
        %v1469 = vunpack.c.l.b16 %v1377
        %v1470 = vunpack.c.h.b16 %v1377
        %v1471 = vunpack.c.l.b16 %v1378
        %v1472 = vunpack.c.h.b16 %v1378
        %v1473 = vunpack.c.l.b16 %v1379
        %v1474 = vunpack.c.h.b16 %v1379
        %v1475 = vunpack.c.l.b16 %v1380
        %v1476 = vunpack.c.h.b16 %v1380
        %v1477 = vpack.c.b16 %v1417, %v1413
        %v1478 = vpack.c.b16 %v1418, %v1414
        %v1479 = vpack.c.b16 %v1419, %v1415
        %v1480 = vpack.c.b16 %v1420, %v1416
        %v1481 = vpack.c.b16 %v1425, %v1421
        %v1482 = vpack.c.b16 %v1426, %v1422
        %v1483 = vpack.c.b16 %v1427, %v1423
        %v1484 = vpack.c.b16 %v1428, %v1424
        %v1485 = vpack.c.b16 %v1433, %v1429
        %v1486 = vpack.c.b16 %v1434, %v1430
        %v1487 = vpack.c.b16 %v1435, %v1431
        %v1488 = vpack.c.b16 %v1436, %v1432
        %v1489 = vpack.c.b16 %v1441, %v1437
        %v1490 = vpack.c.b16 %v1442, %v1438
        %v1491 = vpack.c.b16 %v1443, %v1439
        %v1492 = vpack.c.b16 %v1444, %v1440
        %v1493 = vpack.c.b16 %v1449, %v1445
        %v1494 = vpack.c.b16 %v1450, %v1446
        %v1495 = vpack.c.b16 %v1451, %v1447
        %v1496 = vpack.c.b16 %v1452, %v1448
        %v1497 = vpack.c.b16 %v1457, %v1453
        %v1498 = vpack.c.b16 %v1458, %v1454
        %v1499 = vpack.c.b16 %v1459, %v1455
        %v1500 = vpack.c.b16 %v1460, %v1456
        %v1501 = vpack.c.b16 %v1465, %v1461
        %v1502 = vpack.c.b16 %v1466, %v1462
        %v1503 = vpack.c.b16 %v1467, %v1463
        %v1504 = vpack.c.b16 %v1468, %v1464
        %v1505 = vpack.c.b16 %v1473, %v1469
        %v1506 = vpack.c.b16 %v1474, %v1470
        %v1507 = vpack.c.b16 %v1475, %v1471
        %v1508 = vpack.c.b16 %v1476, %v1472
        %1541 = vmatprep.subr.bf16.mxu0 %v1506
        %1542 = vmatpush1.bf16.msra.mxu0 %v1505
        %1543 = vmatprep.subr.bf16.mxu0 %v1502
        %1544 = vmatpush1.bf16.msra.mxu0 %v1501
        %1545 = vmatprep.subr.bf16.mxu0 %v1498
        %1546 = vmatpush1.bf16.msra.mxu0 %v1497
        %1547 = vmatprep.subr.bf16.mxu0 %v1494
        %1548 = vmatpush1.bf16.msra.mxu0 %v1493
        %1549 = vmatprep.subr.bf16.mxu0 %v1490
        %1550 = vmatpush1.bf16.msra.mxu0 %v1489
        %1551 = vmatprep.subr.bf16.mxu0 %v1486
        %1552 = vmatpush1.bf16.msra.mxu0 %v1485
        %1553 = vmatprep.subr.bf16.mxu0 %v1482
        %1554 = vmatpush1.bf16.msra.mxu0 %v1481
        %1555 = vmatprep.subr.bf16.mxu0 %v1478
        %1556 = vmatpush1.bf16.msra.mxu0 %v1477
        %1557 = vmatprep.subr.bf16.mxu0 0
        %1558 = vmatpush2.bf16.msra.mxu0 0
        %1559 = vmatprep.subr.bf16.mxu0 0
        %1560 = vmatpush2.bf16.msra.mxu0 0
        %1561 = vmatprep.subr.bf16.mxu0 0
        %1562 = vmatpush2.bf16.msra.mxu0 0
        %1563 = vmatprep.subr.bf16.mxu0 0
        %1564 = vmatpush2.bf16.msra.mxu0 0
        %1565 = vmatprep.subr.bf16.mxu0 0
        %1566 = vmatpush2.bf16.msra.mxu0 0
        %1567 = vmatprep.subr.bf16.mxu0 0
        %1568 = vmatpush2.bf16.msra.mxu0 0
        %1569 = vmatprep.subr.bf16.mxu0 0
        %1570 = vmatpush2.bf16.msra.mxu0 0
        %1571 = vmatprep.subr.bf16.mxu0 0
        %1572 = vmatpush2.bf16.msra.mxu0 0
        %1573 = vmatprep.mubr.bf16.mxu0 0
        %1574 = vmatmul.mubr.bf16.gmra.mxu0 %v829
        %v1575 = vpop.f32.mrf.mxu0
        %v1576 = vadd.f32 0.0, %v1575
        %v1577 = vpop.f32.mrf.mxu0
        %v1578 = vadd.f32 0.0, %v1577
        %v1579 = vpop.f32.mrf.mxu0
        %v1580 = vpop.f32.mrf.mxu0
        %1581 = vdwg.mxu0
        %1582 = vmatprep.subr.bf16.mxu0 %v1508
        %1583 = vmatpush1.bf16.msra.mxu0 %v1507
        %1584 = vmatprep.subr.bf16.mxu0 %v1504
        %1585 = vmatpush1.bf16.msra.mxu0 %v1503
        %1586 = vmatprep.subr.bf16.mxu0 %v1500
        %1587 = vmatpush1.bf16.msra.mxu0 %v1499
        %1588 = vmatprep.subr.bf16.mxu0 %v1496
        %1589 = vmatpush1.bf16.msra.mxu0 %v1495
        %1590 = vmatprep.subr.bf16.mxu0 %v1492
        %1591 = vmatpush1.bf16.msra.mxu0 %v1491
        %1592 = vmatprep.subr.bf16.mxu0 %v1488
        %1593 = vmatpush1.bf16.msra.mxu0 %v1487
        %1594 = vmatprep.subr.bf16.mxu0 %v1484
        %1595 = vmatpush1.bf16.msra.mxu0 %v1483
        %1596 = vmatprep.subr.bf16.mxu0 %v1480
        %1597 = vmatpush1.bf16.msra.mxu0 %v1479
        %1598 = vmatprep.subr.bf16.mxu0 0
        %1599 = vmatpush2.bf16.msra.mxu0 0
        %1600 = vmatprep.subr.bf16.mxu0 0
        %1601 = vmatpush2.bf16.msra.mxu0 0
        %1602 = vmatprep.subr.bf16.mxu0 0
        %1603 = vmatpush2.bf16.msra.mxu0 0
        %1604 = vmatprep.subr.bf16.mxu0 0
        %1605 = vmatpush2.bf16.msra.mxu0 0
        %1606 = vmatprep.subr.bf16.mxu0 0
        %1607 = vmatpush2.bf16.msra.mxu0 0
        %1608 = vmatprep.subr.bf16.mxu0 0
        %1609 = vmatpush2.bf16.msra.mxu0 0
        %1610 = vmatprep.subr.bf16.mxu0 0
        %1611 = vmatpush2.bf16.msra.mxu0 0
        %1612 = vmatprep.subr.bf16.mxu0 0
        %1613 = vmatpush2.bf16.msra.mxu0 0
        %1614 = vmatprep.mubr.bf16.mxu0 0
        %1615 = vmatmul.mubr.bf16.gmra.mxu0 %v829
        %v1616 = vpop.f32.mrf.mxu0
        %v1617 = vadd.f32 0.0, %v1616
        %v1618 = vpop.f32.mrf.mxu0
        %v1619 = vadd.f32 0.0, %v1618
        %v1620 = vpop.f32.mrf.mxu0
        %v1621 = vpop.f32.mrf.mxu0
        %1622 = vdwg.mxu0
        %v1623 = vadd.f32 %v1345, %v1576
        %v1624 = vadd.f32 %v1346, %v1578
        %v1625 = vadd.f32 %v1347, %v1617
        %v1626 = vadd.f32 %v1348, %v1619
        %v1627 = vxor.u32 %v1623, 2147483648
        %v1628 = vxor.u32 %v1624, 2147483648
        %v1629 = vxor.u32 %v1625, 2147483648
        %v1630 = vmul.f32 %v1627, 1.442695
        %v1631 = vpow.pop %v1630
        %v1632 = vmul.f32 %v1628, 1.442695
        %v1633 = vpow.pop %v1632
        %v1634 = vmul.f32 %v1629, 1.442695
        %v1635 = vpow.pop %v1634
        %v1636 = vadd.f32 %v1631, 1.0
        %v1637 = vadd.f32 %v1633, 1.0
        %v1638 = vadd.f32 %v1635, 1.0
        %v1639 = vrcp.pop %v1636
        %v1640 = vmul.f32 1.0, %v1639
        %v1641 = vrcp.pop %v1637
        %v1642 = vmul.f32 1.0, %v1641
        %v1643 = vrcp.pop %v1638
        %v1644 = vmul.f32 1.0, %v1643
        %v1645 = vtanh.pop %v1626
        %v1646 = vmul.f32 %v1642, %v826
        %v1647 = vmul.f32 %v1640, %v1645
        %v1648 = vadd.f32 %v1646, %v1647
        %v1649 = vtanh.pop %v1648
        %v1650 = vmul.f32 %v1644, %v1649
        %v1651 = vpack.c.bf16 %v1650, %v1650
        %v1652 = vpack.c.bf16 %v1342, %v1342
        %v1653 = vld [vmem:[#allocation13] sm:$0xff]
        %v1654 = vld [vmem:[#allocation13 + $0x8] sm:$0xff]
        %v1655 = vld [vmem:[#allocation13 + $0x10] sm:$0xff]
        %v1656 = vld [vmem:[#allocation13 + $0x18] sm:$0xff]
        %v1657 = vld [vmem:[#allocation13 + $0x20] sm:$0xff]
        %v1658 = vld [vmem:[#allocation13 + $0x28] sm:$0xff]
        %v1659 = vld [vmem:[#allocation13 + $0x30] sm:$0xff]
        %v1660 = vld [vmem:[#allocation13 + $0x38] sm:$0xff]
        %v1661 = vld [vmem:[#allocation13 + $0x40] sm:$0xff]
        %v1662 = vld [vmem:[#allocation13 + $0x48] sm:$0xff]
        %v1663 = vld [vmem:[#allocation13 + $0x50] sm:$0xff]
        %v1664 = vld [vmem:[#allocation13 + $0x58] sm:$0xff]
        %v1665 = vld [vmem:[#allocation13 + $0x60] sm:$0xff]
        %v1666 = vld [vmem:[#allocation13 + $0x68] sm:$0xff]
        %v1667 = vld [vmem:[#allocation13 + $0x70] sm:$0xff]
        %v1668 = vld [vmem:[#allocation13 + $0x78] sm:$0xff]
        %v1669 = vld [vmem:[#allocation13 + $0x80] sm:$0xff]
        %v1670 = vld [vmem:[#allocation13 + $0x88] sm:$0xff]
        %v1671 = vld [vmem:[#allocation13 + $0x90] sm:$0xff]
        %v1672 = vld [vmem:[#allocation13 + $0x98] sm:$0xff]
        %v1673 = vld [vmem:[#allocation13 + $0xa0] sm:$0xff]
        %v1674 = vld [vmem:[#allocation13 + $0xa8] sm:$0xff]
        %v1675 = vld [vmem:[#allocation13 + $0xb0] sm:$0xff]
        %v1676 = vld [vmem:[#allocation13 + $0xb8] sm:$0xff]
        %v1677 = vld [vmem:[#allocation13 + $0xc0] sm:$0xff]
        %v1678 = vld [vmem:[#allocation13 + $0xc8] sm:$0xff]
        %v1679 = vld [vmem:[#allocation13 + $0xd0] sm:$0xff]
        %v1680 = vld [vmem:[#allocation13 + $0xd8] sm:$0xff]
        %v1681 = vld [vmem:[#allocation13 + $0xe0] sm:$0xff]
        %v1682 = vld [vmem:[#allocation13 + $0xe8] sm:$0xff]
        %v1683 = vld [vmem:[#allocation13 + $0xf0] sm:$0xff]
        %v1684 = vld [vmem:[#allocation13 + $0xf8] sm:$0xff]
        %v1685 = vld [vmem:[#allocation13 + $0x100] sm:$0xff]
        %v1686 = vld [vmem:[#allocation13 + $0x108] sm:$0xff]
        %v1687 = vld [vmem:[#allocation13 + $0x110] sm:$0xff]
        %v1688 = vld [vmem:[#allocation13 + $0x118] sm:$0xff]
        %v1689 = vld [vmem:[#allocation13 + $0x120] sm:$0xff]
        %v1690 = vld [vmem:[#allocation13 + $0x128] sm:$0xff]
        %v1691 = vld [vmem:[#allocation13 + $0x130] sm:$0xff]
        %v1692 = vld [vmem:[#allocation13 + $0x138] sm:$0xff]
        %v1693 = vld [vmem:[#allocation13 + $0x140] sm:$0xff]
        %v1694 = vld [vmem:[#allocation13 + $0x148] sm:$0xff]
        %v1695 = vld [vmem:[#allocation13 + $0x150] sm:$0xff]
        %v1696 = vld [vmem:[#allocation13 + $0x158] sm:$0xff]
        %v1697 = vld [vmem:[#allocation13 + $0x160] sm:$0xff]
        %v1698 = vld [vmem:[#allocation13 + $0x168] sm:$0xff]
        %v1699 = vld [vmem:[#allocation13 + $0x170] sm:$0xff]
        %v1700 = vld [vmem:[#allocation13 + $0x178] sm:$0xff]
        %v1701 = vld [vmem:[#allocation13 + $0x180] sm:$0xff]
        %v1702 = vld [vmem:[#allocation13 + $0x188] sm:$0xff]
        %v1703 = vld [vmem:[#allocation13 + $0x190] sm:$0xff]
        %v1704 = vld [vmem:[#allocation13 + $0x198] sm:$0xff]
        %v1705 = vld [vmem:[#allocation13 + $0x1a0] sm:$0xff]
        %v1706 = vld [vmem:[#allocation13 + $0x1a8] sm:$0xff]
        %v1707 = vld [vmem:[#allocation13 + $0x1b0] sm:$0xff]
        %v1708 = vld [vmem:[#allocation13 + $0x1b8] sm:$0xff]
        %v1709 = vld [vmem:[#allocation13 + $0x1c0] sm:$0xff]
        %v1710 = vld [vmem:[#allocation13 + $0x1c8] sm:$0xff]
        %v1711 = vld [vmem:[#allocation13 + $0x1d0] sm:$0xff]
        %v1712 = vld [vmem:[#allocation13 + $0x1d8] sm:$0xff]
        %v1713 = vld [vmem:[#allocation13 + $0x1e0] sm:$0xff]
        %v1714 = vld [vmem:[#allocation13 + $0x1e8] sm:$0xff]
        %v1715 = vld [vmem:[#allocation13 + $0x1f0] sm:$0xff]
        %v1716 = vld [vmem:[#allocation13 + $0x1f8] sm:$0xff]
        %v1717 = vld [vmem:[%s7] sm:$0xf]
        %v1719 = vlaneseq
        %v1720 = vshrl.u32 %v1719, 7
        %v1721 = vsub.s32 0, %v1720
        %v1722 = vrot.slane %v1717, %v1721
        %v1723 = vlaneseq
        %v1724 = vshrl.u32 %v1723, 7
        %v1725 = vsub.s32 1, %v1724
        %v1726 = vrot.slane %v1717, %v1725
        %v1727 = vlaneseq
        %v1728 = vshrl.u32 %v1727, 7
        %v1729 = vsub.s32 2, %v1728
        %v1730 = vrot.slane %v1717, %v1729
        %v1731 = vlaneseq
        %v1732 = vshrl.u32 %v1731, 7
        %v1733 = vsub.s32 3, %v1732
        %v1734 = vrot.slane %v1717, %v1733
        %v1803 = vunpack.c.l.b16 %v1653
        %v1804 = vunpack.c.h.b16 %v1653
        %v1805 = vunpack.c.l.b16 %v1654
        %v1806 = vunpack.c.h.b16 %v1654
        %v1807 = vunpack.c.l.b16 %v1655
        %v1808 = vunpack.c.h.b16 %v1655
        %v1809 = vunpack.c.l.b16 %v1656
        %v1810 = vunpack.c.h.b16 %v1656
        %v1811 = vunpack.c.l.b16 %v1657
        %v1812 = vunpack.c.h.b16 %v1657
        %v1813 = vunpack.c.l.b16 %v1658
        %v1814 = vunpack.c.h.b16 %v1658
        %v1815 = vunpack.c.l.b16 %v1659
        %v1816 = vunpack.c.h.b16 %v1659
        %v1817 = vunpack.c.l.b16 %v1660
        %v1818 = vunpack.c.h.b16 %v1660
        %v1819 = vunpack.c.l.b16 %v1661
        %v1820 = vunpack.c.h.b16 %v1661
        %v1821 = vunpack.c.l.b16 %v1662
        %v1822 = vunpack.c.h.b16 %v1662
        %v1823 = vunpack.c.l.b16 %v1663
        %v1824 = vunpack.c.h.b16 %v1663
        %v1825 = vunpack.c.l.b16 %v1664
        %v1826 = vunpack.c.h.b16 %v1664
        %v1827 = vunpack.c.l.b16 %v1665
        %v1828 = vunpack.c.h.b16 %v1665
        %v1829 = vunpack.c.l.b16 %v1666
        %v1830 = vunpack.c.h.b16 %v1666
        %v1831 = vunpack.c.l.b16 %v1667
        %v1832 = vunpack.c.h.b16 %v1667
        %v1833 = vunpack.c.l.b16 %v1668
        %v1834 = vunpack.c.h.b16 %v1668
        %v1835 = vunpack.c.l.b16 %v1669
        %v1836 = vunpack.c.h.b16 %v1669
        %v1837 = vunpack.c.l.b16 %v1670
        %v1838 = vunpack.c.h.b16 %v1670
        %v1839 = vunpack.c.l.b16 %v1671
        %v1840 = vunpack.c.h.b16 %v1671
        %v1841 = vunpack.c.l.b16 %v1672
        %v1842 = vunpack.c.h.b16 %v1672
        %v1843 = vunpack.c.l.b16 %v1673
        %v1844 = vunpack.c.h.b16 %v1673
        %v1845 = vunpack.c.l.b16 %v1674
        %v1846 = vunpack.c.h.b16 %v1674
        %v1847 = vunpack.c.l.b16 %v1675
        %v1848 = vunpack.c.h.b16 %v1675
        %v1849 = vunpack.c.l.b16 %v1676
        %v1850 = vunpack.c.h.b16 %v1676
        %v1851 = vunpack.c.l.b16 %v1677
        %v1852 = vunpack.c.h.b16 %v1677
        %v1853 = vunpack.c.l.b16 %v1678
        %v1854 = vunpack.c.h.b16 %v1678
        %v1855 = vunpack.c.l.b16 %v1679
        %v1856 = vunpack.c.h.b16 %v1679
        %v1857 = vunpack.c.l.b16 %v1680
        %v1858 = vunpack.c.h.b16 %v1680
        %v1859 = vunpack.c.l.b16 %v1681
        %v1860 = vunpack.c.h.b16 %v1681
        %v1861 = vunpack.c.l.b16 %v1682
        %v1862 = vunpack.c.h.b16 %v1682
        %v1863 = vunpack.c.l.b16 %v1683
        %v1864 = vunpack.c.h.b16 %v1683
        %v1865 = vunpack.c.l.b16 %v1684
        %v1866 = vunpack.c.h.b16 %v1684
        %v1867 = vunpack.c.l.b16 %v1685
        %v1868 = vunpack.c.h.b16 %v1685
        %v1869 = vunpack.c.l.b16 %v1686
        %v1870 = vunpack.c.h.b16 %v1686
        %v1871 = vunpack.c.l.b16 %v1687
        %v1872 = vunpack.c.h.b16 %v1687
        %v1873 = vunpack.c.l.b16 %v1688
        %v1874 = vunpack.c.h.b16 %v1688
        %v1875 = vunpack.c.l.b16 %v1689
        %v1876 = vunpack.c.h.b16 %v1689
        %v1877 = vunpack.c.l.b16 %v1690
        %v1878 = vunpack.c.h.b16 %v1690
        %v1879 = vunpack.c.l.b16 %v1691
        %v1880 = vunpack.c.h.b16 %v1691
        %v1881 = vunpack.c.l.b16 %v1692
        %v1882 = vunpack.c.h.b16 %v1692
        %v1883 = vunpack.c.l.b16 %v1693
        %v1884 = vunpack.c.h.b16 %v1693
        %v1885 = vunpack.c.l.b16 %v1694
        %v1886 = vunpack.c.h.b16 %v1694
        %v1887 = vunpack.c.l.b16 %v1695
        %v1888 = vunpack.c.h.b16 %v1695
        %v1889 = vunpack.c.l.b16 %v1696
        %v1890 = vunpack.c.h.b16 %v1696
        %v1891 = vunpack.c.l.b16 %v1697
        %v1892 = vunpack.c.h.b16 %v1697
        %v1893 = vunpack.c.l.b16 %v1698
        %v1894 = vunpack.c.h.b16 %v1698
        %v1895 = vunpack.c.l.b16 %v1699
        %v1896 = vunpack.c.h.b16 %v1699
        %v1897 = vunpack.c.l.b16 %v1700
        %v1898 = vunpack.c.h.b16 %v1700
        %v1899 = vunpack.c.l.b16 %v1701
        %v1900 = vunpack.c.h.b16 %v1701
        %v1901 = vunpack.c.l.b16 %v1702
        %v1902 = vunpack.c.h.b16 %v1702
        %v1903 = vunpack.c.l.b16 %v1703
        %v1904 = vunpack.c.h.b16 %v1703
        %v1905 = vunpack.c.l.b16 %v1704
        %v1906 = vunpack.c.h.b16 %v1704
        %v1907 = vunpack.c.l.b16 %v1705
        %v1908 = vunpack.c.h.b16 %v1705
        %v1909 = vunpack.c.l.b16 %v1706
        %v1910 = vunpack.c.h.b16 %v1706
        %v1911 = vunpack.c.l.b16 %v1707
        %v1912 = vunpack.c.h.b16 %v1707
        %v1913 = vunpack.c.l.b16 %v1708
        %v1914 = vunpack.c.h.b16 %v1708
        %v1915 = vunpack.c.l.b16 %v1709
        %v1916 = vunpack.c.h.b16 %v1709
        %v1917 = vunpack.c.l.b16 %v1710
        %v1918 = vunpack.c.h.b16 %v1710
        %v1919 = vunpack.c.l.b16 %v1711
        %v1920 = vunpack.c.h.b16 %v1711
        %v1921 = vunpack.c.l.b16 %v1712
        %v1922 = vunpack.c.h.b16 %v1712
        %v1923 = vunpack.c.l.b16 %v1713
        %v1924 = vunpack.c.h.b16 %v1713
        %v1925 = vunpack.c.l.b16 %v1714
        %v1926 = vunpack.c.h.b16 %v1714
        %v1927 = vunpack.c.l.b16 %v1715
        %v1928 = vunpack.c.h.b16 %v1715
        %v1929 = vunpack.c.l.b16 %v1716
        %v1930 = vunpack.c.h.b16 %v1716
        %v1931 = vpack.c.b16 %v1807, %v1803
        %v1932 = vpack.c.b16 %v1808, %v1804
        %v1933 = vpack.c.b16 %v1809, %v1805
        %v1934 = vpack.c.b16 %v1810, %v1806
        %v1935 = vpack.c.b16 %v1815, %v1811
        %v1936 = vpack.c.b16 %v1816, %v1812
        %v1937 = vpack.c.b16 %v1817, %v1813
        %v1938 = vpack.c.b16 %v1818, %v1814
        %v1939 = vpack.c.b16 %v1823, %v1819
        %v1940 = vpack.c.b16 %v1824, %v1820
        %v1941 = vpack.c.b16 %v1825, %v1821
        %v1942 = vpack.c.b16 %v1826, %v1822
        %v1943 = vpack.c.b16 %v1831, %v1827
        %v1944 = vpack.c.b16 %v1832, %v1828
        %v1945 = vpack.c.b16 %v1833, %v1829
        %v1946 = vpack.c.b16 %v1834, %v1830
        %v1947 = vpack.c.b16 %v1839, %v1835
        %v1948 = vpack.c.b16 %v1840, %v1836
        %v1949 = vpack.c.b16 %v1841, %v1837
        %v1950 = vpack.c.b16 %v1842, %v1838
        %v1951 = vpack.c.b16 %v1847, %v1843
        %v1952 = vpack.c.b16 %v1848, %v1844
        %v1953 = vpack.c.b16 %v1849, %v1845
        %v1954 = vpack.c.b16 %v1850, %v1846
        %v1955 = vpack.c.b16 %v1855, %v1851
        %v1956 = vpack.c.b16 %v1856, %v1852
        %v1957 = vpack.c.b16 %v1857, %v1853
        %v1958 = vpack.c.b16 %v1858, %v1854
        %v1959 = vpack.c.b16 %v1863, %v1859
        %v1960 = vpack.c.b16 %v1864, %v1860
        %v1961 = vpack.c.b16 %v1865, %v1861
        %v1962 = vpack.c.b16 %v1866, %v1862
        %v1963 = vpack.c.b16 %v1871, %v1867
        %v1964 = vpack.c.b16 %v1872, %v1868
        %v1965 = vpack.c.b16 %v1873, %v1869
        %v1966 = vpack.c.b16 %v1874, %v1870
        %v1967 = vpack.c.b16 %v1879, %v1875
        %v1968 = vpack.c.b16 %v1880, %v1876
        %v1969 = vpack.c.b16 %v1881, %v1877
        %v1970 = vpack.c.b16 %v1882, %v1878
        %v1971 = vpack.c.b16 %v1887, %v1883
        %v1972 = vpack.c.b16 %v1888, %v1884
        %v1973 = vpack.c.b16 %v1889, %v1885
        %v1974 = vpack.c.b16 %v1890, %v1886
        %v1975 = vpack.c.b16 %v1895, %v1891
        %v1976 = vpack.c.b16 %v1896, %v1892
        %v1977 = vpack.c.b16 %v1897, %v1893
        %v1978 = vpack.c.b16 %v1898, %v1894
        %v1979 = vpack.c.b16 %v1903, %v1899
        %v1980 = vpack.c.b16 %v1904, %v1900
        %v1981 = vpack.c.b16 %v1905, %v1901
        %v1982 = vpack.c.b16 %v1906, %v1902
        %v1983 = vpack.c.b16 %v1911, %v1907
        %v1984 = vpack.c.b16 %v1912, %v1908
        %v1985 = vpack.c.b16 %v1913, %v1909
        %v1986 = vpack.c.b16 %v1914, %v1910
        %v1987 = vpack.c.b16 %v1919, %v1915
        %v1988 = vpack.c.b16 %v1920, %v1916
        %v1989 = vpack.c.b16 %v1921, %v1917
        %v1990 = vpack.c.b16 %v1922, %v1918
        %v1991 = vpack.c.b16 %v1927, %v1923
        %v1992 = vpack.c.b16 %v1928, %v1924
        %v1993 = vpack.c.b16 %v1929, %v1925
        %v1994 = vpack.c.b16 %v1930, %v1926
        %2059 = vmatprep.subr.bf16.mxu0 %v1960
        %2060 = vmatpush1.bf16.msra.mxu0 %v1959
        %2061 = vmatprep.subr.bf16.mxu0 %v1956
        %2062 = vmatpush1.bf16.msra.mxu0 %v1955
        %2063 = vmatprep.subr.bf16.mxu0 %v1952
        %2064 = vmatpush1.bf16.msra.mxu0 %v1951
        %2065 = vmatprep.subr.bf16.mxu0 %v1948
        %2066 = vmatpush1.bf16.msra.mxu0 %v1947
        %2067 = vmatprep.subr.bf16.mxu0 %v1944
        %2068 = vmatpush1.bf16.msra.mxu0 %v1943
        %2069 = vmatprep.subr.bf16.mxu0 %v1940
        %2070 = vmatpush1.bf16.msra.mxu0 %v1939
        %2071 = vmatprep.subr.bf16.mxu0 %v1936
        %2072 = vmatpush1.bf16.msra.mxu0 %v1935
        %2073 = vmatprep.subr.bf16.mxu0 %v1932
        %2074 = vmatpush1.bf16.msra.mxu0 %v1931
        %2075 = vmatprep.subr.bf16.mxu0 %v1992
        %2076 = vmatpush2.bf16.msra.mxu0 %v1991
        %2077 = vmatprep.subr.bf16.mxu0 %v1988
        %2078 = vmatpush2.bf16.msra.mxu0 %v1987
        %2079 = vmatprep.subr.bf16.mxu0 %v1984
        %2080 = vmatpush2.bf16.msra.mxu0 %v1983
        %2081 = vmatprep.subr.bf16.mxu0 %v1980
        %2082 = vmatpush2.bf16.msra.mxu0 %v1979
        %2083 = vmatprep.subr.bf16.mxu0 %v1976
        %2084 = vmatpush2.bf16.msra.mxu0 %v1975
        %2085 = vmatprep.subr.bf16.mxu0 %v1972
        %2086 = vmatpush2.bf16.msra.mxu0 %v1971
        %2087 = vmatprep.subr.bf16.mxu0 %v1968
        %2088 = vmatpush2.bf16.msra.mxu0 %v1967
        %2089 = vmatprep.subr.bf16.mxu0 %v1964
        %2090 = vmatpush2.bf16.msra.mxu0 %v1963
        %2091 = vmatprep.mubr.bf16.mxu0 %v1652
        %2092 = vmatmul.mubr.bf16.gmra.mxu0 %v1651
        %v2093 = vpop.f32.mrf.mxu0
        %v2094 = vadd.f32 %v1722, %v2093
        %v2095 = vpop.f32.mrf.mxu0
        %v2096 = vadd.f32 %v1726, %v2095
        %v2097 = vpop.f32.mrf.mxu0
        %v2098 = vpop.f32.mrf.mxu0
        %2099 = vdwg.mxu0
        %2100 = vmatprep.subr.bf16.mxu0 %v1962
        %2101 = vmatpush1.bf16.msra.mxu0 %v1961
        %2102 = vmatprep.subr.bf16.mxu0 %v1958
        %2103 = vmatpush1.bf16.msra.mxu0 %v1957
        %2104 = vmatprep.subr.bf16.mxu0 %v1954
        %2105 = vmatpush1.bf16.msra.mxu0 %v1953
        %2106 = vmatprep.subr.bf16.mxu0 %v1950
        %2107 = vmatpush1.bf16.msra.mxu0 %v1949
        %2108 = vmatprep.subr.bf16.mxu0 %v1946
        %2109 = vmatpush1.bf16.msra.mxu0 %v1945
        %2110 = vmatprep.subr.bf16.mxu0 %v1942
        %2111 = vmatpush1.bf16.msra.mxu0 %v1941
        %2112 = vmatprep.subr.bf16.mxu0 %v1938
        %2113 = vmatpush1.bf16.msra.mxu0 %v1937
        %2114 = vmatprep.subr.bf16.mxu0 %v1934
        %2115 = vmatpush1.bf16.msra.mxu0 %v1933
        %2116 = vmatprep.subr.bf16.mxu0 %v1994
        %2117 = vmatpush2.bf16.msra.mxu0 %v1993
        %2118 = vmatprep.subr.bf16.mxu0 %v1990
        %2119 = vmatpush2.bf16.msra.mxu0 %v1989
        %2120 = vmatprep.subr.bf16.mxu0 %v1986
        %2121 = vmatpush2.bf16.msra.mxu0 %v1985
        %2122 = vmatprep.subr.bf16.mxu0 %v1982
        %2123 = vmatpush2.bf16.msra.mxu0 %v1981
        %2124 = vmatprep.subr.bf16.mxu0 %v1978
        %2125 = vmatpush2.bf16.msra.mxu0 %v1977
        %2126 = vmatprep.subr.bf16.mxu0 %v1974
        %2127 = vmatpush2.bf16.msra.mxu0 %v1973
        %2128 = vmatprep.subr.bf16.mxu0 %v1970
        %2129 = vmatpush2.bf16.msra.mxu0 %v1969
        %2130 = vmatprep.subr.bf16.mxu0 %v1966
        %2131 = vmatpush2.bf16.msra.mxu0 %v1965
        %2132 = vmatprep.mubr.bf16.mxu0 %v1652
        %2133 = vmatmul.mubr.bf16.gmra.mxu0 %v1651
        %v2134 = vpop.f32.mrf.mxu0
        %v2135 = vadd.f32 %v1730, %v2134
        %v2136 = vpop.f32.mrf.mxu0
        %v2137 = vadd.f32 %v1734, %v2136
        %v2138 = vpop.f32.mrf.mxu0
        %v2139 = vpop.f32.mrf.mxu0
        %2140 = vdwg.mxu0
        %v2141 = vxor.u32 %v2094, 2147483648
        %v2142 = vxor.u32 %v2096, 2147483648
        %v2143 = vxor.u32 %v2135, 2147483648
        %v2144 = vmul.f32 %v2141, 1.442695
        %v2145 = vpow.pop %v2144
        %v2146 = vmul.f32 %v2142, 1.442695
        %v2147 = vpow.pop %v2146
        %v2148 = vmul.f32 %v2143, 1.442695
        %v2149 = vpow.pop %v2148
        %v2150 = vadd.f32 %v2145, 1.0
        %v2151 = vadd.f32 %v2147, 1.0
        %v2152 = vadd.f32 %v2149, 1.0
        %v2153 = vrcp.pop %v2150
        %v2154 = vmul.f32 1.0, %v2153
        %v2155 = vrcp.pop %v2151
        %v2156 = vmul.f32 1.0, %v2155
        %v2157 = vrcp.pop %v2152
        %v2158 = vmul.f32 1.0, %v2157
        %v2159 = vtanh.pop %v2137
        %v2160 = vmul.f32 %v2156, %v1340
        %v2161 = vmul.f32 %v2154, %v2159
        %v2162 = vadd.f32 %v2160, %v2161
        %v2163 = vtanh.pop %v2162
        %v2164 = vmul.f32 %v2158, %v2163
        %s2165 = scalar_lea.vmem %s494, 8 [#allocation14]
        %2166 = vst [vmem:[%s2165] sm:$0xff] %v2164
        %s2167 = scalar_lea.vmem %s438, 64 [#allocation2]
        %v2168 = vld [vmem:[%s2167] sm:$0xff]
        %v2169 = vld [vmem:[%s2167 + $0x8] sm:$0xff]
        %v2170 = vld [vmem:[%s2167 + $0x10] sm:$0xff]
        %v2171 = vld [vmem:[%s2167 + $0x18] sm:$0xff]
        %v2172 = vld [vmem:[#allocation11] sm:$0xff]
        %v2173 = vld [vmem:[#allocation11 + $0x8] sm:$0xff]
        %v2174 = vld [vmem:[#allocation11 + $0x10] sm:$0xff]
        %v2175 = vld [vmem:[#allocation11 + $0x18] sm:$0xff]
        %v2176 = vld [vmem:[#allocation11 + $0x20] sm:$0xff]
        %v2177 = vld [vmem:[#allocation11 + $0x28] sm:$0xff]
        %v2178 = vld [vmem:[#allocation11 + $0x30] sm:$0xff]
        %v2179 = vld [vmem:[#allocation11 + $0x38] sm:$0xff]
        %v2180 = vld [vmem:[#allocation11 + $0x40] sm:$0xff]
        %v2181 = vld [vmem:[#allocation11 + $0x48] sm:$0xff]
        %v2182 = vld [vmem:[#allocation11 + $0x50] sm:$0xff]
        %v2183 = vld [vmem:[#allocation11 + $0x58] sm:$0xff]
        %v2184 = vld [vmem:[#allocation11 + $0x60] sm:$0xff]
        %v2185 = vld [vmem:[#allocation11 + $0x68] sm:$0xff]
        %v2186 = vld [vmem:[#allocation11 + $0x70] sm:$0xff]
        %v2187 = vld [vmem:[#allocation11 + $0x78] sm:$0xff]
        %v2188 = vld [vmem:[#allocation11 + $0x80] sm:$0xff]
        %v2189 = vld [vmem:[#allocation11 + $0x88] sm:$0xff]
        %v2190 = vld [vmem:[#allocation11 + $0x90] sm:$0xff]
        %v2191 = vld [vmem:[#allocation11 + $0x98] sm:$0xff]
        %v2192 = vld [vmem:[#allocation11 + $0xa0] sm:$0xff]
        %v2193 = vld [vmem:[#allocation11 + $0xa8] sm:$0xff]
        %v2194 = vld [vmem:[#allocation11 + $0xb0] sm:$0xff]
        %v2195 = vld [vmem:[#allocation11 + $0xb8] sm:$0xff]
        %v2196 = vld [vmem:[#allocation11 + $0xc0] sm:$0xff]
        %v2197 = vld [vmem:[#allocation11 + $0xc8] sm:$0xff]
        %v2198 = vld [vmem:[#allocation11 + $0xd0] sm:$0xff]
        %v2199 = vld [vmem:[#allocation11 + $0xd8] sm:$0xff]
        %v2200 = vld [vmem:[#allocation11 + $0xe0] sm:$0xff]
        %v2201 = vld [vmem:[#allocation11 + $0xe8] sm:$0xff]
        %v2202 = vld [vmem:[#allocation11 + $0xf0] sm:$0xff]
        %v2203 = vld [vmem:[#allocation11 + $0xf8] sm:$0xff]
        %v2236 = vunpack.c.l.b16 %v2172
        %v2237 = vunpack.c.h.b16 %v2172
        %v2238 = vunpack.c.l.b16 %v2173
        %v2239 = vunpack.c.h.b16 %v2173
        %v2240 = vunpack.c.l.b16 %v2174
        %v2241 = vunpack.c.h.b16 %v2174
        %v2242 = vunpack.c.l.b16 %v2175
        %v2243 = vunpack.c.h.b16 %v2175
        %v2244 = vunpack.c.l.b16 %v2176
        %v2245 = vunpack.c.h.b16 %v2176
        %v2246 = vunpack.c.l.b16 %v2177
        %v2247 = vunpack.c.h.b16 %v2177
        %v2248 = vunpack.c.l.b16 %v2178
        %v2249 = vunpack.c.h.b16 %v2178
        %v2250 = vunpack.c.l.b16 %v2179
        %v2251 = vunpack.c.h.b16 %v2179
        %v2252 = vunpack.c.l.b16 %v2180
        %v2253 = vunpack.c.h.b16 %v2180
        %v2254 = vunpack.c.l.b16 %v2181
        %v2255 = vunpack.c.h.b16 %v2181
        %v2256 = vunpack.c.l.b16 %v2182
        %v2257 = vunpack.c.h.b16 %v2182
        %v2258 = vunpack.c.l.b16 %v2183
        %v2259 = vunpack.c.h.b16 %v2183
        %v2260 = vunpack.c.l.b16 %v2184
        %v2261 = vunpack.c.h.b16 %v2184
        %v2262 = vunpack.c.l.b16 %v2185
        %v2263 = vunpack.c.h.b16 %v2185
        %v2264 = vunpack.c.l.b16 %v2186
        %v2265 = vunpack.c.h.b16 %v2186
        %v2266 = vunpack.c.l.b16 %v2187
        %v2267 = vunpack.c.h.b16 %v2187
        %v2268 = vunpack.c.l.b16 %v2188
        %v2269 = vunpack.c.h.b16 %v2188
        %v2270 = vunpack.c.l.b16 %v2189
        %v2271 = vunpack.c.h.b16 %v2189
        %v2272 = vunpack.c.l.b16 %v2190
        %v2273 = vunpack.c.h.b16 %v2190
        %v2274 = vunpack.c.l.b16 %v2191
        %v2275 = vunpack.c.h.b16 %v2191
        %v2276 = vunpack.c.l.b16 %v2192
        %v2277 = vunpack.c.h.b16 %v2192
        %v2278 = vunpack.c.l.b16 %v2193
        %v2279 = vunpack.c.h.b16 %v2193
        %v2280 = vunpack.c.l.b16 %v2194
        %v2281 = vunpack.c.h.b16 %v2194
        %v2282 = vunpack.c.l.b16 %v2195
        %v2283 = vunpack.c.h.b16 %v2195
        %v2284 = vunpack.c.l.b16 %v2196
        %v2285 = vunpack.c.h.b16 %v2196
        %v2286 = vunpack.c.l.b16 %v2197
        %v2287 = vunpack.c.h.b16 %v2197
        %v2288 = vunpack.c.l.b16 %v2198
        %v2289 = vunpack.c.h.b16 %v2198
        %v2290 = vunpack.c.l.b16 %v2199
        %v2291 = vunpack.c.h.b16 %v2199
        %v2292 = vunpack.c.l.b16 %v2200
        %v2293 = vunpack.c.h.b16 %v2200
        %v2294 = vunpack.c.l.b16 %v2201
        %v2295 = vunpack.c.h.b16 %v2201
        %v2296 = vunpack.c.l.b16 %v2202
        %v2297 = vunpack.c.h.b16 %v2202
        %v2298 = vunpack.c.l.b16 %v2203
        %v2299 = vunpack.c.h.b16 %v2203
        %v2300 = vpack.c.b16 %v2240, %v2236
        %v2301 = vpack.c.b16 %v2241, %v2237
        %v2302 = vpack.c.b16 %v2242, %v2238
        %v2303 = vpack.c.b16 %v2243, %v2239
        %v2304 = vpack.c.b16 %v2248, %v2244
        %v2305 = vpack.c.b16 %v2249, %v2245
        %v2306 = vpack.c.b16 %v2250, %v2246
        %v2307 = vpack.c.b16 %v2251, %v2247
        %v2308 = vpack.c.b16 %v2256, %v2252
        %v2309 = vpack.c.b16 %v2257, %v2253
        %v2310 = vpack.c.b16 %v2258, %v2254
        %v2311 = vpack.c.b16 %v2259, %v2255
        %v2312 = vpack.c.b16 %v2264, %v2260
        %v2313 = vpack.c.b16 %v2265, %v2261
        %v2314 = vpack.c.b16 %v2266, %v2262
        %v2315 = vpack.c.b16 %v2267, %v2263
        %v2316 = vpack.c.b16 %v2272, %v2268
        %v2317 = vpack.c.b16 %v2273, %v2269
        %v2318 = vpack.c.b16 %v2274, %v2270
        %v2319 = vpack.c.b16 %v2275, %v2271
        %v2320 = vpack.c.b16 %v2280, %v2276
        %v2321 = vpack.c.b16 %v2281, %v2277
        %v2322 = vpack.c.b16 %v2282, %v2278
        %v2323 = vpack.c.b16 %v2283, %v2279
        %v2324 = vpack.c.b16 %v2288, %v2284
        %v2325 = vpack.c.b16 %v2289, %v2285
        %v2326 = vpack.c.b16 %v2290, %v2286
        %v2327 = vpack.c.b16 %v2291, %v2287
        %v2328 = vpack.c.b16 %v2296, %v2292
        %v2329 = vpack.c.b16 %v2297, %v2293
        %v2330 = vpack.c.b16 %v2298, %v2294
        %v2331 = vpack.c.b16 %v2299, %v2295
        %2364 = vmatprep.subr.bf16.mxu0 %v2329
        %2365 = vmatpush1.bf16.msra.mxu0 %v2328
        %2366 = vmatprep.subr.bf16.mxu0 %v2325
        %2367 = vmatpush1.bf16.msra.mxu0 %v2324
        %2368 = vmatprep.subr.bf16.mxu0 %v2321
        %2369 = vmatpush1.bf16.msra.mxu0 %v2320
        %2370 = vmatprep.subr.bf16.mxu0 %v2317
        %2371 = vmatpush1.bf16.msra.mxu0 %v2316
        %2372 = vmatprep.subr.bf16.mxu0 %v2313
        %2373 = vmatpush1.bf16.msra.mxu0 %v2312
        %2374 = vmatprep.subr.bf16.mxu0 %v2309
        %2375 = vmatpush1.bf16.msra.mxu0 %v2308
        %2376 = vmatprep.subr.bf16.mxu0 %v2305
        %2377 = vmatpush1.bf16.msra.mxu0 %v2304
        %2378 = vmatprep.subr.bf16.mxu0 %v2301
        %2379 = vmatpush1.bf16.msra.mxu0 %v2300
        %2380 = vmatprep.subr.bf16.mxu0 0
        %2381 = vmatpush2.bf16.msra.mxu0 0
        %2382 = vmatprep.subr.bf16.mxu0 0
        %2383 = vmatpush2.bf16.msra.mxu0 0
        %2384 = vmatprep.subr.bf16.mxu0 0
        %2385 = vmatpush2.bf16.msra.mxu0 0
        %2386 = vmatprep.subr.bf16.mxu0 0
        %2387 = vmatpush2.bf16.msra.mxu0 0
        %2388 = vmatprep.subr.bf16.mxu0 0
        %2389 = vmatpush2.bf16.msra.mxu0 0
        %2390 = vmatprep.subr.bf16.mxu0 0
        %2391 = vmatpush2.bf16.msra.mxu0 0
        %2392 = vmatprep.subr.bf16.mxu0 0
        %2393 = vmatpush2.bf16.msra.mxu0 0
        %2394 = vmatprep.subr.bf16.mxu0 0
        %2395 = vmatpush2.bf16.msra.mxu0 0
        %2396 = vmatprep.mubr.bf16.mxu0 0
        %2397 = vmatmul.mubr.bf16.gmra.mxu0 %v1651
        %v2398 = vpop.f32.mrf.mxu0
        %v2399 = vadd.f32 0.0, %v2398
        %v2400 = vpop.f32.mrf.mxu0
        %v2401 = vadd.f32 0.0, %v2400
        %v2402 = vpop.f32.mrf.mxu0
        %v2403 = vpop.f32.mrf.mxu0
        %2404 = vdwg.mxu0
        %2405 = vmatprep.subr.bf16.mxu0 %v2331
        %2406 = vmatpush1.bf16.msra.mxu0 %v2330
        %2407 = vmatprep.subr.bf16.mxu0 %v2327
        %2408 = vmatpush1.bf16.msra.mxu0 %v2326
        %2409 = vmatprep.subr.bf16.mxu0 %v2323
        %2410 = vmatpush1.bf16.msra.mxu0 %v2322
        %2411 = vmatprep.subr.bf16.mxu0 %v2319
        %2412 = vmatpush1.bf16.msra.mxu0 %v2318
        %2413 = vmatprep.subr.bf16.mxu0 %v2315
        %2414 = vmatpush1.bf16.msra.mxu0 %v2314
        %2415 = vmatprep.subr.bf16.mxu0 %v2311
        %2416 = vmatpush1.bf16.msra.mxu0 %v2310
        %2417 = vmatprep.subr.bf16.mxu0 %v2307
        %2418 = vmatpush1.bf16.msra.mxu0 %v2306
        %2419 = vmatprep.subr.bf16.mxu0 %v2303
        %2420 = vmatpush1.bf16.msra.mxu0 %v2302
        %2421 = vmatprep.subr.bf16.mxu0 0
        %2422 = vmatpush2.bf16.msra.mxu0 0
        %2423 = vmatprep.subr.bf16.mxu0 0
        %2424 = vmatpush2.bf16.msra.mxu0 0
        %2425 = vmatprep.subr.bf16.mxu0 0
        %2426 = vmatpush2.bf16.msra.mxu0 0
        %2427 = vmatprep.subr.bf16.mxu0 0
        %2428 = vmatpush2.bf16.msra.mxu0 0
        %2429 = vmatprep.subr.bf16.mxu0 0
        %2430 = vmatpush2.bf16.msra.mxu0 0
        %2431 = vmatprep.subr.bf16.mxu0 0
        %2432 = vmatpush2.bf16.msra.mxu0 0
        %2433 = vmatprep.subr.bf16.mxu0 0
        %2434 = vmatpush2.bf16.msra.mxu0 0
        %2435 = vmatprep.subr.bf16.mxu0 0
        %2436 = vmatpush2.bf16.msra.mxu0 0
        %2437 = vmatprep.mubr.bf16.mxu0 0
        %2438 = vmatmul.mubr.bf16.gmra.mxu0 %v1651
        %v2439 = vpop.f32.mrf.mxu0
        %v2440 = vadd.f32 0.0, %v2439
        %v2441 = vpop.f32.mrf.mxu0
        %v2442 = vadd.f32 0.0, %v2441
        %v2443 = vpop.f32.mrf.mxu0
        %v2444 = vpop.f32.mrf.mxu0
        %2445 = vdwg.mxu0
        %v2446 = vadd.f32 %v2168, %v2399
        %v2447 = vadd.f32 %v2169, %v2401
        %v2448 = vadd.f32 %v2170, %v2440
        %v2449 = vadd.f32 %v2171, %v2442
        %v2450 = vxor.u32 %v2446, 2147483648
        %v2451 = vxor.u32 %v2447, 2147483648
        %v2452 = vxor.u32 %v2448, 2147483648
        %v2453 = vmul.f32 %v2450, 1.442695
        %v2454 = vpow.pop %v2453
        %v2455 = vmul.f32 %v2451, 1.442695
        %v2456 = vpow.pop %v2455
        %v2457 = vmul.f32 %v2452, 1.442695
        %v2458 = vpow.pop %v2457
        %v2459 = vadd.f32 %v2454, 1.0
        %v2460 = vadd.f32 %v2456, 1.0
        %v2461 = vadd.f32 %v2458, 1.0
        %v2462 = vrcp.pop %v2459
        %v2463 = vmul.f32 1.0, %v2462
        %v2464 = vrcp.pop %v2460
        %v2465 = vmul.f32 1.0, %v2464
        %v2466 = vrcp.pop %v2461
        %v2467 = vmul.f32 1.0, %v2466
        %v2468 = vtanh.pop %v2449
        %v2469 = vmul.f32 %v2465, %v1648
        %v2470 = vmul.f32 %v2463, %v2468
        %v2471 = vadd.f32 %v2469, %v2470
        %v2472 = vtanh.pop %v2471
        %v2473 = vmul.f32 %v2467, %v2472
        %v2474 = vpack.c.bf16 %v2473, %v2473
        %v2475 = vpack.c.bf16 %v2164, %v2164
        %v2476 = vld [vmem:[#allocation13] sm:$0xff]
        %v2477 = vld [vmem:[#allocation13 + $0x8] sm:$0xff]
        %v2478 = vld [vmem:[#allocation13 + $0x10] sm:$0xff]
        %v2479 = vld [vmem:[#allocation13 + $0x18] sm:$0xff]
        %v2480 = vld [vmem:[#allocation13 + $0x20] sm:$0xff]
        %v2481 = vld [vmem:[#allocation13 + $0x28] sm:$0xff]
        %v2482 = vld [vmem:[#allocation13 + $0x30] sm:$0xff]
        %v2483 = vld [vmem:[#allocation13 + $0x38] sm:$0xff]
        %v2484 = vld [vmem:[#allocation13 + $0x40] sm:$0xff]
        %v2485 = vld [vmem:[#allocation13 + $0x48] sm:$0xff]
        %v2486 = vld [vmem:[#allocation13 + $0x50] sm:$0xff]
        %v2487 = vld [vmem:[#allocation13 + $0x58] sm:$0xff]
        %v2488 = vld [vmem:[#allocation13 + $0x60] sm:$0xff]
        %v2489 = vld [vmem:[#allocation13 + $0x68] sm:$0xff]
        %v2490 = vld [vmem:[#allocation13 + $0x70] sm:$0xff]
        %v2491 = vld [vmem:[#allocation13 + $0x78] sm:$0xff]
        %v2492 = vld [vmem:[#allocation13 + $0x80] sm:$0xff]
        %v2493 = vld [vmem:[#allocation13 + $0x88] sm:$0xff]
        %v2494 = vld [vmem:[#allocation13 + $0x90] sm:$0xff]
        %v2495 = vld [vmem:[#allocation13 + $0x98] sm:$0xff]
        %v2496 = vld [vmem:[#allocation13 + $0xa0] sm:$0xff]
        %v2497 = vld [vmem:[#allocation13 + $0xa8] sm:$0xff]
        %v2498 = vld [vmem:[#allocation13 + $0xb0] sm:$0xff]
        %v2499 = vld [vmem:[#allocation13 + $0xb8] sm:$0xff]
        %v2500 = vld [vmem:[#allocation13 + $0xc0] sm:$0xff]
        %v2501 = vld [vmem:[#allocation13 + $0xc8] sm:$0xff]
        %v2502 = vld [vmem:[#allocation13 + $0xd0] sm:$0xff]
        %v2503 = vld [vmem:[#allocation13 + $0xd8] sm:$0xff]
        %v2504 = vld [vmem:[#allocation13 + $0xe0] sm:$0xff]
        %v2505 = vld [vmem:[#allocation13 + $0xe8] sm:$0xff]
        %v2506 = vld [vmem:[#allocation13 + $0xf0] sm:$0xff]
        %v2507 = vld [vmem:[#allocation13 + $0xf8] sm:$0xff]
        %v2508 = vld [vmem:[#allocation13 + $0x100] sm:$0xff]
        %v2509 = vld [vmem:[#allocation13 + $0x108] sm:$0xff]
        %v2510 = vld [vmem:[#allocation13 + $0x110] sm:$0xff]
        %v2511 = vld [vmem:[#allocation13 + $0x118] sm:$0xff]
        %v2512 = vld [vmem:[#allocation13 + $0x120] sm:$0xff]
        %v2513 = vld [vmem:[#allocation13 + $0x128] sm:$0xff]
        %v2514 = vld [vmem:[#allocation13 + $0x130] sm:$0xff]
        %v2515 = vld [vmem:[#allocation13 + $0x138] sm:$0xff]
        %v2516 = vld [vmem:[#allocation13 + $0x140] sm:$0xff]
        %v2517 = vld [vmem:[#allocation13 + $0x148] sm:$0xff]
        %v2518 = vld [vmem:[#allocation13 + $0x150] sm:$0xff]
        %v2519 = vld [vmem:[#allocation13 + $0x158] sm:$0xff]
        %v2520 = vld [vmem:[#allocation13 + $0x160] sm:$0xff]
        %v2521 = vld [vmem:[#allocation13 + $0x168] sm:$0xff]
        %v2522 = vld [vmem:[#allocation13 + $0x170] sm:$0xff]
        %v2523 = vld [vmem:[#allocation13 + $0x178] sm:$0xff]
        %v2524 = vld [vmem:[#allocation13 + $0x180] sm:$0xff]
        %v2525 = vld [vmem:[#allocation13 + $0x188] sm:$0xff]
        %v2526 = vld [vmem:[#allocation13 + $0x190] sm:$0xff]
        %v2527 = vld [vmem:[#allocation13 + $0x198] sm:$0xff]
        %v2528 = vld [vmem:[#allocation13 + $0x1a0] sm:$0xff]
        %v2529 = vld [vmem:[#allocation13 + $0x1a8] sm:$0xff]
        %v2530 = vld [vmem:[#allocation13 + $0x1b0] sm:$0xff]
        %v2531 = vld [vmem:[#allocation13 + $0x1b8] sm:$0xff]
        %v2532 = vld [vmem:[#allocation13 + $0x1c0] sm:$0xff]
        %v2533 = vld [vmem:[#allocation13 + $0x1c8] sm:$0xff]
        %v2534 = vld [vmem:[#allocation13 + $0x1d0] sm:$0xff]
        %v2535 = vld [vmem:[#allocation13 + $0x1d8] sm:$0xff]
        %v2536 = vld [vmem:[#allocation13 + $0x1e0] sm:$0xff]
        %v2537 = vld [vmem:[#allocation13 + $0x1e8] sm:$0xff]
        %v2538 = vld [vmem:[#allocation13 + $0x1f0] sm:$0xff]
        %v2539 = vld [vmem:[#allocation13 + $0x1f8] sm:$0xff]
        %v2540 = vld [vmem:[%s7] sm:$0xf]
        %v2542 = vlaneseq
        %v2543 = vshrl.u32 %v2542, 7
        %v2544 = vsub.s32 0, %v2543
        %v2545 = vrot.slane %v2540, %v2544
        %v2546 = vlaneseq
        %v2547 = vshrl.u32 %v2546, 7
        %v2548 = vsub.s32 1, %v2547
        %v2549 = vrot.slane %v2540, %v2548
        %v2550 = vlaneseq
        %v2551 = vshrl.u32 %v2550, 7
        %v2552 = vsub.s32 2, %v2551
        %v2553 = vrot.slane %v2540, %v2552
        %v2554 = vlaneseq
        %v2555 = vshrl.u32 %v2554, 7
        %v2556 = vsub.s32 3, %v2555
        %v2557 = vrot.slane %v2540, %v2556
        %v2626 = vunpack.c.l.b16 %v2476
        %v2627 = vunpack.c.h.b16 %v2476
        %v2628 = vunpack.c.l.b16 %v2477
        %v2629 = vunpack.c.h.b16 %v2477
        %v2630 = vunpack.c.l.b16 %v2478
        %v2631 = vunpack.c.h.b16 %v2478
        %v2632 = vunpack.c.l.b16 %v2479
        %v2633 = vunpack.c.h.b16 %v2479
        %v2634 = vunpack.c.l.b16 %v2480
        %v2635 = vunpack.c.h.b16 %v2480
        %v2636 = vunpack.c.l.b16 %v2481
        %v2637 = vunpack.c.h.b16 %v2481
        %v2638 = vunpack.c.l.b16 %v2482
        %v2639 = vunpack.c.h.b16 %v2482
        %v2640 = vunpack.c.l.b16 %v2483
        %v2641 = vunpack.c.h.b16 %v2483
        %v2642 = vunpack.c.l.b16 %v2484
        %v2643 = vunpack.c.h.b16 %v2484
        %v2644 = vunpack.c.l.b16 %v2485
        %v2645 = vunpack.c.h.b16 %v2485
        %v2646 = vunpack.c.l.b16 %v2486
        %v2647 = vunpack.c.h.b16 %v2486
        %v2648 = vunpack.c.l.b16 %v2487
        %v2649 = vunpack.c.h.b16 %v2487
        %v2650 = vunpack.c.l.b16 %v2488
        %v2651 = vunpack.c.h.b16 %v2488
        %v2652 = vunpack.c.l.b16 %v2489
        %v2653 = vunpack.c.h.b16 %v2489
        %v2654 = vunpack.c.l.b16 %v2490
        %v2655 = vunpack.c.h.b16 %v2490
        %v2656 = vunpack.c.l.b16 %v2491
        %v2657 = vunpack.c.h.b16 %v2491
        %v2658 = vunpack.c.l.b16 %v2492
        %v2659 = vunpack.c.h.b16 %v2492
        %v2660 = vunpack.c.l.b16 %v2493
        %v2661 = vunpack.c.h.b16 %v2493
        %v2662 = vunpack.c.l.b16 %v2494
        %v2663 = vunpack.c.h.b16 %v2494
        %v2664 = vunpack.c.l.b16 %v2495
        %v2665 = vunpack.c.h.b16 %v2495
        %v2666 = vunpack.c.l.b16 %v2496
        %v2667 = vunpack.c.h.b16 %v2496
        %v2668 = vunpack.c.l.b16 %v2497
        %v2669 = vunpack.c.h.b16 %v2497
        %v2670 = vunpack.c.l.b16 %v2498
        %v2671 = vunpack.c.h.b16 %v2498
        %v2672 = vunpack.c.l.b16 %v2499
        %v2673 = vunpack.c.h.b16 %v2499
        %v2674 = vunpack.c.l.b16 %v2500
        %v2675 = vunpack.c.h.b16 %v2500
        %v2676 = vunpack.c.l.b16 %v2501
        %v2677 = vunpack.c.h.b16 %v2501
        %v2678 = vunpack.c.l.b16 %v2502
        %v2679 = vunpack.c.h.b16 %v2502
        %v2680 = vunpack.c.l.b16 %v2503
        %v2681 = vunpack.c.h.b16 %v2503
        %v2682 = vunpack.c.l.b16 %v2504
        %v2683 = vunpack.c.h.b16 %v2504
        %v2684 = vunpack.c.l.b16 %v2505
        %v2685 = vunpack.c.h.b16 %v2505
        %v2686 = vunpack.c.l.b16 %v2506
        %v2687 = vunpack.c.h.b16 %v2506
        %v2688 = vunpack.c.l.b16 %v2507
        %v2689 = vunpack.c.h.b16 %v2507
        %v2690 = vunpack.c.l.b16 %v2508
        %v2691 = vunpack.c.h.b16 %v2508
        %v2692 = vunpack.c.l.b16 %v2509
        %v2693 = vunpack.c.h.b16 %v2509
        %v2694 = vunpack.c.l.b16 %v2510
        %v2695 = vunpack.c.h.b16 %v2510
        %v2696 = vunpack.c.l.b16 %v2511
        %v2697 = vunpack.c.h.b16 %v2511
        %v2698 = vunpack.c.l.b16 %v2512
        %v2699 = vunpack.c.h.b16 %v2512
        %v2700 = vunpack.c.l.b16 %v2513
        %v2701 = vunpack.c.h.b16 %v2513
        %v2702 = vunpack.c.l.b16 %v2514
        %v2703 = vunpack.c.h.b16 %v2514
        %v2704 = vunpack.c.l.b16 %v2515
        %v2705 = vunpack.c.h.b16 %v2515
        %v2706 = vunpack.c.l.b16 %v2516
        %v2707 = vunpack.c.h.b16 %v2516
        %v2708 = vunpack.c.l.b16 %v2517
        %v2709 = vunpack.c.h.b16 %v2517
        %v2710 = vunpack.c.l.b16 %v2518
        %v2711 = vunpack.c.h.b16 %v2518
        %v2712 = vunpack.c.l.b16 %v2519
        %v2713 = vunpack.c.h.b16 %v2519
        %v2714 = vunpack.c.l.b16 %v2520
        %v2715 = vunpack.c.h.b16 %v2520
        %v2716 = vunpack.c.l.b16 %v2521
        %v2717 = vunpack.c.h.b16 %v2521
        %v2718 = vunpack.c.l.b16 %v2522
        %v2719 = vunpack.c.h.b16 %v2522
        %v2720 = vunpack.c.l.b16 %v2523
        %v2721 = vunpack.c.h.b16 %v2523
        %v2722 = vunpack.c.l.b16 %v2524
        %v2723 = vunpack.c.h.b16 %v2524
        %v2724 = vunpack.c.l.b16 %v2525
        %v2725 = vunpack.c.h.b16 %v2525
        %v2726 = vunpack.c.l.b16 %v2526
        %v2727 = vunpack.c.h.b16 %v2526
        %v2728 = vunpack.c.l.b16 %v2527
        %v2729 = vunpack.c.h.b16 %v2527
        %v2730 = vunpack.c.l.b16 %v2528
        %v2731 = vunpack.c.h.b16 %v2528
        %v2732 = vunpack.c.l.b16 %v2529
        %v2733 = vunpack.c.h.b16 %v2529
        %v2734 = vunpack.c.l.b16 %v2530
        %v2735 = vunpack.c.h.b16 %v2530
        %v2736 = vunpack.c.l.b16 %v2531
        %v2737 = vunpack.c.h.b16 %v2531
        %v2738 = vunpack.c.l.b16 %v2532
        %v2739 = vunpack.c.h.b16 %v2532
        %v2740 = vunpack.c.l.b16 %v2533
        %v2741 = vunpack.c.h.b16 %v2533
        %v2742 = vunpack.c.l.b16 %v2534
        %v2743 = vunpack.c.h.b16 %v2534
        %v2744 = vunpack.c.l.b16 %v2535
        %v2745 = vunpack.c.h.b16 %v2535
        %v2746 = vunpack.c.l.b16 %v2536
        %v2747 = vunpack.c.h.b16 %v2536
        %v2748 = vunpack.c.l.b16 %v2537
        %v2749 = vunpack.c.h.b16 %v2537
        %v2750 = vunpack.c.l.b16 %v2538
        %v2751 = vunpack.c.h.b16 %v2538
        %v2752 = vunpack.c.l.b16 %v2539
        %v2753 = vunpack.c.h.b16 %v2539
        %v2754 = vpack.c.b16 %v2630, %v2626
        %v2755 = vpack.c.b16 %v2631, %v2627
        %v2756 = vpack.c.b16 %v2632, %v2628
        %v2757 = vpack.c.b16 %v2633, %v2629
        %v2758 = vpack.c.b16 %v2638, %v2634
        %v2759 = vpack.c.b16 %v2639, %v2635
        %v2760 = vpack.c.b16 %v2640, %v2636
        %v2761 = vpack.c.b16 %v2641, %v2637
        %v2762 = vpack.c.b16 %v2646, %v2642
        %v2763 = vpack.c.b16 %v2647, %v2643
        %v2764 = vpack.c.b16 %v2648, %v2644
        %v2765 = vpack.c.b16 %v2649, %v2645
        %v2766 = vpack.c.b16 %v2654, %v2650
        %v2767 = vpack.c.b16 %v2655, %v2651
        %v2768 = vpack.c.b16 %v2656, %v2652
        %v2769 = vpack.c.b16 %v2657, %v2653
        %v2770 = vpack.c.b16 %v2662, %v2658
        %v2771 = vpack.c.b16 %v2663, %v2659
        %v2772 = vpack.c.b16 %v2664, %v2660
        %v2773 = vpack.c.b16 %v2665, %v2661
        %v2774 = vpack.c.b16 %v2670, %v2666
        %v2775 = vpack.c.b16 %v2671, %v2667
        %v2776 = vpack.c.b16 %v2672, %v2668
        %v2777 = vpack.c.b16 %v2673, %v2669
        %v2778 = vpack.c.b16 %v2678, %v2674
        %v2779 = vpack.c.b16 %v2679, %v2675
        %v2780 = vpack.c.b16 %v2680, %v2676
        %v2781 = vpack.c.b16 %v2681, %v2677
        %v2782 = vpack.c.b16 %v2686, %v2682
        %v2783 = vpack.c.b16 %v2687, %v2683
        %v2784 = vpack.c.b16 %v2688, %v2684
        %v2785 = vpack.c.b16 %v2689, %v2685
        %v2786 = vpack.c.b16 %v2694, %v2690
        %v2787 = vpack.c.b16 %v2695, %v2691
        %v2788 = vpack.c.b16 %v2696, %v2692
        %v2789 = vpack.c.b16 %v2697, %v2693
        %v2790 = vpack.c.b16 %v2702, %v2698
        %v2791 = vpack.c.b16 %v2703, %v2699
        %v2792 = vpack.c.b16 %v2704, %v2700
        %v2793 = vpack.c.b16 %v2705, %v2701
        %v2794 = vpack.c.b16 %v2710, %v2706
        %v2795 = vpack.c.b16 %v2711, %v2707
        %v2796 = vpack.c.b16 %v2712, %v2708
        %v2797 = vpack.c.b16 %v2713, %v2709
        %v2798 = vpack.c.b16 %v2718, %v2714
        %v2799 = vpack.c.b16 %v2719, %v2715
        %v2800 = vpack.c.b16 %v2720, %v2716
        %v2801 = vpack.c.b16 %v2721, %v2717
        %v2802 = vpack.c.b16 %v2726, %v2722
        %v2803 = vpack.c.b16 %v2727, %v2723
        %v2804 = vpack.c.b16 %v2728, %v2724
        %v2805 = vpack.c.b16 %v2729, %v2725
        %v2806 = vpack.c.b16 %v2734, %v2730
        %v2807 = vpack.c.b16 %v2735, %v2731
        %v2808 = vpack.c.b16 %v2736, %v2732
        %v2809 = vpack.c.b16 %v2737, %v2733
        %v2810 = vpack.c.b16 %v2742, %v2738
        %v2811 = vpack.c.b16 %v2743, %v2739
        %v2812 = vpack.c.b16 %v2744, %v2740
        %v2813 = vpack.c.b16 %v2745, %v2741
        %v2814 = vpack.c.b16 %v2750, %v2746
        %v2815 = vpack.c.b16 %v2751, %v2747
        %v2816 = vpack.c.b16 %v2752, %v2748
        %v2817 = vpack.c.b16 %v2753, %v2749
        %2882 = vmatprep.subr.bf16.mxu0 %v2783
        %2883 = vmatpush1.bf16.msra.mxu0 %v2782
        %2884 = vmatprep.subr.bf16.mxu0 %v2779
        %2885 = vmatpush1.bf16.msra.mxu0 %v2778
        %2886 = vmatprep.subr.bf16.mxu0 %v2775
        %2887 = vmatpush1.bf16.msra.mxu0 %v2774
        %2888 = vmatprep.subr.bf16.mxu0 %v2771
        %2889 = vmatpush1.bf16.msra.mxu0 %v2770
        %2890 = vmatprep.subr.bf16.mxu0 %v2767
        %2891 = vmatpush1.bf16.msra.mxu0 %v2766
        %2892 = vmatprep.subr.bf16.mxu0 %v2763
        %2893 = vmatpush1.bf16.msra.mxu0 %v2762
        %2894 = vmatprep.subr.bf16.mxu0 %v2759
        %2895 = vmatpush1.bf16.msra.mxu0 %v2758
        %2896 = vmatprep.subr.bf16.mxu0 %v2755
        %2897 = vmatpush1.bf16.msra.mxu0 %v2754
        %2898 = vmatprep.subr.bf16.mxu0 %v2815
        %2899 = vmatpush2.bf16.msra.mxu0 %v2814
        %2900 = vmatprep.subr.bf16.mxu0 %v2811
        %2901 = vmatpush2.bf16.msra.mxu0 %v2810
        %2902 = vmatprep.subr.bf16.mxu0 %v2807
        %2903 = vmatpush2.bf16.msra.mxu0 %v2806
        %2904 = vmatprep.subr.bf16.mxu0 %v2803
        %2905 = vmatpush2.bf16.msra.mxu0 %v2802
        %2906 = vmatprep.subr.bf16.mxu0 %v2799
        %2907 = vmatpush2.bf16.msra.mxu0 %v2798
        %2908 = vmatprep.subr.bf16.mxu0 %v2795
        %2909 = vmatpush2.bf16.msra.mxu0 %v2794
        %2910 = vmatprep.subr.bf16.mxu0 %v2791
        %2911 = vmatpush2.bf16.msra.mxu0 %v2790
        %2912 = vmatprep.subr.bf16.mxu0 %v2787
        %2913 = vmatpush2.bf16.msra.mxu0 %v2786
        %2914 = vmatprep.mubr.bf16.mxu0 %v2475
        %2915 = vmatmul.mubr.bf16.gmra.mxu0 %v2474
        %v2916 = vpop.f32.mrf.mxu0
        %v2917 = vadd.f32 %v2545, %v2916
        %v2918 = vpop.f32.mrf.mxu0
        %v2919 = vadd.f32 %v2549, %v2918
        %v2920 = vpop.f32.mrf.mxu0
        %v2921 = vpop.f32.mrf.mxu0
        %2922 = vdwg.mxu0
        %2923 = vmatprep.subr.bf16.mxu0 %v2785
        %2924 = vmatpush1.bf16.msra.mxu0 %v2784
        %2925 = vmatprep.subr.bf16.mxu0 %v2781
        %2926 = vmatpush1.bf16.msra.mxu0 %v2780
        %2927 = vmatprep.subr.bf16.mxu0 %v2777
        %2928 = vmatpush1.bf16.msra.mxu0 %v2776
        %2929 = vmatprep.subr.bf16.mxu0 %v2773
        %2930 = vmatpush1.bf16.msra.mxu0 %v2772
        %2931 = vmatprep.subr.bf16.mxu0 %v2769
        %2932 = vmatpush1.bf16.msra.mxu0 %v2768
        %2933 = vmatprep.subr.bf16.mxu0 %v2765
        %2934 = vmatpush1.bf16.msra.mxu0 %v2764
        %2935 = vmatprep.subr.bf16.mxu0 %v2761
        %2936 = vmatpush1.bf16.msra.mxu0 %v2760
        %2937 = vmatprep.subr.bf16.mxu0 %v2757
        %2938 = vmatpush1.bf16.msra.mxu0 %v2756
        %2939 = vmatprep.subr.bf16.mxu0 %v2817
        %2940 = vmatpush2.bf16.msra.mxu0 %v2816
        %2941 = vmatprep.subr.bf16.mxu0 %v2813
        %2942 = vmatpush2.bf16.msra.mxu0 %v2812
        %2943 = vmatprep.subr.bf16.mxu0 %v2809
        %2944 = vmatpush2.bf16.msra.mxu0 %v2808
        %2945 = vmatprep.subr.bf16.mxu0 %v2805
        %2946 = vmatpush2.bf16.msra.mxu0 %v2804
        %2947 = vmatprep.subr.bf16.mxu0 %v2801
        %2948 = vmatpush2.bf16.msra.mxu0 %v2800
        %2949 = vmatprep.subr.bf16.mxu0 %v2797
        %2950 = vmatpush2.bf16.msra.mxu0 %v2796
        %2951 = vmatprep.subr.bf16.mxu0 %v2793
        %2952 = vmatpush2.bf16.msra.mxu0 %v2792
        %2953 = vmatprep.subr.bf16.mxu0 %v2789
        %2954 = vmatpush2.bf16.msra.mxu0 %v2788
        %2955 = vmatprep.mubr.bf16.mxu0 %v2475
        %2956 = vmatmul.mubr.bf16.gmra.mxu0 %v2474
        %v2957 = vpop.f32.mrf.mxu0
        %v2958 = vadd.f32 %v2553, %v2957
        %v2959 = vpop.f32.mrf.mxu0
        %v2960 = vadd.f32 %v2557, %v2959
        %v2961 = vpop.f32.mrf.mxu0
        %v2962 = vpop.f32.mrf.mxu0
        %2963 = vdwg.mxu0
        %v2964 = vxor.u32 %v2917, 2147483648
        %v2965 = vxor.u32 %v2919, 2147483648
        %v2966 = vxor.u32 %v2958, 2147483648
        %v2967 = vmul.f32 %v2964, 1.442695
        %v2968 = vpow.pop %v2967
        %v2969 = vmul.f32 %v2965, 1.442695
        %v2970 = vpow.pop %v2969
        %v2971 = vmul.f32 %v2966, 1.442695
        %v2972 = vpow.pop %v2971
        %v2973 = vadd.f32 %v2968, 1.0
        %v2974 = vadd.f32 %v2970, 1.0
        %v2975 = vadd.f32 %v2972, 1.0
        %v2976 = vrcp.pop %v2973
        %v2977 = vmul.f32 1.0, %v2976
        %v2978 = vrcp.pop %v2974
        %v2979 = vmul.f32 1.0, %v2978
        %v2980 = vrcp.pop %v2975
        %v2981 = vmul.f32 1.0, %v2980
        %v2982 = vtanh.pop %v2960
        %v2983 = vmul.f32 %v2979, %v2162
        %v2984 = vmul.f32 %v2977, %v2982
        %v2985 = vadd.f32 %v2983, %v2984
        %v2986 = vtanh.pop %v2985
        %v2987 = vmul.f32 %v2981, %v2986
        %s2988 = scalar_lea.vmem %s494, 16 [#allocation14]
        %2989 = vst [vmem:[%s2988] sm:$0xff] %v2987
        %s2990 = scalar_lea.vmem %s438, 96 [#allocation2]
        %v2991 = vld [vmem:[%s2990] sm:$0xff]
        %v2992 = vld [vmem:[%s2990 + $0x8] sm:$0xff]
        %v2993 = vld [vmem:[%s2990 + $0x10] sm:$0xff]
        %v2994 = vld [vmem:[%s2990 + $0x18] sm:$0xff]
        %v2995 = vld [vmem:[#allocation11] sm:$0xff]
        %v2996 = vld [vmem:[#allocation11 + $0x8] sm:$0xff]
        %v2997 = vld [vmem:[#allocation11 + $0x10] sm:$0xff]
        %v2998 = vld [vmem:[#allocation11 + $0x18] sm:$0xff]
        %v2999 = vld [vmem:[#allocation11 + $0x20] sm:$0xff]
        %v3000 = vld [vmem:[#allocation11 + $0x28] sm:$0xff]
        %v3001 = vld [vmem:[#allocation11 + $0x30] sm:$0xff]
        %v3002 = vld [vmem:[#allocation11 + $0x38] sm:$0xff]
        %v3003 = vld [vmem:[#allocation11 + $0x40] sm:$0xff]
        %v3004 = vld [vmem:[#allocation11 + $0x48] sm:$0xff]
        %v3005 = vld [vmem:[#allocation11 + $0x50] sm:$0xff]
        %v3006 = vld [vmem:[#allocation11 + $0x58] sm:$0xff]
        %v3007 = vld [vmem:[#allocation11 + $0x60] sm:$0xff]
        %v3008 = vld [vmem:[#allocation11 + $0x68] sm:$0xff]
        %v3009 = vld [vmem:[#allocation11 + $0x70] sm:$0xff]
        %v3010 = vld [vmem:[#allocation11 + $0x78] sm:$0xff]
        %v3011 = vld [vmem:[#allocation11 + $0x80] sm:$0xff]
        %v3012 = vld [vmem:[#allocation11 + $0x88] sm:$0xff]
        %v3013 = vld [vmem:[#allocation11 + $0x90] sm:$0xff]
        %v3014 = vld [vmem:[#allocation11 + $0x98] sm:$0xff]
        %v3015 = vld [vmem:[#allocation11 + $0xa0] sm:$0xff]
        %v3016 = vld [vmem:[#allocation11 + $0xa8] sm:$0xff]
        %v3017 = vld [vmem:[#allocation11 + $0xb0] sm:$0xff]
        %v3018 = vld [vmem:[#allocation11 + $0xb8] sm:$0xff]
        %v3019 = vld [vmem:[#allocation11 + $0xc0] sm:$0xff]
        %v3020 = vld [vmem:[#allocation11 + $0xc8] sm:$0xff]
        %v3021 = vld [vmem:[#allocation11 + $0xd0] sm:$0xff]
        %v3022 = vld [vmem:[#allocation11 + $0xd8] sm:$0xff]
        %v3023 = vld [vmem:[#allocation11 + $0xe0] sm:$0xff]
        %v3024 = vld [vmem:[#allocation11 + $0xe8] sm:$0xff]
        %v3025 = vld [vmem:[#allocation11 + $0xf0] sm:$0xff]
        %v3026 = vld [vmem:[#allocation11 + $0xf8] sm:$0xff]
        %v3059 = vunpack.c.l.b16 %v2995
        %v3060 = vunpack.c.h.b16 %v2995
        %v3061 = vunpack.c.l.b16 %v2996
        %v3062 = vunpack.c.h.b16 %v2996
        %v3063 = vunpack.c.l.b16 %v2997
        %v3064 = vunpack.c.h.b16 %v2997
        %v3065 = vunpack.c.l.b16 %v2998
        %v3066 = vunpack.c.h.b16 %v2998
        %v3067 = vunpack.c.l.b16 %v2999
        %v3068 = vunpack.c.h.b16 %v2999
        %v3069 = vunpack.c.l.b16 %v3000
        %v3070 = vunpack.c.h.b16 %v3000
        %v3071 = vunpack.c.l.b16 %v3001
        %v3072 = vunpack.c.h.b16 %v3001
        %v3073 = vunpack.c.l.b16 %v3002
        %v3074 = vunpack.c.h.b16 %v3002
        %v3075 = vunpack.c.l.b16 %v3003
        %v3076 = vunpack.c.h.b16 %v3003
        %v3077 = vunpack.c.l.b16 %v3004
        %v3078 = vunpack.c.h.b16 %v3004
        %v3079 = vunpack.c.l.b16 %v3005
        %v3080 = vunpack.c.h.b16 %v3005
        %v3081 = vunpack.c.l.b16 %v3006
        %v3082 = vunpack.c.h.b16 %v3006
        %v3083 = vunpack.c.l.b16 %v3007
        %v3084 = vunpack.c.h.b16 %v3007
        %v3085 = vunpack.c.l.b16 %v3008
        %v3086 = vunpack.c.h.b16 %v3008
        %v3087 = vunpack.c.l.b16 %v3009
        %v3088 = vunpack.c.h.b16 %v3009
        %v3089 = vunpack.c.l.b16 %v3010
        %v3090 = vunpack.c.h.b16 %v3010
        %v3091 = vunpack.c.l.b16 %v3011
        %v3092 = vunpack.c.h.b16 %v3011
        %v3093 = vunpack.c.l.b16 %v3012
        %v3094 = vunpack.c.h.b16 %v3012
        %v3095 = vunpack.c.l.b16 %v3013
        %v3096 = vunpack.c.h.b16 %v3013
        %v3097 = vunpack.c.l.b16 %v3014
        %v3098 = vunpack.c.h.b16 %v3014
        %v3099 = vunpack.c.l.b16 %v3015
        %v3100 = vunpack.c.h.b16 %v3015
        %v3101 = vunpack.c.l.b16 %v3016
        %v3102 = vunpack.c.h.b16 %v3016
        %v3103 = vunpack.c.l.b16 %v3017
        %v3104 = vunpack.c.h.b16 %v3017
        %v3105 = vunpack.c.l.b16 %v3018
        %v3106 = vunpack.c.h.b16 %v3018
        %v3107 = vunpack.c.l.b16 %v3019
        %v3108 = vunpack.c.h.b16 %v3019
        %v3109 = vunpack.c.l.b16 %v3020
        %v3110 = vunpack.c.h.b16 %v3020
        %v3111 = vunpack.c.l.b16 %v3021
        %v3112 = vunpack.c.h.b16 %v3021
        %v3113 = vunpack.c.l.b16 %v3022
        %v3114 = vunpack.c.h.b16 %v3022
        %v3115 = vunpack.c.l.b16 %v3023
        %v3116 = vunpack.c.h.b16 %v3023
        %v3117 = vunpack.c.l.b16 %v3024
        %v3118 = vunpack.c.h.b16 %v3024
        %v3119 = vunpack.c.l.b16 %v3025
        %v3120 = vunpack.c.h.b16 %v3025
        %v3121 = vunpack.c.l.b16 %v3026
        %v3122 = vunpack.c.h.b16 %v3026
        %v3123 = vpack.c.b16 %v3063, %v3059
        %v3124 = vpack.c.b16 %v3064, %v3060
        %v3125 = vpack.c.b16 %v3065, %v3061
        %v3126 = vpack.c.b16 %v3066, %v3062
        %v3127 = vpack.c.b16 %v3071, %v3067
        %v3128 = vpack.c.b16 %v3072, %v3068
        %v3129 = vpack.c.b16 %v3073, %v3069
        %v3130 = vpack.c.b16 %v3074, %v3070
        %v3131 = vpack.c.b16 %v3079, %v3075
        %v3132 = vpack.c.b16 %v3080, %v3076
        %v3133 = vpack.c.b16 %v3081, %v3077
        %v3134 = vpack.c.b16 %v3082, %v3078
        %v3135 = vpack.c.b16 %v3087, %v3083
        %v3136 = vpack.c.b16 %v3088, %v3084
        %v3137 = vpack.c.b16 %v3089, %v3085
        %v3138 = vpack.c.b16 %v3090, %v3086
        %v3139 = vpack.c.b16 %v3095, %v3091
        %v3140 = vpack.c.b16 %v3096, %v3092
        %v3141 = vpack.c.b16 %v3097, %v3093
        %v3142 = vpack.c.b16 %v3098, %v3094
        %v3143 = vpack.c.b16 %v3103, %v3099
        %v3144 = vpack.c.b16 %v3104, %v3100
        %v3145 = vpack.c.b16 %v3105, %v3101
        %v3146 = vpack.c.b16 %v3106, %v3102
        %v3147 = vpack.c.b16 %v3111, %v3107
        %v3148 = vpack.c.b16 %v3112, %v3108
        %v3149 = vpack.c.b16 %v3113, %v3109
        %v3150 = vpack.c.b16 %v3114, %v3110
        %v3151 = vpack.c.b16 %v3119, %v3115
        %v3152 = vpack.c.b16 %v3120, %v3116
        %v3153 = vpack.c.b16 %v3121, %v3117
        %v3154 = vpack.c.b16 %v3122, %v3118
        %3187 = vmatprep.subr.bf16.mxu0 %v3152
        %3188 = vmatpush1.bf16.msra.mxu0 %v3151
        %3189 = vmatprep.subr.bf16.mxu0 %v3148
        %3190 = vmatpush1.bf16.msra.mxu0 %v3147
        %3191 = vmatprep.subr.bf16.mxu0 %v3144
        %3192 = vmatpush1.bf16.msra.mxu0 %v3143
        %3193 = vmatprep.subr.bf16.mxu0 %v3140
        %3194 = vmatpush1.bf16.msra.mxu0 %v3139
        %3195 = vmatprep.subr.bf16.mxu0 %v3136
        %3196 = vmatpush1.bf16.msra.mxu0 %v3135
        %3197 = vmatprep.subr.bf16.mxu0 %v3132
        %3198 = vmatpush1.bf16.msra.mxu0 %v3131
        %3199 = vmatprep.subr.bf16.mxu0 %v3128
        %3200 = vmatpush1.bf16.msra.mxu0 %v3127
        %3201 = vmatprep.subr.bf16.mxu0 %v3124
        %3202 = vmatpush1.bf16.msra.mxu0 %v3123
        %3203 = vmatprep.subr.bf16.mxu0 0
        %3204 = vmatpush2.bf16.msra.mxu0 0
        %3205 = vmatprep.subr.bf16.mxu0 0
        %3206 = vmatpush2.bf16.msra.mxu0 0
        %3207 = vmatprep.subr.bf16.mxu0 0
        %3208 = vmatpush2.bf16.msra.mxu0 0
        %3209 = vmatprep.subr.bf16.mxu0 0
        %3210 = vmatpush2.bf16.msra.mxu0 0
        %3211 = vmatprep.subr.bf16.mxu0 0
        %3212 = vmatpush2.bf16.msra.mxu0 0
        %3213 = vmatprep.subr.bf16.mxu0 0
        %3214 = vmatpush2.bf16.msra.mxu0 0
        %3215 = vmatprep.subr.bf16.mxu0 0
        %3216 = vmatpush2.bf16.msra.mxu0 0
        %3217 = vmatprep.subr.bf16.mxu0 0
        %3218 = vmatpush2.bf16.msra.mxu0 0
        %3219 = vmatprep.mubr.bf16.mxu0 0
        %3220 = vmatmul.mubr.bf16.gmra.mxu0 %v2474
        %v3221 = vpop.f32.mrf.mxu0
        %v3222 = vadd.f32 0.0, %v3221
        %v3223 = vpop.f32.mrf.mxu0
        %v3224 = vadd.f32 0.0, %v3223
        %v3225 = vpop.f32.mrf.mxu0
        %v3226 = vpop.f32.mrf.mxu0
        %3227 = vdwg.mxu0
        %3228 = vmatprep.subr.bf16.mxu0 %v3154
        %3229 = vmatpush1.bf16.msra.mxu0 %v3153
        %3230 = vmatprep.subr.bf16.mxu0 %v3150
        %3231 = vmatpush1.bf16.msra.mxu0 %v3149
        %3232 = vmatprep.subr.bf16.mxu0 %v3146
        %3233 = vmatpush1.bf16.msra.mxu0 %v3145
        %3234 = vmatprep.subr.bf16.mxu0 %v3142
        %3235 = vmatpush1.bf16.msra.mxu0 %v3141
        %3236 = vmatprep.subr.bf16.mxu0 %v3138
        %3237 = vmatpush1.bf16.msra.mxu0 %v3137
        %3238 = vmatprep.subr.bf16.mxu0 %v3134
        %3239 = vmatpush1.bf16.msra.mxu0 %v3133
        %3240 = vmatprep.subr.bf16.mxu0 %v3130
        %3241 = vmatpush1.bf16.msra.mxu0 %v3129
        %3242 = vmatprep.subr.bf16.mxu0 %v3126
        %3243 = vmatpush1.bf16.msra.mxu0 %v3125
        %3244 = vmatprep.subr.bf16.mxu0 0
        %3245 = vmatpush2.bf16.msra.mxu0 0
        %3246 = vmatprep.subr.bf16.mxu0 0
        %3247 = vmatpush2.bf16.msra.mxu0 0
        %3248 = vmatprep.subr.bf16.mxu0 0
        %3249 = vmatpush2.bf16.msra.mxu0 0
        %3250 = vmatprep.subr.bf16.mxu0 0
        %3251 = vmatpush2.bf16.msra.mxu0 0
        %3252 = vmatprep.subr.bf16.mxu0 0
        %3253 = vmatpush2.bf16.msra.mxu0 0
        %3254 = vmatprep.subr.bf16.mxu0 0
        %3255 = vmatpush2.bf16.msra.mxu0 0
        %3256 = vmatprep.subr.bf16.mxu0 0
        %3257 = vmatpush2.bf16.msra.mxu0 0
        %3258 = vmatprep.subr.bf16.mxu0 0
        %3259 = vmatpush2.bf16.msra.mxu0 0
        %3260 = vmatprep.mubr.bf16.mxu0 0
        %3261 = vmatmul.mubr.bf16.gmra.mxu0 %v2474
        %v3262 = vpop.f32.mrf.mxu0
        %v3263 = vadd.f32 0.0, %v3262
        %v3264 = vpop.f32.mrf.mxu0
        %v3265 = vadd.f32 0.0, %v3264
        %v3266 = vpop.f32.mrf.mxu0
        %v3267 = vpop.f32.mrf.mxu0
        %3268 = vdwg.mxu0
        %v3269 = vadd.f32 %v2991, %v3222
        %v3270 = vadd.f32 %v2992, %v3224
        %v3271 = vadd.f32 %v2993, %v3263
        %v3272 = vadd.f32 %v2994, %v3265
        %v3273 = vxor.u32 %v3269, 2147483648
        %v3274 = vxor.u32 %v3270, 2147483648
        %v3275 = vxor.u32 %v3271, 2147483648
        %v3276 = vmul.f32 %v3273, 1.442695
        %v3277 = vpow.pop %v3276
        %v3278 = vmul.f32 %v3274, 1.442695
        %v3279 = vpow.pop %v3278
        %v3280 = vmul.f32 %v3275, 1.442695
        %v3281 = vpow.pop %v3280
        %v3282 = vadd.f32 %v3277, 1.0
        %v3283 = vadd.f32 %v3279, 1.0
        %v3284 = vadd.f32 %v3281, 1.0
        %v3285 = vrcp.pop %v3282
        %v3286 = vmul.f32 1.0, %v3285
        %v3287 = vrcp.pop %v3283
        %v3288 = vmul.f32 1.0, %v3287
        %v3289 = vrcp.pop %v3284
        %v3290 = vmul.f32 1.0, %v3289
        %v3291 = vtanh.pop %v3272
        %v3292 = vmul.f32 %v3288, %v2471
        %v3293 = vmul.f32 %v3286, %v3291
        %v3294 = vadd.f32 %v3292, %v3293
        %v3295 = vtanh.pop %v3294
        %v3296 = vmul.f32 %v3290, %v3295
        %v3297 = vpack.c.bf16 %v3296, %v3296
        %v3298 = vpack.c.bf16 %v2987, %v2987
        %v3299 = vld [vmem:[#allocation13] sm:$0xff]
        %v3300 = vld [vmem:[#allocation13 + $0x8] sm:$0xff]
        %v3301 = vld [vmem:[#allocation13 + $0x10] sm:$0xff]
        %v3302 = vld [vmem:[#allocation13 + $0x18] sm:$0xff]
        %v3303 = vld [vmem:[#allocation13 + $0x20] sm:$0xff]
        %v3304 = vld [vmem:[#allocation13 + $0x28] sm:$0xff]
        %v3305 = vld [vmem:[#allocation13 + $0x30] sm:$0xff]
        %v3306 = vld [vmem:[#allocation13 + $0x38] sm:$0xff]
        %v3307 = vld [vmem:[#allocation13 + $0x40] sm:$0xff]
        %v3308 = vld [vmem:[#allocation13 + $0x48] sm:$0xff]
        %v3309 = vld [vmem:[#allocation13 + $0x50] sm:$0xff]
        %v3310 = vld [vmem:[#allocation13 + $0x58] sm:$0xff]
        %v3311 = vld [vmem:[#allocation13 + $0x60] sm:$0xff]
        %v3312 = vld [vmem:[#allocation13 + $0x68] sm:$0xff]
        %v3313 = vld [vmem:[#allocation13 + $0x70] sm:$0xff]
        %v3314 = vld [vmem:[#allocation13 + $0x78] sm:$0xff]
        %v3315 = vld [vmem:[#allocation13 + $0x80] sm:$0xff]
        %v3316 = vld [vmem:[#allocation13 + $0x88] sm:$0xff]
        %v3317 = vld [vmem:[#allocation13 + $0x90] sm:$0xff]
        %v3318 = vld [vmem:[#allocation13 + $0x98] sm:$0xff]
        %v3319 = vld [vmem:[#allocation13 + $0xa0] sm:$0xff]
        %v3320 = vld [vmem:[#allocation13 + $0xa8] sm:$0xff]
        %v3321 = vld [vmem:[#allocation13 + $0xb0] sm:$0xff]
        %v3322 = vld [vmem:[#allocation13 + $0xb8] sm:$0xff]
        %v3323 = vld [vmem:[#allocation13 + $0xc0] sm:$0xff]
        %v3324 = vld [vmem:[#allocation13 + $0xc8] sm:$0xff]
        %v3325 = vld [vmem:[#allocation13 + $0xd0] sm:$0xff]
        %v3326 = vld [vmem:[#allocation13 + $0xd8] sm:$0xff]
        %v3327 = vld [vmem:[#allocation13 + $0xe0] sm:$0xff]
        %v3328 = vld [vmem:[#allocation13 + $0xe8] sm:$0xff]
        %v3329 = vld [vmem:[#allocation13 + $0xf0] sm:$0xff]
        %v3330 = vld [vmem:[#allocation13 + $0xf8] sm:$0xff]
        %v3331 = vld [vmem:[#allocation13 + $0x100] sm:$0xff]
        %v3332 = vld [vmem:[#allocation13 + $0x108] sm:$0xff]
        %v3333 = vld [vmem:[#allocation13 + $0x110] sm:$0xff]
        %v3334 = vld [vmem:[#allocation13 + $0x118] sm:$0xff]
        %v3335 = vld [vmem:[#allocation13 + $0x120] sm:$0xff]
        %v3336 = vld [vmem:[#allocation13 + $0x128] sm:$0xff]
        %v3337 = vld [vmem:[#allocation13 + $0x130] sm:$0xff]
        %v3338 = vld [vmem:[#allocation13 + $0x138] sm:$0xff]
        %v3339 = vld [vmem:[#allocation13 + $0x140] sm:$0xff]
        %v3340 = vld [vmem:[#allocation13 + $0x148] sm:$0xff]
        %v3341 = vld [vmem:[#allocation13 + $0x150] sm:$0xff]
        %v3342 = vld [vmem:[#allocation13 + $0x158] sm:$0xff]
        %v3343 = vld [vmem:[#allocation13 + $0x160] sm:$0xff]
        %v3344 = vld [vmem:[#allocation13 + $0x168] sm:$0xff]
        %v3345 = vld [vmem:[#allocation13 + $0x170] sm:$0xff]
        %v3346 = vld [vmem:[#allocation13 + $0x178] sm:$0xff]
        %v3347 = vld [vmem:[#allocation13 + $0x180] sm:$0xff]
        %v3348 = vld [vmem:[#allocation13 + $0x188] sm:$0xff]
        %v3349 = vld [vmem:[#allocation13 + $0x190] sm:$0xff]
        %v3350 = vld [vmem:[#allocation13 + $0x198] sm:$0xff]
        %v3351 = vld [vmem:[#allocation13 + $0x1a0] sm:$0xff]
        %v3352 = vld [vmem:[#allocation13 + $0x1a8] sm:$0xff]
        %v3353 = vld [vmem:[#allocation13 + $0x1b0] sm:$0xff]
        %v3354 = vld [vmem:[#allocation13 + $0x1b8] sm:$0xff]
        %v3355 = vld [vmem:[#allocation13 + $0x1c0] sm:$0xff]
        %v3356 = vld [vmem:[#allocation13 + $0x1c8] sm:$0xff]
        %v3357 = vld [vmem:[#allocation13 + $0x1d0] sm:$0xff]
        %v3358 = vld [vmem:[#allocation13 + $0x1d8] sm:$0xff]
        %v3359 = vld [vmem:[#allocation13 + $0x1e0] sm:$0xff]
        %v3360 = vld [vmem:[#allocation13 + $0x1e8] sm:$0xff]
        %v3361 = vld [vmem:[#allocation13 + $0x1f0] sm:$0xff]
        %v3362 = vld [vmem:[#allocation13 + $0x1f8] sm:$0xff]
        %v3363 = vld [vmem:[%s7] sm:$0xf]
        %v3365 = vlaneseq
        %v3366 = vshrl.u32 %v3365, 7
        %v3367 = vsub.s32 0, %v3366
        %v3368 = vrot.slane %v3363, %v3367
        %v3369 = vlaneseq
        %v3370 = vshrl.u32 %v3369, 7
        %v3371 = vsub.s32 1, %v3370
        %v3372 = vrot.slane %v3363, %v3371
        %v3373 = vlaneseq
        %v3374 = vshrl.u32 %v3373, 7
        %v3375 = vsub.s32 2, %v3374
        %v3376 = vrot.slane %v3363, %v3375
        %v3377 = vlaneseq
        %v3378 = vshrl.u32 %v3377, 7
        %v3379 = vsub.s32 3, %v3378
        %v3380 = vrot.slane %v3363, %v3379
        %v3449 = vunpack.c.l.b16 %v3299
        %v3450 = vunpack.c.h.b16 %v3299
        %v3451 = vunpack.c.l.b16 %v3300
        %v3452 = vunpack.c.h.b16 %v3300
        %v3453 = vunpack.c.l.b16 %v3301
        %v3454 = vunpack.c.h.b16 %v3301
        %v3455 = vunpack.c.l.b16 %v3302
        %v3456 = vunpack.c.h.b16 %v3302
        %v3457 = vunpack.c.l.b16 %v3303
        %v3458 = vunpack.c.h.b16 %v3303
        %v3459 = vunpack.c.l.b16 %v3304
        %v3460 = vunpack.c.h.b16 %v3304
        %v3461 = vunpack.c.l.b16 %v3305
        %v3462 = vunpack.c.h.b16 %v3305
        %v3463 = vunpack.c.l.b16 %v3306
        %v3464 = vunpack.c.h.b16 %v3306
        %v3465 = vunpack.c.l.b16 %v3307
        %v3466 = vunpack.c.h.b16 %v3307
        %v3467 = vunpack.c.l.b16 %v3308
        %v3468 = vunpack.c.h.b16 %v3308
        %v3469 = vunpack.c.l.b16 %v3309
        %v3470 = vunpack.c.h.b16 %v3309
        %v3471 = vunpack.c.l.b16 %v3310
        %v3472 = vunpack.c.h.b16 %v3310
        %v3473 = vunpack.c.l.b16 %v3311
        %v3474 = vunpack.c.h.b16 %v3311
        %v3475 = vunpack.c.l.b16 %v3312
        %v3476 = vunpack.c.h.b16 %v3312
        %v3477 = vunpack.c.l.b16 %v3313
        %v3478 = vunpack.c.h.b16 %v3313
        %v3479 = vunpack.c.l.b16 %v3314
        %v3480 = vunpack.c.h.b16 %v3314
        %v3481 = vunpack.c.l.b16 %v3315
        %v3482 = vunpack.c.h.b16 %v3315
        %v3483 = vunpack.c.l.b16 %v3316
        %v3484 = vunpack.c.h.b16 %v3316
        %v3485 = vunpack.c.l.b16 %v3317
        %v3486 = vunpack.c.h.b16 %v3317
        %v3487 = vunpack.c.l.b16 %v3318
        %v3488 = vunpack.c.h.b16 %v3318
        %v3489 = vunpack.c.l.b16 %v3319
        %v3490 = vunpack.c.h.b16 %v3319
        %v3491 = vunpack.c.l.b16 %v3320
        %v3492 = vunpack.c.h.b16 %v3320
        %v3493 = vunpack.c.l.b16 %v3321
        %v3494 = vunpack.c.h.b16 %v3321
        %v3495 = vunpack.c.l.b16 %v3322
        %v3496 = vunpack.c.h.b16 %v3322
        %v3497 = vunpack.c.l.b16 %v3323
        %v3498 = vunpack.c.h.b16 %v3323
        %v3499 = vunpack.c.l.b16 %v3324
        %v3500 = vunpack.c.h.b16 %v3324
        %v3501 = vunpack.c.l.b16 %v3325
        %v3502 = vunpack.c.h.b16 %v3325
        %v3503 = vunpack.c.l.b16 %v3326
        %v3504 = vunpack.c.h.b16 %v3326
        %v3505 = vunpack.c.l.b16 %v3327
        %v3506 = vunpack.c.h.b16 %v3327
        %v3507 = vunpack.c.l.b16 %v3328
        %v3508 = vunpack.c.h.b16 %v3328
        %v3509 = vunpack.c.l.b16 %v3329
        %v3510 = vunpack.c.h.b16 %v3329
        %v3511 = vunpack.c.l.b16 %v3330
        %v3512 = vunpack.c.h.b16 %v3330
        %v3513 = vunpack.c.l.b16 %v3331
        %v3514 = vunpack.c.h.b16 %v3331
        %v3515 = vunpack.c.l.b16 %v3332
        %v3516 = vunpack.c.h.b16 %v3332
        %v3517 = vunpack.c.l.b16 %v3333
        %v3518 = vunpack.c.h.b16 %v3333
        %v3519 = vunpack.c.l.b16 %v3334
        %v3520 = vunpack.c.h.b16 %v3334
        %v3521 = vunpack.c.l.b16 %v3335
        %v3522 = vunpack.c.h.b16 %v3335
        %v3523 = vunpack.c.l.b16 %v3336
        %v3524 = vunpack.c.h.b16 %v3336
        %v3525 = vunpack.c.l.b16 %v3337
        %v3526 = vunpack.c.h.b16 %v3337
        %v3527 = vunpack.c.l.b16 %v3338
        %v3528 = vunpack.c.h.b16 %v3338
        %v3529 = vunpack.c.l.b16 %v3339
        %v3530 = vunpack.c.h.b16 %v3339
        %v3531 = vunpack.c.l.b16 %v3340
        %v3532 = vunpack.c.h.b16 %v3340
        %v3533 = vunpack.c.l.b16 %v3341
        %v3534 = vunpack.c.h.b16 %v3341
        %v3535 = vunpack.c.l.b16 %v3342
        %v3536 = vunpack.c.h.b16 %v3342
        %v3537 = vunpack.c.l.b16 %v3343
        %v3538 = vunpack.c.h.b16 %v3343
        %v3539 = vunpack.c.l.b16 %v3344
        %v3540 = vunpack.c.h.b16 %v3344
        %v3541 = vunpack.c.l.b16 %v3345
        %v3542 = vunpack.c.h.b16 %v3345
        %v3543 = vunpack.c.l.b16 %v3346
        %v3544 = vunpack.c.h.b16 %v3346
        %v3545 = vunpack.c.l.b16 %v3347
        %v3546 = vunpack.c.h.b16 %v3347
        %v3547 = vunpack.c.l.b16 %v3348
        %v3548 = vunpack.c.h.b16 %v3348
        %v3549 = vunpack.c.l.b16 %v3349
        %v3550 = vunpack.c.h.b16 %v3349
        %v3551 = vunpack.c.l.b16 %v3350
        %v3552 = vunpack.c.h.b16 %v3350
        %v3553 = vunpack.c.l.b16 %v3351
        %v3554 = vunpack.c.h.b16 %v3351
        %v3555 = vunpack.c.l.b16 %v3352
        %v3556 = vunpack.c.h.b16 %v3352
        %v3557 = vunpack.c.l.b16 %v3353
        %v3558 = vunpack.c.h.b16 %v3353
        %v3559 = vunpack.c.l.b16 %v3354
        %v3560 = vunpack.c.h.b16 %v3354
        %v3561 = vunpack.c.l.b16 %v3355
        %v3562 = vunpack.c.h.b16 %v3355
        %v3563 = vunpack.c.l.b16 %v3356
        %v3564 = vunpack.c.h.b16 %v3356
        %v3565 = vunpack.c.l.b16 %v3357
        %v3566 = vunpack.c.h.b16 %v3357
        %v3567 = vunpack.c.l.b16 %v3358
        %v3568 = vunpack.c.h.b16 %v3358
        %v3569 = vunpack.c.l.b16 %v3359
        %v3570 = vunpack.c.h.b16 %v3359
        %v3571 = vunpack.c.l.b16 %v3360
        %v3572 = vunpack.c.h.b16 %v3360
        %v3573 = vunpack.c.l.b16 %v3361
        %v3574 = vunpack.c.h.b16 %v3361
        %v3575 = vunpack.c.l.b16 %v3362
        %v3576 = vunpack.c.h.b16 %v3362
        %v3577 = vpack.c.b16 %v3453, %v3449
        %v3578 = vpack.c.b16 %v3454, %v3450
        %v3579 = vpack.c.b16 %v3455, %v3451
        %v3580 = vpack.c.b16 %v3456, %v3452
        %v3581 = vpack.c.b16 %v3461, %v3457
        %v3582 = vpack.c.b16 %v3462, %v3458
        %v3583 = vpack.c.b16 %v3463, %v3459
        %v3584 = vpack.c.b16 %v3464, %v3460
        %v3585 = vpack.c.b16 %v3469, %v3465
        %v3586 = vpack.c.b16 %v3470, %v3466
        %v3587 = vpack.c.b16 %v3471, %v3467
        %v3588 = vpack.c.b16 %v3472, %v3468
        %v3589 = vpack.c.b16 %v3477, %v3473
        %v3590 = vpack.c.b16 %v3478, %v3474
        %v3591 = vpack.c.b16 %v3479, %v3475
        %v3592 = vpack.c.b16 %v3480, %v3476
        %v3593 = vpack.c.b16 %v3485, %v3481
        %v3594 = vpack.c.b16 %v3486, %v3482
        %v3595 = vpack.c.b16 %v3487, %v3483
        %v3596 = vpack.c.b16 %v3488, %v3484
        %v3597 = vpack.c.b16 %v3493, %v3489
        %v3598 = vpack.c.b16 %v3494, %v3490
        %v3599 = vpack.c.b16 %v3495, %v3491
        %v3600 = vpack.c.b16 %v3496, %v3492
        %v3601 = vpack.c.b16 %v3501, %v3497
        %v3602 = vpack.c.b16 %v3502, %v3498
        %v3603 = vpack.c.b16 %v3503, %v3499
        %v3604 = vpack.c.b16 %v3504, %v3500
        %v3605 = vpack.c.b16 %v3509, %v3505
        %v3606 = vpack.c.b16 %v3510, %v3506
        %v3607 = vpack.c.b16 %v3511, %v3507
        %v3608 = vpack.c.b16 %v3512, %v3508
        %v3609 = vpack.c.b16 %v3517, %v3513
        %v3610 = vpack.c.b16 %v3518, %v3514
        %v3611 = vpack.c.b16 %v3519, %v3515
        %v3612 = vpack.c.b16 %v3520, %v3516
        %v3613 = vpack.c.b16 %v3525, %v3521
        %v3614 = vpack.c.b16 %v3526, %v3522
        %v3615 = vpack.c.b16 %v3527, %v3523
        %v3616 = vpack.c.b16 %v3528, %v3524
        %v3617 = vpack.c.b16 %v3533, %v3529
        %v3618 = vpack.c.b16 %v3534, %v3530
        %v3619 = vpack.c.b16 %v3535, %v3531
        %v3620 = vpack.c.b16 %v3536, %v3532
        %v3621 = vpack.c.b16 %v3541, %v3537
        %v3622 = vpack.c.b16 %v3542, %v3538
        %v3623 = vpack.c.b16 %v3543, %v3539
        %v3624 = vpack.c.b16 %v3544, %v3540
        %v3625 = vpack.c.b16 %v3549, %v3545
        %v3626 = vpack.c.b16 %v3550, %v3546
        %v3627 = vpack.c.b16 %v3551, %v3547
        %v3628 = vpack.c.b16 %v3552, %v3548
        %v3629 = vpack.c.b16 %v3557, %v3553
        %v3630 = vpack.c.b16 %v3558, %v3554
        %v3631 = vpack.c.b16 %v3559, %v3555
        %v3632 = vpack.c.b16 %v3560, %v3556
        %v3633 = vpack.c.b16 %v3565, %v3561
        %v3634 = vpack.c.b16 %v3566, %v3562
        %v3635 = vpack.c.b16 %v3567, %v3563
        %v3636 = vpack.c.b16 %v3568, %v3564
        %v3637 = vpack.c.b16 %v3573, %v3569
        %v3638 = vpack.c.b16 %v3574, %v3570
        %v3639 = vpack.c.b16 %v3575, %v3571
        %v3640 = vpack.c.b16 %v3576, %v3572
        %3705 = vmatprep.subr.bf16.mxu0 %v3606
        %3706 = vmatpush1.bf16.msra.mxu0 %v3605
        %3707 = vmatprep.subr.bf16.mxu0 %v3602
        %3708 = vmatpush1.bf16.msra.mxu0 %v3601
        %3709 = vmatprep.subr.bf16.mxu0 %v3598
        %3710 = vmatpush1.bf16.msra.mxu0 %v3597
        %3711 = vmatprep.subr.bf16.mxu0 %v3594
        %3712 = vmatpush1.bf16.msra.mxu0 %v3593
        %3713 = vmatprep.subr.bf16.mxu0 %v3590
        %3714 = vmatpush1.bf16.msra.mxu0 %v3589
        %3715 = vmatprep.subr.bf16.mxu0 %v3586
        %3716 = vmatpush1.bf16.msra.mxu0 %v3585
        %3717 = vmatprep.subr.bf16.mxu0 %v3582
        %3718 = vmatpush1.bf16.msra.mxu0 %v3581
        %3719 = vmatprep.subr.bf16.mxu0 %v3578
        %3720 = vmatpush1.bf16.msra.mxu0 %v3577
        %3721 = vmatprep.subr.bf16.mxu0 %v3638
        %3722 = vmatpush2.bf16.msra.mxu0 %v3637
        %3723 = vmatprep.subr.bf16.mxu0 %v3634
        %3724 = vmatpush2.bf16.msra.mxu0 %v3633
        %3725 = vmatprep.subr.bf16.mxu0 %v3630
        %3726 = vmatpush2.bf16.msra.mxu0 %v3629
        %3727 = vmatprep.subr.bf16.mxu0 %v3626
        %3728 = vmatpush2.bf16.msra.mxu0 %v3625
        %3729 = vmatprep.subr.bf16.mxu0 %v3622
        %3730 = vmatpush2.bf16.msra.mxu0 %v3621
        %3731 = vmatprep.subr.bf16.mxu0 %v3618
        %3732 = vmatpush2.bf16.msra.mxu0 %v3617
        %3733 = vmatprep.subr.bf16.mxu0 %v3614
        %3734 = vmatpush2.bf16.msra.mxu0 %v3613
        %3735 = vmatprep.subr.bf16.mxu0 %v3610
        %3736 = vmatpush2.bf16.msra.mxu0 %v3609
        %3737 = vmatprep.mubr.bf16.mxu0 %v3298
        %3738 = vmatmul.mubr.bf16.gmra.mxu0 %v3297
        %v3739 = vpop.f32.mrf.mxu0
        %v3740 = vadd.f32 %v3368, %v3739
        %v3741 = vpop.f32.mrf.mxu0
        %v3742 = vadd.f32 %v3372, %v3741
        %v3743 = vpop.f32.mrf.mxu0
        %v3744 = vpop.f32.mrf.mxu0
        %3745 = vdwg.mxu0
        %3746 = vmatprep.subr.bf16.mxu0 %v3608
        %3747 = vmatpush1.bf16.msra.mxu0 %v3607
        %3748 = vmatprep.subr.bf16.mxu0 %v3604
        %3749 = vmatpush1.bf16.msra.mxu0 %v3603
        %3750 = vmatprep.subr.bf16.mxu0 %v3600
        %3751 = vmatpush1.bf16.msra.mxu0 %v3599
        %3752 = vmatprep.subr.bf16.mxu0 %v3596
        %3753 = vmatpush1.bf16.msra.mxu0 %v3595
        %3754 = vmatprep.subr.bf16.mxu0 %v3592
        %3755 = vmatpush1.bf16.msra.mxu0 %v3591
        %3756 = vmatprep.subr.bf16.mxu0 %v3588
        %3757 = vmatpush1.bf16.msra.mxu0 %v3587
        %3758 = vmatprep.subr.bf16.mxu0 %v3584
        %3759 = vmatpush1.bf16.msra.mxu0 %v3583
        %3760 = vmatprep.subr.bf16.mxu0 %v3580
        %3761 = vmatpush1.bf16.msra.mxu0 %v3579
        %3762 = vmatprep.subr.bf16.mxu0 %v3640
        %3763 = vmatpush2.bf16.msra.mxu0 %v3639
        %3764 = vmatprep.subr.bf16.mxu0 %v3636
        %3765 = vmatpush2.bf16.msra.mxu0 %v3635
        %3766 = vmatprep.subr.bf16.mxu0 %v3632
        %3767 = vmatpush2.bf16.msra.mxu0 %v3631
        %3768 = vmatprep.subr.bf16.mxu0 %v3628
        %3769 = vmatpush2.bf16.msra.mxu0 %v3627
        %3770 = vmatprep.subr.bf16.mxu0 %v3624
        %3771 = vmatpush2.bf16.msra.mxu0 %v3623
        %3772 = vmatprep.subr.bf16.mxu0 %v3620
        %3773 = vmatpush2.bf16.msra.mxu0 %v3619
        %3774 = vmatprep.subr.bf16.mxu0 %v3616
        %3775 = vmatpush2.bf16.msra.mxu0 %v3615
        %3776 = vmatprep.subr.bf16.mxu0 %v3612
        %3777 = vmatpush2.bf16.msra.mxu0 %v3611
        %3778 = vmatprep.mubr.bf16.mxu0 %v3298
        %3779 = vmatmul.mubr.bf16.gmra.mxu0 %v3297
        %v3780 = vpop.f32.mrf.mxu0
        %v3781 = vadd.f32 %v3376, %v3780
        %v3782 = vpop.f32.mrf.mxu0
        %v3783 = vadd.f32 %v3380, %v3782
        %v3784 = vpop.f32.mrf.mxu0
        %v3785 = vpop.f32.mrf.mxu0
        %3786 = vdwg.mxu0
        %v3787 = vxor.u32 %v3740, 2147483648
        %v3788 = vxor.u32 %v3742, 2147483648
        %v3789 = vxor.u32 %v3781, 2147483648
        %v3790 = vmul.f32 %v3787, 1.442695
        %v3791 = vpow.pop %v3790
        %v3792 = vmul.f32 %v3788, 1.442695
        %v3793 = vpow.pop %v3792
        %v3794 = vmul.f32 %v3789, 1.442695
        %v3795 = vpow.pop %v3794
        %v3796 = vadd.f32 %v3791, 1.0
        %v3797 = vadd.f32 %v3793, 1.0
        %v3798 = vadd.f32 %v3795, 1.0
        %v3799 = vrcp.pop %v3796
        %v3800 = vmul.f32 1.0, %v3799
        %v3801 = vrcp.pop %v3797
        %v3802 = vmul.f32 1.0, %v3801
        %v3803 = vrcp.pop %v3798
        %v3804 = vmul.f32 1.0, %v3803
        %v3805 = vtanh.pop %v3783
        %v3806 = vmul.f32 %v3802, %v2985
        %v3807 = vmul.f32 %v3800, %v3805
        %v3808 = vadd.f32 %v3806, %v3807
        %v3809 = vtanh.pop %v3808
        %v3810 = vmul.f32 %v3804, %v3809
        %s3811 = scalar_lea.vmem %s494, 24 [#allocation14]
        %3812 = vst [vmem:[%s3811] sm:$0xff] %v3810
        %3813 = vst [vmem:[#allocation15] sm:$0xff] %v3296
        %3814 = vst [vmem:[#allocation17] sm:$0xff] %v3294
        %3815 = vst [vmem:[#allocation18] sm:$0xff] %v3810
        %3816 = vst [vmem:[#allocation20] sm:$0xff] %v3808
        %s3817 = sand.u32 %s216, 1
        %s3818 = scalar_lea.sflag [#allocation4], %s3817
        %s3819 = sand.u32 %s216, 1
        %s3820 = smul.addr %s3819, 32
        %s3821 = scalar_lea.vmem [#allocation14], %s3820
        // Predicated region
        $region85: #{tpu_custom_call.1} parent=51 // pred_check
          %p3822 = pneg %p226
        $region86: #{tpu_custom_call.1} parent=51 // pred_check_branch
          %3824 = sbr.rel (%p3822) target = $region88
        $region87: #{tpu_custom_call.1} parent=51 // pred_region
          %s3825 = smul.u32 4, %s35
          %s3827 = ssub.s32 512, 512
          %3828 = vsyncadd %s3818, %s3827
          %s3829 = smul.addr %s3825, 128
          %s3830 = scalar_lea.hbm %s8, %s3829
          %s3831 = sshll.u32 %s3821, 4
          %s3832 = int_to_ptr.vmem [resolvable:$true] %s3831
          %3837 = dma.vmem_to_hbm [thread:$0]  %s3832, 512, %s3830, %s3818, 128, 128, 8
        $region88: #{tpu_custom_call.1} parent=51 // pred_fallthru
          _
        // Predicated region
        $region89: #{tpu_custom_call.1} parent=51 // pred_check
          %p3838 = pneg %p247
        $region90: #{tpu_custom_call.1} parent=51 // pred_check_branch
          %3840 = sbr.rel (%p3838) target = $region92
        $region91: #{tpu_custom_call.1} parent=51 // pred_region
          %s3842 = ssub.s32 128, 128
          %3843 = vsyncadd [#allocation16], %s3842
          %s3845 = sshll.u32 [#allocation15], 4
          %s3846 = int_to_ptr.vmem [resolvable:$true] %s3845
          %3848 = dma.vmem_to_hbm [thread:$0]  %s3846, 128, %s9, [#allocation16]
        $region92: #{tpu_custom_call.1} parent=51 // pred_fallthru
          _
        // Predicated region
        $region93: #{tpu_custom_call.1} parent=51 // pred_check
          %p3849 = pneg %p268
        $region94: #{tpu_custom_call.1} parent=51 // pred_check_branch
          %3851 = sbr.rel (%p3849) target = $region96
        $region95: #{tpu_custom_call.1} parent=51 // pred_region
          %s3853 = ssub.s32 128, 128
          %3854 = vsyncadd [#allocation16], %s3853
          %s3856 = sshll.u32 [#allocation17], 4
          %s3857 = int_to_ptr.vmem [resolvable:$true] %s3856
          %3859 = dma.vmem_to_hbm [thread:$0]  %s3857, 128, %s10, [#allocation16]
        $region96: #{tpu_custom_call.1} parent=51 // pred_fallthru
          _
        // Predicated region
        $region97: #{tpu_custom_call.1} parent=51 // pred_check
          %p3860 = pneg %p289
        $region98: #{tpu_custom_call.1} parent=51 // pred_check_branch
          %3862 = sbr.rel (%p3860) target = $region100
        $region99: #{tpu_custom_call.1} parent=51 // pred_region
          %s3864 = ssub.s32 128, 128
          %3865 = vsyncadd [#allocation19], %s3864
          %s3867 = sshll.u32 [#allocation18], 4
          %s3868 = int_to_ptr.vmem [resolvable:$true] %s3867
          %3870 = dma.vmem_to_hbm [thread:$0]  %s3868, 128, %s11, [#allocation19]
        $region100: #{tpu_custom_call.1} parent=51 // pred_fallthru
          _
        // Predicated region
        $region101: #{tpu_custom_call.1} parent=51 // pred_check
          %p3871 = pneg %p310
        $region102: #{tpu_custom_call.1} parent=51 // pred_check_branch
          %3873 = sbr.rel (%p3871) target = $region104
        $region103: #{tpu_custom_call.1} parent=51 // pred_region
          %s3875 = ssub.s32 128, 128
          %3876 = vsyncadd [#allocation19], %s3875
          %s3878 = sshll.u32 [#allocation20], 4
          %s3879 = int_to_ptr.vmem [resolvable:$true] %s3878
          %3881 = dma.vmem_to_hbm [thread:$0]  %s3879, 128, %s12, [#allocation19]
        $region104: #{tpu_custom_call.1} parent=51 // pred_fallthru
          _
        // Predicated region
        $region105: #{tpu_custom_call.1} parent=51 // pred_check
          %p3882 = pneg %p247
        $region106: #{tpu_custom_call.1} parent=51 // pred_check_branch
          %3884 = sbr.rel (%p3882) target = $region108
        $region107: #{tpu_custom_call.1} parent=51 // pred_region
          %3885 = dma.done [#allocation16], 128
        $region108: #{tpu_custom_call.1} parent=51 // pred_fallthru
          _
        // Predicated region
        $region109: #{tpu_custom_call.1} parent=51 // pred_check
          %p3886 = pneg %p268
        $region110: #{tpu_custom_call.1} parent=51 // pred_check_branch
          %3888 = sbr.rel (%p3886) target = $region112
        $region111: #{tpu_custom_call.1} parent=51 // pred_region
          %3889 = dma.done [#allocation16], 128
        $region112: #{tpu_custom_call.1} parent=51 // pred_fallthru
          _
        // Predicated region
        $region113: #{tpu_custom_call.1} parent=51 // pred_check
          %p3890 = pneg %p289
        $region114: #{tpu_custom_call.1} parent=51 // pred_check_branch
          %3892 = sbr.rel (%p3890) target = $region116
        $region115: #{tpu_custom_call.1} parent=51 // pred_region
          %3893 = dma.done [#allocation19], 128
        $region116: #{tpu_custom_call.1} parent=51 // pred_fallthru
          _
        // Predicated region
        $region117: #{tpu_custom_call.1} parent=51 // pred_check
          %p3894 = pneg %p310
        $region118: #{tpu_custom_call.1} parent=51 // pred_check_branch
          %3896 = sbr.rel (%p3894) target = $region120
        $region119: #{tpu_custom_call.1} parent=51 // pred_region
          %3897 = dma.done [#allocation19], 128
        $region120: #{tpu_custom_call.1} parent=51 // pred_fallthru
          _
      $region52: #{tpu_custom_call.1} parent=5 // pred_fallthru
        _
      %p3898 = scmp.le.s32.totalorder 2, %s30
      // Predicated region
      $region121: #{tpu_custom_call.1} parent=5 // pred_check
        %p3899 = pneg %p3898
      $region122: #{tpu_custom_call.1} parent=5 // pred_check_branch
        %3901 = sbr.rel (%p3899) target = $region124
      $region123: #{tpu_custom_call.1} parent=5 // pred_region
        %s3902 = ssub.s32 %s30, 2
        // Predicated region
        $region125: #{tpu_custom_call.1} parent=123 // pred_check
          %p3903 = pneg %p232
        $region126: #{tpu_custom_call.1} parent=123 // pred_check_branch
          %3905 = sbr.rel (%p3903) target = $region128
        $region127: #{tpu_custom_call.1} parent=123 // pred_region
          %s3906 = sand.u32 %s217, 1
          %s3907 = scalar_lea.sflag [#allocation4], %s3906
          %s3908 = sand.u32 %s217, 1
          %s3909 = smul.addr %s3908, 32
          %s3910 = scalar_lea.vmem [#allocation14], %s3909
          %3911 = dma.done %s3907, 512
        $region128: #{tpu_custom_call.1} parent=123 // pred_fallthru
          _
      $region124: #{tpu_custom_call.1} parent=5 // pred_fallthru
        _
    $region6: #{tpu_custom_call.1} parent=1 // loop_footer
      %s34 = sadd.s32 1, %s30
    $region7: #{tpu_custom_call.1} parent=1 // loop_footer_branch
      %29 = sbr.rel target = $region3
    $region8: #{tpu_custom_call.1} parent=1 // loop_exit
      _
    %3912 = vsyncpa [#allocation3], 1
    %s3913 = scalar_lea.sflag [#allocation3], 1
    %3914 = vsyncpa %s3913, 1
    %3915 = vsyncpa [#allocation6], 1
    %3916 = vsyncpa [#allocation9], 1
    %3917 = vsyncpa [#allocation12], 1
    %3918 = vsyncpa [#allocation4], 1
    %s3919 = scalar_lea.sflag [#allocation4], 1
    %3920 = vsyncpa %s3919, 1
    %3921 = vsyncpa [#allocation16], 1
    %3922 = vsyncpa [#allocation19], 1

</llo_original>
